<compile_context>
chip_gen: v6e
topology: v6e:2x2x1
jax: 0.10.0
libtpu: 0.0.40
codegen_flags: <defaults>
</compile_context>

<pallas_src>
import numpy as np
import jax
import jax.numpy as jnp
from jax import lax
from jax.experimental import pallas as pl
from jax.experimental.pallas import tpu as pltpu

NEG_INF = -10000.0  # same finite sentinel the PyTorch module uses


def crf_kernel(start_ref, feats_ref, labels_ref, trans_ref,
               path_ref, maxll_ref, nll_ref, psi_ref):
    S, L, Bb = feats_ref.shape
    sid = start_ref[0]                                    # scalar i32 (SMEM prefetch)

    trans = trans_ref[...]                                # (L, L) f32
    row_max = jnp.max(trans, axis=1, keepdims=True)       # (L, 1)
    exp_trans = jnp.exp(trans - row_max)                  # (L, L) in (0, 1]

    # Hoisted iotas / broadcasts (JAX does not CSE broadcast_in_dim in loops).
    lab_iota = lax.broadcasted_iota(jnp.int32, (L, Bb), 0)    # label id on sublanes
    j_iota = lax.broadcasted_iota(jnp.int32, (L, L, Bb), 1)   # previous-label id
    trans_3d = trans[:, :, None]                              # (L, L, 1)

    init = jnp.where(lab_iota == sid, jnp.float32(0.0), jnp.float32(NEG_INF))  # (L, Bb)
    oh0 = (lab_iota == labels_ref[0]).astype(jnp.float32)                      # (L, Bb)
    gold0 = jnp.zeros((1, Bb), jnp.float32)

    # ---- fused alpha + Viterbi + gold-score forward recursion ------------------
    def step(t, carry):
        log_alpha, log_delta, gold, oh_prev = carry
        feat_t = feats_ref[t]                                        # (L, Bb)
        oh_t = (lab_iota == labels_ref[t]).astype(jnp.float32)       # (L, Bb)

        # alpha: logsumexp_j(trans[i, j] + log_alpha[j, b]) + feat, via exp-space MXU.
        col_max = jnp.max(log_alpha, axis=0, keepdims=True)          # (1, Bb)
        p = jnp.exp(log_alpha - col_max)                             # (L, Bb)  B*L exps
        s = jnp.dot(exp_trans, p, preferred_element_type=jnp.float32)  # (L, Bb)  MXU
        log_alpha = jnp.log(s) + row_max + col_max + feat_t

        # Viterbi: keep max-plus form (exact first-occurrence argmax, = np.argmax).
        sc = trans_3d + log_delta[None, :, :]                        # (L, L, Bb)
        mx = jnp.max(sc, axis=1, keepdims=True)                      # (L, 1, Bb)
        psi_ref[t] = jnp.min(jnp.where(sc == mx, j_iota, L), axis=1)  # (L, Bb) i32
        log_delta = mx[:, 0, :] + feat_t

        # gold-path score, fused (no (S,B,L) one-hot / 4-D temp, exact f32).
        emit = jnp.sum(oh_t * feat_t, axis=0, keepdims=True)             # (1, Bb)
        t_prev = jnp.sum(trans_3d * oh_prev[None, :, :], axis=1)         # (L, Bb)
        gold = gold + emit + jnp.sum(oh_t * t_prev, axis=0, keepdims=True)

        return log_alpha, log_delta, gold, oh_t

    unroll = S <= 32
    log_alpha, log_delta, gold, _ = lax.fori_loop(
        1, S, step, (init, init, gold0, oh0), unroll=unroll)

    # partition function and per-example loss term (scalar mean taken in wrapper).
    m = jnp.max(log_alpha, axis=0, keepdims=True)                        # (1, Bb)
    forward_score = m + jnp.log(
        jnp.sum(jnp.exp(log_alpha - m), axis=0, keepdims=True))          # (1, Bb)
    nll_ref[...] = forward_score - gold

    # Viterbi termination + backtracking: one lane-dense row store per timestep.
    mx = jnp.max(log_delta, axis=0, keepdims=True)                       # (1, Bb)
    maxll_ref[...] = mx
    last = jnp.min(jnp.where(log_delta == mx, lab_iota, L),
                   axis=0, keepdims=True)                                # (1, Bb) i32
    path_ref[S - 1] = last

    def back_body(i, cur):
        t = S - 2 - i
        psi_t1 = psi_ref[t + 1]                                          # (L, Bb)
        nxt = jnp.sum(jnp.where(lab_iota == cur, psi_t1, 0),
                      axis=0, keepdims=True)                             # (1, Bb)
        path_ref[t] = nxt
        return nxt

    lax.fori_loop(0, S - 1, back_body, last, unroll=unroll)


def transformer_crf_forward(feats, label_ids, transitions, start_label_id):
    """Returns (path [B,S] int32, max_logLL_allz_allx [B] f32, loss scalar f32)."""
    B, S, L = feats.shape

    # Cheap XLA-side relayout: time-major, batch on the lane (last) axis.
    feats_t = jnp.transpose(feats.astype(jnp.float32), (1, 2, 0))               # (S, L, B)
    labels_t = jnp.transpose(label_ids.astype(jnp.int32), (1, 0))[:, None, :]   # (S, 1, B)
    trans = transitions.astype(jnp.float32)
    start = jnp.asarray([start_label_id], jnp.int32)

    # Batch tile: full B for small batches, lane-dense 128-wide tiles otherwise.
    block_b = 128 if B % 128 == 0 else B
    grid_b = B // block_b

    grid_spec = pltpu.PrefetchScalarGridSpec(
        num_scalar_prefetch=1,                      # start_label_id lands in SMEM
        grid=(grid_b,),
        in_specs=[
            pl.BlockSpec((S, L, block_b), lambda i, start: (0, 0, i)),   # feats
            pl.BlockSpec((S, 1, block_b), lambda i, start: (0, 0, i)),   # labels
            pl.BlockSpec((L, L), lambda i, start: (0, 0)),               # transitions
        ],
        out_specs=(
            pl.BlockSpec((S, 1, block_b), lambda i, start: (0, 0, i)),   # path (time-major)
            pl.BlockSpec((1, block_b), lambda i, start: (0, i)),         # max log-likelihood
            pl.BlockSpec((1, block_b), lambda i, start: (0, i)),         # per-example nll
        ),
        # TODO(synk): narrow psi to int8 (L <= 127) and stream S-chunks through an
        #   extra "arbitrary" grid axis (alpha/delta/gold carried in VMEM scratch)
        #   for production S so the footprint fits v7x's 64 MiB VMEM / v5e's
        #   16 MiB scoped default; raise vmem_limit_bytes if needed.
        scratch_shapes=[pltpu.VMEM((S, L, block_b), jnp.int32)],         # psi trellis
    )

    path_t, maxll, nll = pl.pallas_call(
        crf_kernel,
        out_shape=(
            jax.ShapeDtypeStruct((S, 1, B), jnp.int32),
            jax.ShapeDtypeStruct((1, B), jnp.float32),
            jax.ShapeDtypeStruct((1, B), jnp.float32),
        ),
        grid_spec=grid_spec,
        compiler_params=pltpu.CompilerParams(
            dimension_semantics=("parallel",)),    # batch tiles split across cores
    )(start, feats_t, labels_t, trans)

    path = jnp.transpose(path_t[:, 0, :], (1, 0))      # (B, S)
    loss = jnp.mean(nll)                               # true mean over the full batch
    return path, maxll[0], loss


def reference_forward(feats, label_ids, transitions, start_label_id):
    """Pure NumPy mirror of the PyTorch Transformer_CRF.forward."""
    feats = np.asarray(feats, np.float32)
    labels = np.asarray(label_ids, np.int64)
    trans = np.asarray(transitions, np.float32)
    B, S, L = feats.shape

    # forward alg
    log_alpha = np.full((B, L), NEG_INF, np.float32)
    log_alpha[:, start_label_id] = 0.0
    for t in range(1, S):
        sc = trans[None] + log_alpha[:, None, :]
        m = sc.max(-1)
        log_alpha = m + np.log(np.exp(sc - m[..., None]).sum(-1)) + feats[:, t]
    m = log_alpha.max(-1, keepdims=True)
    forward_score = m + np.log(np.exp(log_alpha - m).sum(-1, keepdims=True))  # (B,1)

    # decode + gold score
    score = np.zeros((B, 1), np.float32)
    log_delta = np.full((B, L), NEG_INF, np.float32)
    log_delta[:, start_label_id] = 0.0
    psi = np.zeros((B, S, L), np.int64)
    for t in range(1, S):
        score = (score
                 + trans[labels[:, t], labels[:, t - 1]][:, None]
                 + feats[np.arange(B), t, labels[:, t]][:, None])
        sc = trans[None] + log_delta[:, None, :]
        psi[:, t] = sc.argmax(-1)
        log_delta = sc.max(-1) + feats[:, t]
    path = np.zeros((B, S), np.int64)
    max_ll = log_delta.max(-1)
    path[:, -1] = log_delta.argmax(-1)
    for t in range(S - 2, -1, -1):
        path[:, t] = psi[np.arange(B), t + 1, path[:, t + 1]]
    loss = np.mean(forward_score - score)
    return path, max_ll, loss


if __name__ == "__main__":
    L = 8                     # num_labels
    start_label_id = 0

    key = jax.random.PRNGKey(0)
    k_trans, k_case1, k_case2 = jax.random.split(key, 3)
    transitions = jax.random.normal(k_trans, (L, L), jnp.float32)

    def run_case(case_key, B, S):
        kf, kl = jax.random.split(case_key)
        feats = jax.random.normal(kf, (B, S, L), jnp.float32)
        label_ids = jax.random.randint(kl, (B, S), 0, L, jnp.int32)

        path, max_ll, loss = transformer_crf_forward(
            feats, label_ids, transitions, start_label_id)
        jax.block_until_ready((path, max_ll, loss))

        ref_path, ref_max_ll, ref_loss = reference_forward(
            feats, label_ids, transitions, start_label_id)
        assert np.array_equal(np.asarray(path), ref_path.astype(np.int32)), \
            f"path mismatch (B={B}, S={S})"
        np.testing.assert_allclose(np.asarray(max_ll), ref_max_ll,
                                   rtol=1e-5, atol=1e-4)
        np.testing.assert_allclose(np.asarray(loss), ref_loss,
                                   rtol=1e-5, atol=5e-4)

    run_case(k_case1, B=16, S=8)     # single batch tile, grid=(1,)
    run_case(k_case2, B=256, S=8)    # two lane-dense 128-wide tiles, grid=(2,), parallel
    print("KERNEL_OK")
</pallas_src>

<mosaic_0001>
module attributes {stable_mosaic.version = 11 : i64} {
  func.func @crf_kernel(%arg0: i32, %arg1: memref<1xi32, #tpu.memory_space<smem>>, %arg2: memref<8x8x16xf32, #tpu.memory_space<vmem>>, %arg3: memref<8x1x16xi32, #tpu.memory_space<vmem>>, %arg4: memref<8x8xf32, #tpu.memory_space<vmem>>, %arg5: memref<8x1x16xi32, #tpu.memory_space<vmem>>, %arg6: memref<1x16xf32, #tpu.memory_space<vmem>>, %arg7: memref<1x16xf32, #tpu.memory_space<vmem>>, %arg8: memref<8x8x16xi32, #tpu.memory_space<vmem>>) attributes {dimension_semantics = [#tpu.dimension_semantics<parallel>], iteration_bounds = array<i64: 1>, scalar_prefetch = 1 : i64, scratch_operands = 1 : i64, tpu.core_type = #tpu.core_type<tc>, window_params = [{transform_indices = @transform_0, window_bounds = array<i64: 8, 8, 16>}, {transform_indices = @transform_1, window_bounds = array<i64: 8, 1, 16>}, {pipeline_mode = #tpu.pipeline_mode<synchronous>, transform_indices = @transform_2, window_bounds = array<i64: 8, 8>}, {transform_indices = @transform_3, window_bounds = array<i64: 8, 1, 16>}, {transform_indices = @transform_4, window_bounds = array<i64: 1, 16>}, {transform_indices = @transform_5, window_bounds = array<i64: 1, 16>}]} {
    %c0 = arith.constant 0 : index
    %0 = memref.load %arg1[%c0] : memref<1xi32, #tpu.memory_space<smem>>
    %c0_0 = arith.constant 0 : index
    %c0_1 = arith.constant 0 : index
    %1 = vector.load %arg4[%c0_0, %c0_1] : memref<8x8xf32, #tpu.memory_space<vmem>>, vector<8x8xf32>
    %cst = arith.constant dense<0xFF800000> : vector<8xf32>
    %2 = vector.multi_reduction <maximumf>, %1, %cst [1] : vector<8x8xf32> to vector<8xf32>
    %3 = vector.shape_cast %2 : vector<8xf32> to vector<8x1xf32>
    %4 = vector.broadcast %3 : vector<8x1xf32> to vector<8x8xf32>
    %5 = arith.subf %1, %4 : vector<8x8xf32>
    %6 = math.exp %5 : vector<8x8xf32>
    %7 = tpu.iota {dimensions = array<i32: 0>} : vector<8x16xi32>
    %8 = tpu.iota {dimensions = array<i32: 1>} : vector<8x8x16xi32>
    %9 = vector.shape_cast %1 : vector<8x8xf32> to vector<8x8x1xf32>
    %10 = vector.broadcast %0 : i32 to vector<8x16xi32>
    %11 = arith.cmpi eq, %7, %10 : vector<8x16xi32>
    %cst_2 = arith.constant 0.000000e+00 : f32
    %cst_3 = arith.constant -1.000000e+04 : f32
    %12 = vector.broadcast %cst_2 : f32 to vector<8x16xf32>
    %13 = vector.broadcast %cst_3 : f32 to vector<8x16xf32>
    %14 = arith.select %11, %12, %13 : vector<8x16xi1>, vector<8x16xf32>
    %c0_4 = arith.constant 0 : index
    %c0_5 = arith.constant 0 : index
    %c0_6 = arith.constant 0 : index
    %15 = vector.load %arg3[%c0_4, %c0_5, %c0_6] : memref<8x1x16xi32, #tpu.memory_space<vmem>>, vector<1x1x16xi32>
    %16 = vector.shape_cast %15 : vector<1x1x16xi32> to vector<1x16xi32>
    %17 = vector.broadcast %16 : vector<1x16xi32> to vector<8x16xi32>
    %18 = arith.cmpi eq, %7, %17 : vector<8x16xi32>
    %19 = arith.extui %18 : vector<8x16xi1> to vector<8x16xi32>
    %20 = arith.sitofp %19 : vector<8x16xi32> to vector<8x16xf32>
    %cst_7 = arith.constant 0.000000e+00 : f32
    %21 = vector.broadcast %cst_7 : f32 to vector<1x16xf32>
    %c1_i32 = arith.constant 1 : i32
    %22 = arith.index_cast %c1_i32 : i32 to index
    %c0_8 = arith.constant 0 : index
    %c0_9 = arith.constant 0 : index
    %23 = vector.load %arg2[%22, %c0_8, %c0_9] : memref<8x8x16xf32, #tpu.memory_space<vmem>>, vector<1x8x16xf32>
    %24 = vector.shape_cast %23 : vector<1x8x16xf32> to vector<8x16xf32>
    %25 = arith.index_cast %c1_i32 : i32 to index
    %c0_10 = arith.constant 0 : index
    %c0_11 = arith.constant 0 : index
    %26 = vector.load %arg3[%25, %c0_10, %c0_11] : memref<8x1x16xi32, #tpu.memory_space<vmem>>, vector<1x1x16xi32>
    %27 = vector.shape_cast %26 : vector<1x1x16xi32> to vector<1x16xi32>
    %28 = vector.broadcast %27 : vector<1x16xi32> to vector<8x16xi32>
    %29 = arith.cmpi eq, %7, %28 : vector<8x16xi32>
    %30 = arith.extui %29 : vector<8x16xi1> to vector<8x16xi32>
    %31 = arith.sitofp %30 : vector<8x16xi32> to vector<8x16xf32>
    %cst_12 = arith.constant dense<0xFF800000> : vector<16xf32>
    %32 = vector.multi_reduction <maximumf>, %14, %cst_12 [0] : vector<8x16xf32> to vector<16xf32>
    %33 = vector.shape_cast %32 : vector<16xf32> to vector<1x16xf32>
    %34 = vector.broadcast %33 : vector<1x16xf32> to vector<8x16xf32>
    %35 = arith.subf %14, %34 : vector<8x16xf32>
    %36 = math.exp %35 : vector<8x16xf32>
    %cst_13 = arith.constant dense<0.000000e+00> : vector<8x16xf32>
    %37 = tpu.matmul %6, %36, %cst_13 {dimension_numbers = #tpu.dot_dimension_numbers<[1], [0], [0], [1], [0, 0, 1, 1], [], []>} : vector<8x8xf32>, vector<8x16xf32>, vector<8x16xf32> -> vector<8x16xf32>
    %38 = math.log %37 : vector<8x16xf32>
    %39 = vector.broadcast %3 : vector<8x1xf32> to vector<8x16xf32>
    %40 = arith.addf %38, %39 : vector<8x16xf32>
    %41 = vector.broadcast %33 : vector<1x16xf32> to vector<8x16xf32>
    %42 = arith.addf %40, %41 : vector<8x16xf32>
    %43 = arith.addf %42, %24 : vector<8x16xf32>
    %44 = vector.shape_cast %14 : vector<8x16xf32> to vector<1x8x16xf32>
    %45 = vector.broadcast %9 : vector<8x8x1xf32> to vector<8x8x16xf32>
    %46 = vector.broadcast %44 : vector<1x8x16xf32> to vector<8x8x16xf32>
    %47 = arith.addf %45, %46 : vector<8x8x16xf32>
    %cst_14 = arith.constant dense<0xFF800000> : vector<8x16xf32>
    %48 = vector.multi_reduction <maximumf>, %47, %cst_14 [1] : vector<8x8x16xf32> to vector<8x16xf32>
    %49 = vector.shape_cast %48 : vector<8x16xf32> to vector<8x1x16xf32>
    %50 = vector.broadcast %49 : vector<8x1x16xf32> to vector<8x8x16xf32>
    %51 = arith.cmpf oeq, %47, %50 : vector<8x8x16xf32>
    %c8_i32 = arith.constant 8 : i32
    %52 = vector.broadcast %c8_i32 : i32 to vector<8x8x16xi32>
    %53 = arith.select %51, %8, %52 : vector<8x8x16xi1>, vector<8x8x16xi32>
    %cst_15 = arith.constant dense<2147483647> : vector<8x16xi32>
    %54 = vector.multi_reduction <minsi>, %53, %cst_15 [1] : vector<8x8x16xi32> to vector<8x16xi32>
    %55 = arith.index_cast %c1_i32 : i32 to index
    %c0_16 = arith.constant 0 : index
    %c0_17 = arith.constant 0 : index
    %56 = vector.load %arg8[%55, %c0_16, %c0_17] : memref<8x8x16xi32, #tpu.memory_space<vmem>>, vector<1x8x16xi32>
    %57 = vector.shape_cast %56 : vector<1x8x16xi32> to vector<8x16xi32>
    %58 = vector.shape_cast %54 : vector<8x16xi32> to vector<1x8x16xi32>
    tpu.vector_store %arg8[%55, %c0_16, %c0_17], %58 {strides = array<i32>} : memref<8x8x16xi32, #tpu.memory_space<vmem>>, vector<1x8x16xi32>,
    %59 = vector.shape_cast %49 : vector<8x1x16xf32> to vector<8x16xf32>
    %60 = arith.addf %59, %24 : vector<8x16xf32>
    %61 = arith.mulf %31, %24 : vector<8x16xf32>
    %cst_18 = arith.constant dense<0.000000e+00> : vector<16xf32>
    %62 = vector.multi_reduction <add>, %61, %cst_18 [0] : vector<8x16xf32> to vector<16xf32>
    %63 = vector.shape_cast %62 : vector<16xf32> to vector<1x16xf32>
    %64 = vector.shape_cast %20 : vector<8x16xf32> to vector<1x8x16xf32>
    %65 = vector.broadcast %9 : vector<8x8x1xf32> to vector<8x8x16xf32>
    %66 = vector.broadcast %64 : vector<1x8x16xf32> to vector<8x8x16xf32>
    %67 = arith.mulf %65, %66 : vector<8x8x16xf32>
    %cst_19 = arith.constant dense<0.000000e+00> : vector<8x16xf32>
    %68 = vector.multi_reduction <add>, %67, %cst_19 [1] : vector<8x8x16xf32> to vector<8x16xf32>
    %69 = arith.addf %21, %63 : vector<1x16xf32>
    %70 = arith.mulf %31, %68 : vector<8x16xf32>
    %cst_20 = arith.constant dense<0.000000e+00> : vector<16xf32>
    %71 = vector.multi_reduction <add>, %70, %cst_20 [0] : vector<8x16xf32> to vector<16xf32>
    %72 = vector.shape_cast %71 : vector<16xf32> to vector<1x16xf32>
    %73 = arith.addf %69, %72 : vector<1x16xf32>
    %c2_i32 = arith.constant 2 : i32
    %74 = arith.index_cast %c2_i32 : i32 to index
    %c0_21 = arith.constant 0 : index
    %c0_22 = arith.constant 0 : index
    %75 = vector.load %arg2[%74, %c0_21, %c0_22] : memref<8x8x16xf32, #tpu.memory_space<vmem>>, vector<1x8x16xf32>
    %76 = vector.shape_cast %75 : vector<1x8x16xf32> to vector<8x16xf32>
    %77 = arith.index_cast %c2_i32 : i32 to index
    %c0_23 = arith.constant 0 : index
    %c0_24 = arith.constant 0 : index
    %78 = vector.load %arg3[%77, %c0_23, %c0_24] : memref<8x1x16xi32, #tpu.memory_space<vmem>>, vector<1x1x16xi32>
    %79 = vector.shape_cast %78 : vector<1x1x16xi32> to vector<1x16xi32>
    %80 = vector.broadcast %79 : vector<1x16xi32> to vector<8x16xi32>
    %81 = arith.cmpi eq, %7, %80 : vector<8x16xi32>
    %82 = arith.extui %81 : vector<8x16xi1> to vector<8x16xi32>
    %83 = arith.sitofp %82 : vector<8x16xi32> to vector<8x16xf32>
    %cst_25 = arith.constant dense<0xFF800000> : vector<16xf32>
    %84 = vector.multi_reduction <maximumf>, %43, %cst_25 [0] : vector<8x16xf32> to vector<16xf32>
    %85 = vector.shape_cast %84 : vector<16xf32> to vector<1x16xf32>
    %86 = vector.broadcast %85 : vector<1x16xf32> to vector<8x16xf32>
    %87 = arith.subf %43, %86 : vector<8x16xf32>
    %88 = math.exp %87 : vector<8x16xf32>
    %cst_26 = arith.constant dense<0.000000e+00> : vector<8x16xf32>
    %89 = tpu.matmul %6, %88, %cst_26 {dimension_numbers = #tpu.dot_dimension_numbers<[1], [0], [0], [1], [0, 0, 1, 1], [], []>} : vector<8x8xf32>, vector<8x16xf32>, vector<8x16xf32> -> vector<8x16xf32>
    %90 = math.log %89 : vector<8x16xf32>
    %91 = vector.broadcast %3 : vector<8x1xf32> to vector<8x16xf32>
    %92 = arith.addf %90, %91 : vector<8x16xf32>
    %93 = vector.broadcast %85 : vector<1x16xf32> to vector<8x16xf32>
    %94 = arith.addf %92, %93 : vector<8x16xf32>
    %95 = arith.addf %94, %76 : vector<8x16xf32>
    %96 = vector.shape_cast %60 : vector<8x16xf32> to vector<1x8x16xf32>
    %97 = vector.broadcast %9 : vector<8x8x1xf32> to vector<8x8x16xf32>
    %98 = vector.broadcast %96 : vector<1x8x16xf32> to vector<8x8x16xf32>
    %99 = arith.addf %97, %98 : vector<8x8x16xf32>
    %cst_27 = arith.constant dense<0xFF800000> : vector<8x16xf32>
    %100 = vector.multi_reduction <maximumf>, %99, %cst_27 [1] : vector<8x8x16xf32> to vector<8x16xf32>
    %101 = vector.shape_cast %100 : vector<8x16xf32> to vector<8x1x16xf32>
    %102 = vector.broadcast %101 : vector<8x1x16xf32> to vector<8x8x16xf32>
    %103 = arith.cmpf oeq, %99, %102 : vector<8x8x16xf32>
    %c8_i32_28 = arith.constant 8 : i32
    %104 = vector.broadcast %c8_i32_28 : i32 to vector<8x8x16xi32>
    %105 = arith.select %103, %8, %104 : vector<8x8x16xi1>, vector<8x8x16xi32>
    %cst_29 = arith.constant dense<2147483647> : vector<8x16xi32>
    %106 = vector.multi_reduction <minsi>, %105, %cst_29 [1] : vector<8x8x16xi32> to vector<8x16xi32>
    %107 = arith.index_cast %c2_i32 : i32 to index
    %c0_30 = arith.constant 0 : index
    %c0_31 = arith.constant 0 : index
    %108 = vector.load %arg8[%107, %c0_30, %c0_31] : memref<8x8x16xi32, #tpu.memory_space<vmem>>, vector<1x8x16xi32>
    %109 = vector.shape_cast %108 : vector<1x8x16xi32> to vector<8x16xi32>
    %110 = vector.shape_cast %106 : vector<8x16xi32> to vector<1x8x16xi32>
    tpu.vector_store %arg8[%107, %c0_30, %c0_31], %110 {strides = array<i32>} : memref<8x8x16xi32, #tpu.memory_space<vmem>>, vector<1x8x16xi32>,
    %111 = vector.shape_cast %101 : vector<8x1x16xf32> to vector<8x16xf32>
    %112 = arith.addf %111, %76 : vector<8x16xf32>
    %113 = arith.mulf %83, %76 : vector<8x16xf32>
    %cst_32 = arith.constant dense<0.000000e+00> : vector<16xf32>
    %114 = vector.multi_reduction <add>, %113, %cst_32 [0] : vector<8x16xf32> to vector<16xf32>
    %115 = vector.shape_cast %114 : vector<16xf32> to vector<1x16xf32>
    %116 = vector.shape_cast %31 : vector<8x16xf32> to vector<1x8x16xf32>
    %117 = vector.broadcast %9 : vector<8x8x1xf32> to vector<8x8x16xf32>
    %118 = vector.broadcast %116 : vector<1x8x16xf32> to vector<8x8x16xf32>
    %119 = arith.mulf %117, %118 : vector<8x8x16xf32>
    %cst_33 = arith.constant dense<0.000000e+00> : vector<8x16xf32>
    %120 = vector.multi_reduction <add>, %119, %cst_33 [1] : vector<8x8x16xf32> to vector<8x16xf32>
    %121 = arith.addf %73, %115 : vector<1x16xf32>
    %122 = arith.mulf %83, %120 : vector<8x16xf32>
    %cst_34 = arith.constant dense<0.000000e+00> : vector<16xf32>
    %123 = vector.multi_reduction <add>, %122, %cst_34 [0] : vector<8x16xf32> to vector<16xf32>
    %124 = vector.shape_cast %123 : vector<16xf32> to vector<1x16xf32>
    %125 = arith.addf %121, %124 : vector<1x16xf32>
    %c3_i32 = arith.constant 3 : i32
    %126 = arith.index_cast %c3_i32 : i32 to index
    %c0_35 = arith.constant 0 : index
    %c0_36 = arith.constant 0 : index
    %127 = vector.load %arg2[%126, %c0_35, %c0_36] : memref<8x8x16xf32, #tpu.memory_space<vmem>>, vector<1x8x16xf32>
    %128 = vector.shape_cast %127 : vector<1x8x16xf32> to vector<8x16xf32>
    %129 = arith.index_cast %c3_i32 : i32 to index
    %c0_37 = arith.constant 0 : index
    %c0_38 = arith.constant 0 : index
    %130 = vector.load %arg3[%129, %c0_37, %c0_38] : memref<8x1x16xi32, #tpu.memory_space<vmem>>, vector<1x1x16xi32>
    %131 = vector.shape_cast %130 : vector<1x1x16xi32> to vector<1x16xi32>
    %132 = vector.broadcast %131 : vector<1x16xi32> to vector<8x16xi32>
    %133 = arith.cmpi eq, %7, %132 : vector<8x16xi32>
    %134 = arith.extui %133 : vector<8x16xi1> to vector<8x16xi32>
    %135 = arith.sitofp %134 : vector<8x16xi32> to vector<8x16xf32>
    %cst_39 = arith.constant dense<0xFF800000> : vector<16xf32>
    %136 = vector.multi_reduction <maximumf>, %95, %cst_39 [0] : vector<8x16xf32> to vector<16xf32>
    %137 = vector.shape_cast %136 : vector<16xf32> to vector<1x16xf32>
    %138 = vector.broadcast %137 : vector<1x16xf32> to vector<8x16xf32>
    %139 = arith.subf %95, %138 : vector<8x16xf32>
    %140 = math.exp %139 : vector<8x16xf32>
    %cst_40 = arith.constant dense<0.000000e+00> : vector<8x16xf32>
    %141 = tpu.matmul %6, %140, %cst_40 {dimension_numbers = #tpu.dot_dimension_numbers<[1], [0], [0], [1], [0, 0, 1, 1], [], []>} : vector<8x8xf32>, vector<8x16xf32>, vector<8x16xf32> -> vector<8x16xf32>
    %142 = math.log %141 : vector<8x16xf32>
    %143 = vector.broadcast %3 : vector<8x1xf32> to vector<8x16xf32>
    %144 = arith.addf %142, %143 : vector<8x16xf32>
    %145 = vector.broadcast %137 : vector<1x16xf32> to vector<8x16xf32>
    %146 = arith.addf %144, %145 : vector<8x16xf32>
    %147 = arith.addf %146, %128 : vector<8x16xf32>
    %148 = vector.shape_cast %112 : vector<8x16xf32> to vector<1x8x16xf32>
    %149 = vector.broadcast %9 : vector<8x8x1xf32> to vector<8x8x16xf32>
    %150 = vector.broadcast %148 : vector<1x8x16xf32> to vector<8x8x16xf32>
    %151 = arith.addf %149, %150 : vector<8x8x16xf32>
    %cst_41 = arith.constant dense<0xFF800000> : vector<8x16xf32>
    %152 = vector.multi_reduction <maximumf>, %151, %cst_41 [1] : vector<8x8x16xf32> to vector<8x16xf32>
    %153 = vector.shape_cast %152 : vector<8x16xf32> to vector<8x1x16xf32>
    %154 = vector.broadcast %153 : vector<8x1x16xf32> to vector<8x8x16xf32>
    %155 = arith.cmpf oeq, %151, %154 : vector<8x8x16xf32>
    %c8_i32_42 = arith.constant 8 : i32
    %156 = vector.broadcast %c8_i32_42 : i32 to vector<8x8x16xi32>
    %157 = arith.select %155, %8, %156 : vector<8x8x16xi1>, vector<8x8x16xi32>
    %cst_43 = arith.constant dense<2147483647> : vector<8x16xi32>
    %158 = vector.multi_reduction <minsi>, %157, %cst_43 [1] : vector<8x8x16xi32> to vector<8x16xi32>
    %159 = arith.index_cast %c3_i32 : i32 to index
    %c0_44 = arith.constant 0 : index
    %c0_45 = arith.constant 0 : index
    %160 = vector.load %arg8[%159, %c0_44, %c0_45] : memref<8x8x16xi32, #tpu.memory_space<vmem>>, vector<1x8x16xi32>
    %161 = vector.shape_cast %160 : vector<1x8x16xi32> to vector<8x16xi32>
    %162 = vector.shape_cast %158 : vector<8x16xi32> to vector<1x8x16xi32>
    tpu.vector_store %arg8[%159, %c0_44, %c0_45], %162 {strides = array<i32>} : memref<8x8x16xi32, #tpu.memory_space<vmem>>, vector<1x8x16xi32>,
    %163 = vector.shape_cast %153 : vector<8x1x16xf32> to vector<8x16xf32>
    %164 = arith.addf %163, %128 : vector<8x16xf32>
    %165 = arith.mulf %135, %128 : vector<8x16xf32>
    %cst_46 = arith.constant dense<0.000000e+00> : vector<16xf32>
    %166 = vector.multi_reduction <add>, %165, %cst_46 [0] : vector<8x16xf32> to vector<16xf32>
    %167 = vector.shape_cast %166 : vector<16xf32> to vector<1x16xf32>
    %168 = vector.shape_cast %83 : vector<8x16xf32> to vector<1x8x16xf32>
    %169 = vector.broadcast %9 : vector<8x8x1xf32> to vector<8x8x16xf32>
    %170 = vector.broadcast %168 : vector<1x8x16xf32> to vector<8x8x16xf32>
    %171 = arith.mulf %169, %170 : vector<8x8x16xf32>
    %cst_47 = arith.constant dense<0.000000e+00> : vector<8x16xf32>
    %172 = vector.multi_reduction <add>, %171, %cst_47 [1] : vector<8x8x16xf32> to vector<8x16xf32>
    %173 = arith.addf %125, %167 : vector<1x16xf32>
    %174 = arith.mulf %135, %172 : vector<8x16xf32>
    %cst_48 = arith.constant dense<0.000000e+00> : vector<16xf32>
    %175 = vector.multi_reduction <add>, %174, %cst_48 [0] : vector<8x16xf32> to vector<16xf32>
    %176 = vector.shape_cast %175 : vector<16xf32> to vector<1x16xf32>
    %177 = arith.addf %173, %176 : vector<1x16xf32>
    %c4_i32 = arith.constant 4 : i32
    %178 = arith.index_cast %c4_i32 : i32 to index
    %c0_49 = arith.constant 0 : index
    %c0_50 = arith.constant 0 : index
    %179 = vector.load %arg2[%178, %c0_49, %c0_50] : memref<8x8x16xf32, #tpu.memory_space<vmem>>, vector<1x8x16xf32>
    %180 = vector.shape_cast %179 : vector<1x8x16xf32> to vector<8x16xf32>
    %181 = arith.index_cast %c4_i32 : i32 to index
    %c0_51 = arith.constant 0 : index
    %c0_52 = arith.constant 0 : index
    %182 = vector.load %arg3[%181, %c0_51, %c0_52] : memref<8x1x16xi32, #tpu.memory_space<vmem>>, vector<1x1x16xi32>
    %183 = vector.shape_cast %182 : vector<1x1x16xi32> to vector<1x16xi32>
    %184 = vector.broadcast %183 : vector<1x16xi32> to vector<8x16xi32>
    %185 = arith.cmpi eq, %7, %184 : vector<8x16xi32>
    %186 = arith.extui %185 : vector<8x16xi1> to vector<8x16xi32>
    %187 = arith.sitofp %186 : vector<8x16xi32> to vector<8x16xf32>
    %cst_53 = arith.constant dense<0xFF800000> : vector<16xf32>
    %188 = vector.multi_reduction <maximumf>, %147, %cst_53 [0] : vector<8x16xf32> to vector<16xf32>
    %189 = vector.shape_cast %188 : vector<16xf32> to vector<1x16xf32>
    %190 = vector.broadcast %189 : vector<1x16xf32> to vector<8x16xf32>
    %191 = arith.subf %147, %190 : vector<8x16xf32>
    %192 = math.exp %191 : vector<8x16xf32>
    %cst_54 = arith.constant dense<0.000000e+00> : vector<8x16xf32>
    %193 = tpu.matmul %6, %192, %cst_54 {dimension_numbers = #tpu.dot_dimension_numbers<[1], [0], [0], [1], [0, 0, 1, 1], [], []>} : vector<8x8xf32>, vector<8x16xf32>, vector<8x16xf32> -> vector<8x16xf32>
    %194 = math.log %193 : vector<8x16xf32>
    %195 = vector.broadcast %3 : vector<8x1xf32> to vector<8x16xf32>
    %196 = arith.addf %194, %195 : vector<8x16xf32>
    %197 = vector.broadcast %189 : vector<1x16xf32> to vector<8x16xf32>
    %198 = arith.addf %196, %197 : vector<8x16xf32>
    %199 = arith.addf %198, %180 : vector<8x16xf32>
    %200 = vector.shape_cast %164 : vector<8x16xf32> to vector<1x8x16xf32>
    %201 = vector.broadcast %9 : vector<8x8x1xf32> to vector<8x8x16xf32>
    %202 = vector.broadcast %200 : vector<1x8x16xf32> to vector<8x8x16xf32>
    %203 = arith.addf %201, %202 : vector<8x8x16xf32>
    %cst_55 = arith.constant dense<0xFF800000> : vector<8x16xf32>
    %204 = vector.multi_reduction <maximumf>, %203, %cst_55 [1] : vector<8x8x16xf32> to vector<8x16xf32>
    %205 = vector.shape_cast %204 : vector<8x16xf32> to vector<8x1x16xf32>
    %206 = vector.broadcast %205 : vector<8x1x16xf32> to vector<8x8x16xf32>
    %207 = arith.cmpf oeq, %203, %206 : vector<8x8x16xf32>
    %c8_i32_56 = arith.constant 8 : i32
    %208 = vector.broadcast %c8_i32_56 : i32 to vector<8x8x16xi32>
    %209 = arith.select %207, %8, %208 : vector<8x8x16xi1>, vector<8x8x16xi32>
    %cst_57 = arith.constant dense<2147483647> : vector<8x16xi32>
    %210 = vector.multi_reduction <minsi>, %209, %cst_57 [1] : vector<8x8x16xi32> to vector<8x16xi32>
    %211 = arith.index_cast %c4_i32 : i32 to index
    %c0_58 = arith.constant 0 : index
    %c0_59 = arith.constant 0 : index
    %212 = vector.load %arg8[%211, %c0_58, %c0_59] : memref<8x8x16xi32, #tpu.memory_space<vmem>>, vector<1x8x16xi32>
    %213 = vector.shape_cast %212 : vector<1x8x16xi32> to vector<8x16xi32>
    %214 = vector.shape_cast %210 : vector<8x16xi32> to vector<1x8x16xi32>
    tpu.vector_store %arg8[%211, %c0_58, %c0_59], %214 {strides = array<i32>} : memref<8x8x16xi32, #tpu.memory_space<vmem>>, vector<1x8x16xi32>,
    %215 = vector.shape_cast %205 : vector<8x1x16xf32> to vector<8x16xf32>
    %216 = arith.addf %215, %180 : vector<8x16xf32>
    %217 = arith.mulf %187, %180 : vector<8x16xf32>
    %cst_60 = arith.constant dense<0.000000e+00> : vector<16xf32>
    %218 = vector.multi_reduction <add>, %217, %cst_60 [0] : vector<8x16xf32> to vector<16xf32>
    %219 = vector.shape_cast %218 : vector<16xf32> to vector<1x16xf32>
    %220 = vector.shape_cast %135 : vector<8x16xf32> to vector<1x8x16xf32>
    %221 = vector.broadcast %9 : vector<8x8x1xf32> to vector<8x8x16xf32>
    %222 = vector.broadcast %220 : vector<1x8x16xf32> to vector<8x8x16xf32>
    %223 = arith.mulf %221, %222 : vector<8x8x16xf32>
    %cst_61 = arith.constant dense<0.000000e+00> : vector<8x16xf32>
    %224 = vector.multi_reduction <add>, %223, %cst_61 [1] : vector<8x8x16xf32> to vector<8x16xf32>
    %225 = arith.addf %177, %219 : vector<1x16xf32>
    %226 = arith.mulf %187, %224 : vector<8x16xf32>
    %cst_62 = arith.constant dense<0.000000e+00> : vector<16xf32>
    %227 = vector.multi_reduction <add>, %226, %cst_62 [0] : vector<8x16xf32> to vector<16xf32>
    %228 = vector.shape_cast %227 : vector<16xf32> to vector<1x16xf32>
    %229 = arith.addf %225, %228 : vector<1x16xf32>
    %c5_i32 = arith.constant 5 : i32
    %230 = arith.index_cast %c5_i32 : i32 to index
    %c0_63 = arith.constant 0 : index
    %c0_64 = arith.constant 0 : index
    %231 = vector.load %arg2[%230, %c0_63, %c0_64] : memref<8x8x16xf32, #tpu.memory_space<vmem>>, vector<1x8x16xf32>
    %232 = vector.shape_cast %231 : vector<1x8x16xf32> to vector<8x16xf32>
    %233 = arith.index_cast %c5_i32 : i32 to index
    %c0_65 = arith.constant 0 : index
    %c0_66 = arith.constant 0 : index
    %234 = vector.load %arg3[%233, %c0_65, %c0_66] : memref<8x1x16xi32, #tpu.memory_space<vmem>>, vector<1x1x16xi32>
    %235 = vector.shape_cast %234 : vector<1x1x16xi32> to vector<1x16xi32>
    %236 = vector.broadcast %235 : vector<1x16xi32> to vector<8x16xi32>
    %237 = arith.cmpi eq, %7, %236 : vector<8x16xi32>
    %238 = arith.extui %237 : vector<8x16xi1> to vector<8x16xi32>
    %239 = arith.sitofp %238 : vector<8x16xi32> to vector<8x16xf32>
    %cst_67 = arith.constant dense<0xFF800000> : vector<16xf32>
    %240 = vector.multi_reduction <maximumf>, %199, %cst_67 [0] : vector<8x16xf32> to vector<16xf32>
    %241 = vector.shape_cast %240 : vector<16xf32> to vector<1x16xf32>
    %242 = vector.broadcast %241 : vector<1x16xf32> to vector<8x16xf32>
    %243 = arith.subf %199, %242 : vector<8x16xf32>
    %244 = math.exp %243 : vector<8x16xf32>
    %cst_68 = arith.constant dense<0.000000e+00> : vector<8x16xf32>
    %245 = tpu.matmul %6, %244, %cst_68 {dimension_numbers = #tpu.dot_dimension_numbers<[1], [0], [0], [1], [0, 0, 1, 1], [], []>} : vector<8x8xf32>, vector<8x16xf32>, vector<8x16xf32> -> vector<8x16xf32>
    %246 = math.log %245 : vector<8x16xf32>
    %247 = vector.broadcast %3 : vector<8x1xf32> to vector<8x16xf32>
    %248 = arith.addf %246, %247 : vector<8x16xf32>
    %249 = vector.broadcast %241 : vector<1x16xf32> to vector<8x16xf32>
    %250 = arith.addf %248, %249 : vector<8x16xf32>
    %251 = arith.addf %250, %232 : vector<8x16xf32>
    %252 = vector.shape_cast %216 : vector<8x16xf32> to vector<1x8x16xf32>
    %253 = vector.broadcast %9 : vector<8x8x1xf32> to vector<8x8x16xf32>
    %254 = vector.broadcast %252 : vector<1x8x16xf32> to vector<8x8x16xf32>
    %255 = arith.addf %253, %254 : vector<8x8x16xf32>
    %cst_69 = arith.constant dense<0xFF800000> : vector<8x16xf32>
    %256 = vector.multi_reduction <maximumf>, %255, %cst_69 [1] : vector<8x8x16xf32> to vector<8x16xf32>
    %257 = vector.shape_cast %256 : vector<8x16xf32> to vector<8x1x16xf32>
    %258 = vector.broadcast %257 : vector<8x1x16xf32> to vector<8x8x16xf32>
    %259 = arith.cmpf oeq, %255, %258 : vector<8x8x16xf32>
    %c8_i32_70 = arith.constant 8 : i32
    %260 = vector.broadcast %c8_i32_70 : i32 to vector<8x8x16xi32>
    %261 = arith.select %259, %8, %260 : vector<8x8x16xi1>, vector<8x8x16xi32>
    %cst_71 = arith.constant dense<2147483647> : vector<8x16xi32>
    %262 = vector.multi_reduction <minsi>, %261, %cst_71 [1] : vector<8x8x16xi32> to vector<8x16xi32>
    %263 = arith.index_cast %c5_i32 : i32 to index
    %c0_72 = arith.constant 0 : index
    %c0_73 = arith.constant 0 : index
    %264 = vector.load %arg8[%263, %c0_72, %c0_73] : memref<8x8x16xi32, #tpu.memory_space<vmem>>, vector<1x8x16xi32>
    %265 = vector.shape_cast %264 : vector<1x8x16xi32> to vector<8x16xi32>
    %266 = vector.shape_cast %262 : vector<8x16xi32> to vector<1x8x16xi32>
    tpu.vector_store %arg8[%263, %c0_72, %c0_73], %266 {strides = array<i32>} : memref<8x8x16xi32, #tpu.memory_space<vmem>>, vector<1x8x16xi32>,
    %267 = vector.shape_cast %257 : vector<8x1x16xf32> to vector<8x16xf32>
    %268 = arith.addf %267, %232 : vector<8x16xf32>
    %269 = arith.mulf %239, %232 : vector<8x16xf32>
    %cst_74 = arith.constant dense<0.000000e+00> : vector<16xf32>
    %270 = vector.multi_reduction <add>, %269, %cst_74 [0] : vector<8x16xf32> to vector<16xf32>
    %271 = vector.shape_cast %270 : vector<16xf32> to vector<1x16xf32>
    %272 = vector.shape_cast %187 : vector<8x16xf32> to vector<1x8x16xf32>
    %273 = vector.broadcast %9 : vector<8x8x1xf32> to vector<8x8x16xf32>
    %274 = vector.broadcast %272 : vector<1x8x16xf32> to vector<8x8x16xf32>
    %275 = arith.mulf %273, %274 : vector<8x8x16xf32>
    %cst_75 = arith.constant dense<0.000000e+00> : vector<8x16xf32>
    %276 = vector.multi_reduction <add>, %275, %cst_75 [1] : vector<8x8x16xf32> to vector<8x16xf32>
    %277 = arith.addf %229, %271 : vector<1x16xf32>
    %278 = arith.mulf %239, %276 : vector<8x16xf32>
    %cst_76 = arith.constant dense<0.000000e+00> : vector<16xf32>
    %279 = vector.multi_reduction <add>, %278, %cst_76 [0] : vector<8x16xf32> to vector<16xf32>
    %280 = vector.shape_cast %279 : vector<16xf32> to vector<1x16xf32>
    %281 = arith.addf %277, %280 : vector<1x16xf32>
    %c6_i32 = arith.constant 6 : i32
    %282 = arith.index_cast %c6_i32 : i32 to index
    %c0_77 = arith.constant 0 : index
    %c0_78 = arith.constant 0 : index
    %283 = vector.load %arg2[%282, %c0_77, %c0_78] : memref<8x8x16xf32, #tpu.memory_space<vmem>>, vector<1x8x16xf32>
    %284 = vector.shape_cast %283 : vector<1x8x16xf32> to vector<8x16xf32>
    %285 = arith.index_cast %c6_i32 : i32 to index
    %c0_79 = arith.constant 0 : index
    %c0_80 = arith.constant 0 : index
    %286 = vector.load %arg3[%285, %c0_79, %c0_80] : memref<8x1x16xi32, #tpu.memory_space<vmem>>, vector<1x1x16xi32>
    %287 = vector.shape_cast %286 : vector<1x1x16xi32> to vector<1x16xi32>
    %288 = vector.broadcast %287 : vector<1x16xi32> to vector<8x16xi32>
    %289 = arith.cmpi eq, %7, %288 : vector<8x16xi32>
    %290 = arith.extui %289 : vector<8x16xi1> to vector<8x16xi32>
    %291 = arith.sitofp %290 : vector<8x16xi32> to vector<8x16xf32>
    %cst_81 = arith.constant dense<0xFF800000> : vector<16xf32>
    %292 = vector.multi_reduction <maximumf>, %251, %cst_81 [0] : vector<8x16xf32> to vector<16xf32>
    %293 = vector.shape_cast %292 : vector<16xf32> to vector<1x16xf32>
    %294 = vector.broadcast %293 : vector<1x16xf32> to vector<8x16xf32>
    %295 = arith.subf %251, %294 : vector<8x16xf32>
    %296 = math.exp %295 : vector<8x16xf32>
    %cst_82 = arith.constant dense<0.000000e+00> : vector<8x16xf32>
    %297 = tpu.matmul %6, %296, %cst_82 {dimension_numbers = #tpu.dot_dimension_numbers<[1], [0], [0], [1], [0, 0, 1, 1], [], []>} : vector<8x8xf32>, vector<8x16xf32>, vector<8x16xf32> -> vector<8x16xf32>
    %298 = math.log %297 : vector<8x16xf32>
    %299 = vector.broadcast %3 : vector<8x1xf32> to vector<8x16xf32>
    %300 = arith.addf %298, %299 : vector<8x16xf32>
    %301 = vector.broadcast %293 : vector<1x16xf32> to vector<8x16xf32>
    %302 = arith.addf %300, %301 : vector<8x16xf32>
    %303 = arith.addf %302, %284 : vector<8x16xf32>
    %304 = vector.shape_cast %268 : vector<8x16xf32> to vector<1x8x16xf32>
    %305 = vector.broadcast %9 : vector<8x8x1xf32> to vector<8x8x16xf32>
    %306 = vector.broadcast %304 : vector<1x8x16xf32> to vector<8x8x16xf32>
    %307 = arith.addf %305, %306 : vector<8x8x16xf32>
    %cst_83 = arith.constant dense<0xFF800000> : vector<8x16xf32>
    %308 = vector.multi_reduction <maximumf>, %307, %cst_83 [1] : vector<8x8x16xf32> to vector<8x16xf32>
    %309 = vector.shape_cast %308 : vector<8x16xf32> to vector<8x1x16xf32>
    %310 = vector.broadcast %309 : vector<8x1x16xf32> to vector<8x8x16xf32>
    %311 = arith.cmpf oeq, %307, %310 : vector<8x8x16xf32>
    %c8_i32_84 = arith.constant 8 : i32
    %312 = vector.broadcast %c8_i32_84 : i32 to vector<8x8x16xi32>
    %313 = arith.select %311, %8, %312 : vector<8x8x16xi1>, vector<8x8x16xi32>
    %cst_85 = arith.constant dense<2147483647> : vector<8x16xi32>
    %314 = vector.multi_reduction <minsi>, %313, %cst_85 [1] : vector<8x8x16xi32> to vector<8x16xi32>
    %315 = arith.index_cast %c6_i32 : i32 to index
    %c0_86 = arith.constant 0 : index
    %c0_87 = arith.constant 0 : index
    %316 = vector.load %arg8[%315, %c0_86, %c0_87] : memref<8x8x16xi32, #tpu.memory_space<vmem>>, vector<1x8x16xi32>
    %317 = vector.shape_cast %316 : vector<1x8x16xi32> to vector<8x16xi32>
    %318 = vector.shape_cast %314 : vector<8x16xi32> to vector<1x8x16xi32>
    tpu.vector_store %arg8[%315, %c0_86, %c0_87], %318 {strides = array<i32>} : memref<8x8x16xi32, #tpu.memory_space<vmem>>, vector<1x8x16xi32>,
    %319 = vector.shape_cast %309 : vector<8x1x16xf32> to vector<8x16xf32>
    %320 = arith.addf %319, %284 : vector<8x16xf32>
    %321 = arith.mulf %291, %284 : vector<8x16xf32>
    %cst_88 = arith.constant dense<0.000000e+00> : vector<16xf32>
    %322 = vector.multi_reduction <add>, %321, %cst_88 [0] : vector<8x16xf32> to vector<16xf32>
    %323 = vector.shape_cast %322 : vector<16xf32> to vector<1x16xf32>
    %324 = vector.shape_cast %239 : vector<8x16xf32> to vector<1x8x16xf32>
    %325 = vector.broadcast %9 : vector<8x8x1xf32> to vector<8x8x16xf32>
    %326 = vector.broadcast %324 : vector<1x8x16xf32> to vector<8x8x16xf32>
    %327 = arith.mulf %325, %326 : vector<8x8x16xf32>
    %cst_89 = arith.constant dense<0.000000e+00> : vector<8x16xf32>
    %328 = vector.multi_reduction <add>, %327, %cst_89 [1] : vector<8x8x16xf32> to vector<8x16xf32>
    %329 = arith.addf %281, %323 : vector<1x16xf32>
    %330 = arith.mulf %291, %328 : vector<8x16xf32>
    %cst_90 = arith.constant dense<0.000000e+00> : vector<16xf32>
    %331 = vector.multi_reduction <add>, %330, %cst_90 [0] : vector<8x16xf32> to vector<16xf32>
    %332 = vector.shape_cast %331 : vector<16xf32> to vector<1x16xf32>
    %333 = arith.addf %329, %332 : vector<1x16xf32>
    %c7_i32 = arith.constant 7 : i32
    %334 = arith.index_cast %c7_i32 : i32 to index
    %c0_91 = arith.constant 0 : index
    %c0_92 = arith.constant 0 : index
    %335 = vector.load %arg2[%334, %c0_91, %c0_92] : memref<8x8x16xf32, #tpu.memory_space<vmem>>, vector<1x8x16xf32>
    %336 = vector.shape_cast %335 : vector<1x8x16xf32> to vector<8x16xf32>
    %337 = arith.index_cast %c7_i32 : i32 to index
    %c0_93 = arith.constant 0 : index
    %c0_94 = arith.constant 0 : index
    %338 = vector.load %arg3[%337, %c0_93, %c0_94] : memref<8x1x16xi32, #tpu.memory_space<vmem>>, vector<1x1x16xi32>
    %339 = vector.shape_cast %338 : vector<1x1x16xi32> to vector<1x16xi32>
    %340 = vector.broadcast %339 : vector<1x16xi32> to vector<8x16xi32>
    %341 = arith.cmpi eq, %7, %340 : vector<8x16xi32>
    %342 = arith.extui %341 : vector<8x16xi1> to vector<8x16xi32>
    %343 = arith.sitofp %342 : vector<8x16xi32> to vector<8x16xf32>
    %cst_95 = arith.constant dense<0xFF800000> : vector<16xf32>
    %344 = vector.multi_reduction <maximumf>, %303, %cst_95 [0] : vector<8x16xf32> to vector<16xf32>
    %345 = vector.shape_cast %344 : vector<16xf32> to vector<1x16xf32>
    %346 = vector.broadcast %345 : vector<1x16xf32> to vector<8x16xf32>
    %347 = arith.subf %303, %346 : vector<8x16xf32>
    %348 = math.exp %347 : vector<8x16xf32>
    %cst_96 = arith.constant dense<0.000000e+00> : vector<8x16xf32>
    %349 = tpu.matmul %6, %348, %cst_96 {dimension_numbers = #tpu.dot_dimension_numbers<[1], [0], [0], [1], [0, 0, 1, 1], [], []>} : vector<8x8xf32>, vector<8x16xf32>, vector<8x16xf32> -> vector<8x16xf32>
    %350 = math.log %349 : vector<8x16xf32>
    %351 = vector.broadcast %3 : vector<8x1xf32> to vector<8x16xf32>
    %352 = arith.addf %350, %351 : vector<8x16xf32>
    %353 = vector.broadcast %345 : vector<1x16xf32> to vector<8x16xf32>
    %354 = arith.addf %352, %353 : vector<8x16xf32>
    %355 = arith.addf %354, %336 : vector<8x16xf32>
    %356 = vector.shape_cast %320 : vector<8x16xf32> to vector<1x8x16xf32>
    %357 = vector.broadcast %9 : vector<8x8x1xf32> to vector<8x8x16xf32>
    %358 = vector.broadcast %356 : vector<1x8x16xf32> to vector<8x8x16xf32>
    %359 = arith.addf %357, %358 : vector<8x8x16xf32>
    %cst_97 = arith.constant dense<0xFF800000> : vector<8x16xf32>
    %360 = vector.multi_reduction <maximumf>, %359, %cst_97 [1] : vector<8x8x16xf32> to vector<8x16xf32>
    %361 = vector.shape_cast %360 : vector<8x16xf32> to vector<8x1x16xf32>
    %362 = vector.broadcast %361 : vector<8x1x16xf32> to vector<8x8x16xf32>
    %363 = arith.cmpf oeq, %359, %362 : vector<8x8x16xf32>
    %c8_i32_98 = arith.constant 8 : i32
    %364 = vector.broadcast %c8_i32_98 : i32 to vector<8x8x16xi32>
    %365 = arith.select %363, %8, %364 : vector<8x8x16xi1>, vector<8x8x16xi32>
    %cst_99 = arith.constant dense<2147483647> : vector<8x16xi32>
    %366 = vector.multi_reduction <minsi>, %365, %cst_99 [1] : vector<8x8x16xi32> to vector<8x16xi32>
    %367 = arith.index_cast %c7_i32 : i32 to index
    %c0_100 = arith.constant 0 : index
    %c0_101 = arith.constant 0 : index
    %368 = vector.load %arg8[%367, %c0_100, %c0_101] : memref<8x8x16xi32, #tpu.memory_space<vmem>>, vector<1x8x16xi32>
    %369 = vector.shape_cast %368 : vector<1x8x16xi32> to vector<8x16xi32>
    %370 = vector.shape_cast %366 : vector<8x16xi32> to vector<1x8x16xi32>
    tpu.vector_store %arg8[%367, %c0_100, %c0_101], %370 {strides = array<i32>} : memref<8x8x16xi32, #tpu.memory_space<vmem>>, vector<1x8x16xi32>,
    %371 = vector.shape_cast %361 : vector<8x1x16xf32> to vector<8x16xf32>
    %372 = arith.addf %371, %336 : vector<8x16xf32>
    %373 = arith.mulf %343, %336 : vector<8x16xf32>
    %cst_102 = arith.constant dense<0.000000e+00> : vector<16xf32>
    %374 = vector.multi_reduction <add>, %373, %cst_102 [0] : vector<8x16xf32> to vector<16xf32>
    %375 = vector.shape_cast %374 : vector<16xf32> to vector<1x16xf32>
    %376 = vector.shape_cast %291 : vector<8x16xf32> to vector<1x8x16xf32>
    %377 = vector.broadcast %9 : vector<8x8x1xf32> to vector<8x8x16xf32>
    %378 = vector.broadcast %376 : vector<1x8x16xf32> to vector<8x8x16xf32>
    %379 = arith.mulf %377, %378 : vector<8x8x16xf32>
    %cst_103 = arith.constant dense<0.000000e+00> : vector<8x16xf32>
    %380 = vector.multi_reduction <add>, %379, %cst_103 [1] : vector<8x8x16xf32> to vector<8x16xf32>
    %381 = arith.addf %333, %375 : vector<1x16xf32>
    %382 = arith.mulf %343, %380 : vector<8x16xf32>
    %cst_104 = arith.constant dense<0.000000e+00> : vector<16xf32>
    %383 = vector.multi_reduction <add>, %382, %cst_104 [0] : vector<8x16xf32> to vector<16xf32>
    %384 = vector.shape_cast %383 : vector<16xf32> to vector<1x16xf32>
    %385 = arith.addf %381, %384 : vector<1x16xf32>
    %c7_i32_105 = arith.constant 7 : i32
    %cst_106 = arith.constant dense<0xFF800000> : vector<16xf32>
    %386 = vector.multi_reduction <maximumf>, %355, %cst_106 [0] : vector<8x16xf32> to vector<16xf32>
    %387 = vector.shape_cast %386 : vector<16xf32> to vector<1x16xf32>
    %388 = vector.broadcast %387 : vector<1x16xf32> to vector<8x16xf32>
    %389 = arith.subf %355, %388 : vector<8x16xf32>
    %390 = math.exp %389 : vector<8x16xf32>
    %cst_107 = arith.constant dense<0.000000e+00> : vector<16xf32>
    %391 = vector.multi_reduction <add>, %390, %cst_107 [0] : vector<8x16xf32> to vector<16xf32>
    %392 = vector.shape_cast %391 : vector<16xf32> to vector<1x16xf32>
    %393 = math.log %392 : vector<1x16xf32>
    %394 = arith.addf %387, %393 : vector<1x16xf32>
    %395 = arith.subf %394, %385 : vector<1x16xf32>
    %c0_108 = arith.constant 0 : index
    %c0_109 = arith.constant 0 : index
    %396 = vector.load %arg7[%c0_108, %c0_109] : memref<1x16xf32, #tpu.memory_space<vmem>>, vector<1x16xf32>
    tpu.vector_store %arg7[%c0_108, %c0_109], %395 {strides = array<i32>} : memref<1x16xf32, #tpu.memory_space<vmem>>, vector<1x16xf32>,
    %cst_110 = arith.constant dense<0xFF800000> : vector<16xf32>
    %397 = vector.multi_reduction <maximumf>, %372, %cst_110 [0] : vector<8x16xf32> to vector<16xf32>
    %398 = vector.shape_cast %397 : vector<16xf32> to vector<1x16xf32>
    %c0_111 = arith.constant 0 : index
    %c0_112 = arith.constant 0 : index
    %399 = vector.load %arg6[%c0_111, %c0_112] : memref<1x16xf32, #tpu.memory_space<vmem>>, vector<1x16xf32>
    tpu.vector_store %arg6[%c0_111, %c0_112], %398 {strides = array<i32>} : memref<1x16xf32, #tpu.memory_space<vmem>>, vector<1x16xf32>,
    %400 = vector.broadcast %398 : vector<1x16xf32> to vector<8x16xf32>
    %401 = arith.cmpf oeq, %372, %400 : vector<8x16xf32>
    %c8_i32_113 = arith.constant 8 : i32
    %402 = vector.broadcast %c8_i32_113 : i32 to vector<8x16xi32>
    %403 = arith.select %401, %7, %402 : vector<8x16xi1>, vector<8x16xi32>
    %cst_114 = arith.constant dense<2147483647> : vector<16xi32>
    %404 = vector.multi_reduction <minsi>, %403, %cst_114 [0] : vector<8x16xi32> to vector<16xi32>
    %405 = vector.shape_cast %404 : vector<16xi32> to vector<1x16xi32>
    %c7 = arith.constant 7 : index
    %c0_115 = arith.constant 0 : index
    %c0_116 = arith.constant 0 : index
    %406 = vector.load %arg5[%c7, %c0_115, %c0_116] : memref<8x1x16xi32, #tpu.memory_space<vmem>>, vector<1x1x16xi32>
    %407 = vector.shape_cast %406 : vector<1x1x16xi32> to vector<1x16xi32>
    %408 = vector.shape_cast %405 : vector<1x16xi32> to vector<1x1x16xi32>
    tpu.vector_store %arg5[%c7, %c0_115, %c0_116], %408 {strides = array<i32>} : memref<8x1x16xi32, #tpu.memory_space<vmem>>, vector<1x1x16xi32>,
    %c0_i32 = arith.constant 0 : i32
    %c6_i32_117 = arith.constant 6 : i32
    %409 = arith.subi %c6_i32_117, %c0_i32 : i32
    %c1_i32_118 = arith.constant 1 : i32
    %410 = arith.addi %409, %c1_i32_118 : i32
    %411 = arith.index_cast %410 : i32 to index
    %c0_119 = arith.constant 0 : index
    %c0_120 = arith.constant 0 : index
    %412 = vector.load %arg8[%411, %c0_119, %c0_120] : memref<8x8x16xi32, #tpu.memory_space<vmem>>, vector<1x8x16xi32>
    %413 = vector.shape_cast %412 : vector<1x8x16xi32> to vector<8x16xi32>
    %414 = vector.broadcast %405 : vector<1x16xi32> to vector<8x16xi32>
    %415 = arith.cmpi eq, %7, %414 : vector<8x16xi32>
    %c0_i32_121 = arith.constant 0 : i32
    %416 = vector.broadcast %c0_i32_121 : i32 to vector<8x16xi32>
    %417 = arith.select %415, %413, %416 : vector<8x16xi1>, vector<8x16xi32>
    %cst_122 = arith.constant dense<0> : vector<16xi32>
    %418 = vector.multi_reduction <add>, %417, %cst_122 [0] : vector<8x16xi32> to vector<16xi32>
    %419 = vector.shape_cast %418 : vector<16xi32> to vector<1x16xi32>
    %420 = arith.index_cast %409 : i32 to index
    %c0_123 = arith.constant 0 : index
    %c0_124 = arith.constant 0 : index
    %421 = vector.load %arg5[%420, %c0_123, %c0_124] : memref<8x1x16xi32, #tpu.memory_space<vmem>>, vector<1x1x16xi32>
    %422 = vector.shape_cast %421 : vector<1x1x16xi32> to vector<1x16xi32>
    %423 = vector.shape_cast %419 : vector<1x16xi32> to vector<1x1x16xi32>
    tpu.vector_store %arg5[%420, %c0_123, %c0_124], %423 {strides = array<i32>} : memref<8x1x16xi32, #tpu.memory_space<vmem>>, vector<1x1x16xi32>,
    %c1_i32_125 = arith.constant 1 : i32
    %c6_i32_126 = arith.constant 6 : i32
    %424 = arith.subi %c6_i32_126, %c1_i32_125 : i32
    %c1_i32_127 = arith.constant 1 : i32
    %425 = arith.addi %424, %c1_i32_127 : i32
    %426 = arith.index_cast %425 : i32 to index
    %c0_128 = arith.constant 0 : index
    %c0_129 = arith.constant 0 : index
    %427 = vector.load %arg8[%426, %c0_128, %c0_129] : memref<8x8x16xi32, #tpu.memory_space<vmem>>, vector<1x8x16xi32>
    %428 = vector.shape_cast %427 : vector<1x8x16xi32> to vector<8x16xi32>
    %429 = vector.broadcast %419 : vector<1x16xi32> to vector<8x16xi32>
    %430 = arith.cmpi eq, %7, %429 : vector<8x16xi32>
    %c0_i32_130 = arith.constant 0 : i32
    %431 = vector.broadcast %c0_i32_130 : i32 to vector<8x16xi32>
    %432 = arith.select %430, %428, %431 : vector<8x16xi1>, vector<8x16xi32>
    %cst_131 = arith.constant dense<0> : vector<16xi32>
    %433 = vector.multi_reduction <add>, %432, %cst_131 [0] : vector<8x16xi32> to vector<16xi32>
    %434 = vector.shape_cast %433 : vector<16xi32> to vector<1x16xi32>
    %435 = arith.index_cast %424 : i32 to index
    %c0_132 = arith.constant 0 : index
    %c0_133 = arith.constant 0 : index
    %436 = vector.load %arg5[%435, %c0_132, %c0_133] : memref<8x1x16xi32, #tpu.memory_space<vmem>>, vector<1x1x16xi32>
    %437 = vector.shape_cast %436 : vector<1x1x16xi32> to vector<1x16xi32>
    %438 = vector.shape_cast %434 : vector<1x16xi32> to vector<1x1x16xi32>
    tpu.vector_store %arg5[%435, %c0_132, %c0_133], %438 {strides = array<i32>} : memref<8x1x16xi32, #tpu.memory_space<vmem>>, vector<1x1x16xi32>,
    %c2_i32_134 = arith.constant 2 : i32
    %c6_i32_135 = arith.constant 6 : i32
    %439 = arith.subi %c6_i32_135, %c2_i32_134 : i32
    %c1_i32_136 = arith.constant 1 : i32
    %440 = arith.addi %439, %c1_i32_136 : i32
    %441 = arith.index_cast %440 : i32 to index
    %c0_137 = arith.constant 0 : index
    %c0_138 = arith.constant 0 : index
    %442 = vector.load %arg8[%441, %c0_137, %c0_138] : memref<8x8x16xi32, #tpu.memory_space<vmem>>, vector<1x8x16xi32>
    %443 = vector.shape_cast %442 : vector<1x8x16xi32> to vector<8x16xi32>
    %444 = vector.broadcast %434 : vector<1x16xi32> to vector<8x16xi32>
    %445 = arith.cmpi eq, %7, %444 : vector<8x16xi32>
    %c0_i32_139 = arith.constant 0 : i32
    %446 = vector.broadcast %c0_i32_139 : i32 to vector<8x16xi32>
    %447 = arith.select %445, %443, %446 : vector<8x16xi1>, vector<8x16xi32>
    %cst_140 = arith.constant dense<0> : vector<16xi32>
    %448 = vector.multi_reduction <add>, %447, %cst_140 [0] : vector<8x16xi32> to vector<16xi32>
    %449 = vector.shape_cast %448 : vector<16xi32> to vector<1x16xi32>
    %450 = arith.index_cast %439 : i32 to index
    %c0_141 = arith.constant 0 : index
    %c0_142 = arith.constant 0 : index
    %451 = vector.load %arg5[%450, %c0_141, %c0_142] : memref<8x1x16xi32, #tpu.memory_space<vmem>>, vector<1x1x16xi32>
    %452 = vector.shape_cast %451 : vector<1x1x16xi32> to vector<1x16xi32>
    %453 = vector.shape_cast %449 : vector<1x16xi32> to vector<1x1x16xi32>
    tpu.vector_store %arg5[%450, %c0_141, %c0_142], %453 {strides = array<i32>} : memref<8x1x16xi32, #tpu.memory_space<vmem>>, vector<1x1x16xi32>,
    %c3_i32_143 = arith.constant 3 : i32
    %c6_i32_144 = arith.constant 6 : i32
    %454 = arith.subi %c6_i32_144, %c3_i32_143 : i32
    %c1_i32_145 = arith.constant 1 : i32
    %455 = arith.addi %454, %c1_i32_145 : i32
    %456 = arith.index_cast %455 : i32 to index
    %c0_146 = arith.constant 0 : index
    %c0_147 = arith.constant 0 : index
    %457 = vector.load %arg8[%456, %c0_146, %c0_147] : memref<8x8x16xi32, #tpu.memory_space<vmem>>, vector<1x8x16xi32>
    %458 = vector.shape_cast %457 : vector<1x8x16xi32> to vector<8x16xi32>
    %459 = vector.broadcast %449 : vector<1x16xi32> to vector<8x16xi32>
    %460 = arith.cmpi eq, %7, %459 : vector<8x16xi32>
    %c0_i32_148 = arith.constant 0 : i32
    %461 = vector.broadcast %c0_i32_148 : i32 to vector<8x16xi32>
    %462 = arith.select %460, %458, %461 : vector<8x16xi1>, vector<8x16xi32>
    %cst_149 = arith.constant dense<0> : vector<16xi32>
    %463 = vector.multi_reduction <add>, %462, %cst_149 [0] : vector<8x16xi32> to vector<16xi32>
    %464 = vector.shape_cast %463 : vector<16xi32> to vector<1x16xi32>
    %465 = arith.index_cast %454 : i32 to index
    %c0_150 = arith.constant 0 : index
    %c0_151 = arith.constant 0 : index
    %466 = vector.load %arg5[%465, %c0_150, %c0_151] : memref<8x1x16xi32, #tpu.memory_space<vmem>>, vector<1x1x16xi32>
    %467 = vector.shape_cast %466 : vector<1x1x16xi32> to vector<1x16xi32>
    %468 = vector.shape_cast %464 : vector<1x16xi32> to vector<1x1x16xi32>
    tpu.vector_store %arg5[%465, %c0_150, %c0_151], %468 {strides = array<i32>} : memref<8x1x16xi32, #tpu.memory_space<vmem>>, vector<1x1x16xi32>,
    %c4_i32_152 = arith.constant 4 : i32
    %c6_i32_153 = arith.constant 6 : i32
    %469 = arith.subi %c6_i32_153, %c4_i32_152 : i32
    %c1_i32_154 = arith.constant 1 : i32
    %470 = arith.addi %469, %c1_i32_154 : i32
    %471 = arith.index_cast %470 : i32 to index
    %c0_155 = arith.constant 0 : index
    %c0_156 = arith.constant 0 : index
    %472 = vector.load %arg8[%471, %c0_155, %c0_156] : memref<8x8x16xi32, #tpu.memory_space<vmem>>, vector<1x8x16xi32>
    %473 = vector.shape_cast %472 : vector<1x8x16xi32> to vector<8x16xi32>
    %474 = vector.broadcast %464 : vector<1x16xi32> to vector<8x16xi32>
    %475 = arith.cmpi eq, %7, %474 : vector<8x16xi32>
    %c0_i32_157 = arith.constant 0 : i32
    %476 = vector.broadcast %c0_i32_157 : i32 to vector<8x16xi32>
    %477 = arith.select %475, %473, %476 : vector<8x16xi1>, vector<8x16xi32>
    %cst_158 = arith.constant dense<0> : vector<16xi32>
    %478 = vector.multi_reduction <add>, %477, %cst_158 [0] : vector<8x16xi32> to vector<16xi32>
    %479 = vector.shape_cast %478 : vector<16xi32> to vector<1x16xi32>
    %480 = arith.index_cast %469 : i32 to index
    %c0_159 = arith.constant 0 : index
    %c0_160 = arith.constant 0 : index
    %481 = vector.load %arg5[%480, %c0_159, %c0_160] : memref<8x1x16xi32, #tpu.memory_space<vmem>>, vector<1x1x16xi32>
    %482 = vector.shape_cast %481 : vector<1x1x16xi32> to vector<1x16xi32>
    %483 = vector.shape_cast %479 : vector<1x16xi32> to vector<1x1x16xi32>
    tpu.vector_store %arg5[%480, %c0_159, %c0_160], %483 {strides = array<i32>} : memref<8x1x16xi32, #tpu.memory_space<vmem>>, vector<1x1x16xi32>,
    %c5_i32_161 = arith.constant 5 : i32
    %c6_i32_162 = arith.constant 6 : i32
    %484 = arith.subi %c6_i32_162, %c5_i32_161 : i32
    %c1_i32_163 = arith.constant 1 : i32
    %485 = arith.addi %484, %c1_i32_163 : i32
    %486 = arith.index_cast %485 : i32 to index
    %c0_164 = arith.constant 0 : index
    %c0_165 = arith.constant 0 : index
    %487 = vector.load %arg8[%486, %c0_164, %c0_165] : memref<8x8x16xi32, #tpu.memory_space<vmem>>, vector<1x8x16xi32>
    %488 = vector.shape_cast %487 : vector<1x8x16xi32> to vector<8x16xi32>
    %489 = vector.broadcast %479 : vector<1x16xi32> to vector<8x16xi32>
    %490 = arith.cmpi eq, %7, %489 : vector<8x16xi32>
    %c0_i32_166 = arith.constant 0 : i32
    %491 = vector.broadcast %c0_i32_166 : i32 to vector<8x16xi32>
    %492 = arith.select %490, %488, %491 : vector<8x16xi1>, vector<8x16xi32>
    %cst_167 = arith.constant dense<0> : vector<16xi32>
    %493 = vector.multi_reduction <add>, %492, %cst_167 [0] : vector<8x16xi32> to vector<16xi32>
    %494 = vector.shape_cast %493 : vector<16xi32> to vector<1x16xi32>
    %495 = arith.index_cast %484 : i32 to index
    %c0_168 = arith.constant 0 : index
    %c0_169 = arith.constant 0 : index
    %496 = vector.load %arg5[%495, %c0_168, %c0_169] : memref<8x1x16xi32, #tpu.memory_space<vmem>>, vector<1x1x16xi32>
    %497 = vector.shape_cast %496 : vector<1x1x16xi32> to vector<1x16xi32>
    %498 = vector.shape_cast %494 : vector<1x16xi32> to vector<1x1x16xi32>
    tpu.vector_store %arg5[%495, %c0_168, %c0_169], %498 {strides = array<i32>} : memref<8x1x16xi32, #tpu.memory_space<vmem>>, vector<1x1x16xi32>,
    %c6_i32_170 = arith.constant 6 : i32
    %c6_i32_171 = arith.constant 6 : i32
    %499 = arith.subi %c6_i32_171, %c6_i32_170 : i32
    %c1_i32_172 = arith.constant 1 : i32
    %500 = arith.addi %499, %c1_i32_172 : i32
    %501 = arith.index_cast %500 : i32 to index
    %c0_173 = arith.constant 0 : index
    %c0_174 = arith.constant 0 : index
    %502 = vector.load %arg8[%501, %c0_173, %c0_174] : memref<8x8x16xi32, #tpu.memory_space<vmem>>, vector<1x8x16xi32>
    %503 = vector.shape_cast %502 : vector<1x8x16xi32> to vector<8x16xi32>
    %504 = vector.broadcast %494 : vector<1x16xi32> to vector<8x16xi32>
    %505 = arith.cmpi eq, %7, %504 : vector<8x16xi32>
    %c0_i32_175 = arith.constant 0 : i32
    %506 = vector.broadcast %c0_i32_175 : i32 to vector<8x16xi32>
    %507 = arith.select %505, %503, %506 : vector<8x16xi1>, vector<8x16xi32>
    %cst_176 = arith.constant dense<0> : vector<16xi32>
    %508 = vector.multi_reduction <add>, %507, %cst_176 [0] : vector<8x16xi32> to vector<16xi32>
    %509 = vector.shape_cast %508 : vector<16xi32> to vector<1x16xi32>
    %510 = arith.index_cast %499 : i32 to index
    %c0_177 = arith.constant 0 : index
    %c0_178 = arith.constant 0 : index
    %511 = vector.load %arg5[%510, %c0_177, %c0_178] : memref<8x1x16xi32, #tpu.memory_space<vmem>>, vector<1x1x16xi32>
    %512 = vector.shape_cast %511 : vector<1x1x16xi32> to vector<1x16xi32>
    %513 = vector.shape_cast %509 : vector<1x16xi32> to vector<1x1x16xi32>
    tpu.vector_store %arg5[%510, %c0_177, %c0_178], %513 {strides = array<i32>} : memref<8x1x16xi32, #tpu.memory_space<vmem>>, vector<1x1x16xi32>,
    %c7_i32_179 = arith.constant 7 : i32
    return
  }
  func.func @transform_0(%arg0: i32, %arg1: memref<1xi32, #tpu.memory_space<smem>>) -> (i32, i32, i32) {
    %c0_i32 = arith.constant 0 : i32
    %c0_i32_0 = arith.constant 0 : i32
    %c0_i32_1 = arith.constant 0 : i32
    return %c0_i32, %c0_i32_0, %arg0 : i32, i32, i32
  }
  func.func @transform_1(%arg0: i32, %arg1: memref<1xi32, #tpu.memory_space<smem>>) -> (i32, i32, i32) {
    %c0_i32 = arith.constant 0 : i32
    %c0_i32_0 = arith.constant 0 : i32
    %c0_i32_1 = arith.constant 0 : i32
    return %c0_i32, %c0_i32_0, %arg0 : i32, i32, i32
  }
  func.func @transform_2(%arg0: i32, %arg1: memref<1xi32, #tpu.memory_space<smem>>) -> (i32, i32) {
    %c0_i32 = arith.constant 0 : i32
    %c0_i32_0 = arith.constant 0 : i32
    %c0_i32_1 = arith.constant 0 : i32
    return %c0_i32, %c0_i32_0 : i32, i32
  }
  func.func @transform_3(%arg0: i32, %arg1: memref<1xi32, #tpu.memory_space<smem>>) -> (i32, i32, i32) {
    %c0_i32 = arith.constant 0 : i32
    %c0_i32_0 = arith.constant 0 : i32
    %c0_i32_1 = arith.constant 0 : i32
    return %c0_i32, %c0_i32_0, %arg0 : i32, i32, i32
  }
  func.func @transform_4(%arg0: i32, %arg1: memref<1xi32, #tpu.memory_space<smem>>) -> (i32, i32) {
    %c0_i32 = arith.constant 0 : i32
    %c0_i32_0 = arith.constant 0 : i32
    return %c0_i32, %arg0 : i32, i32
  }
  func.func @transform_5(%arg0: i32, %arg1: memref<1xi32, #tpu.memory_space<smem>>) -> (i32, i32) {
    %c0_i32 = arith.constant 0 : i32
    %c0_i32_0 = arith.constant 0 : i32
    return %c0_i32, %arg0 : i32, i32
  }
}

</mosaic_0001>

<llo_original>
// kernel: tpu_custom_call.1
$region0: #{tpu_custom_call.1}
  #allocation0 [shape = 'u32[]', space=smem, size = 0x4, offset = 0x4, fixed_abs, tag = 'smem constant byte address 0x4 - core index']
  #allocation1 [shape = 'u32[144,128]{1,0:T(1,128)}', space=vmem, size = 0x12000, scoped, tag = 'internal scratch']
  #allocation2 [shape = 's32[8,8,16]{2,1,0:T(8,128)}', space=vmem, size = 0x8000, scoped, tag = 'scratch operand']
  #allocation3 [shape = 's32[1]{0}', space=sflag, size = 0x4, scoped, tag = 'scoped memory for tpu_custom_call.1']
  #allocation4 [shape = 's32[1]{0:T(128)S(6)}', space=smem, size = 0x200, scoped, tag = 'prefetched SMEM operand 0']
  %s0 = inlined_call_operand.<no memory space> [shape: s32[1], index: 0, kind: input, shape index: {}]
  %s1 = inlined_call_operand.hbm [shape: f32[8,8,16], index: 1, kind: input, shape index: {}]
  %s2 = inlined_call_operand.hbm [shape: s32[8,1,16], index: 2, kind: input, shape index: {}]
  %s3 = inlined_call_operand.hbm [shape: f32[8,8], index: 3, kind: input, shape index: {}]
  %s4 = inlined_call_operand.hbm [shape: s32[8,1,16], index: 4, kind: output, shape index: {0}]
  %s5 = inlined_call_operand.hbm [shape: f32[1,16], index: 5, kind: output, shape index: {1}]
  %s6 = inlined_call_operand.hbm [shape: f32[1,16], index: 6, kind: output, shape index: {2}]
  %7 = xla_tuple %s4, %s5, %s6
  %s8 = sld [smem:[#allocation0]]
  $region50: #{tpu_custom_call.1} parent=0
    _
  %s10 = ssub.s32 1, %s8
  %s11 = scalar_select 0, %s10, %s8
  %12 = sst [smem:[#allocation4]] %s0
  $region1: #{tpu_custom_call.1} parent=0
    #allocation5 [shape = 'u8[32768]{0}', space=vmem, size = 0x8000, scoped, tag = 'input window, operand 1, single buffered']
    #allocation6 [shape = 's32[1]{0}', space=sflag, size = 0x4, scoped, tag = 'scoped memory for tpu_custom_call.1']
    #allocation7 [shape = 's32[1]{0}', space=sflag, size = 0x4, scoped, tag = 'scoped memory for tpu_custom_call.1']
    #allocation8 [shape = 'u8[4096]{0}', space=vmem, size = 0x1000, scoped, tag = 'input window, operand 2, single buffered']
    #allocation9 [shape = 's32[1]{0}', space=sflag, size = 0x4, scoped, tag = 'scoped memory for tpu_custom_call.1']
    #allocation10 [shape = 'u8[4096]{0}', space=vmem, size = 0x1000, scoped, tag = 'input window, operand 3, single buffered']
    #allocation11 [shape = 'u8[4096]{0}', space=vmem, size = 0x1000, scoped, tag = 'output window, operand 0, single buffered']
    #allocation12 [shape = 'u8[512]{0}', space=vmem, size = 0x400, scoped, tag = 'output window, operand 1, single buffered']
    #allocation13 [shape = 's32[1]{0}', space=sflag, size = 0x4, scoped, tag = 'scoped memory for tpu_custom_call.1']
    #allocation14 [shape = 'u8[512]{0}', space=vmem, size = 0x400, scoped, tag = 'output window, operand 2, single buffered']
    %13 = vsyncpa [#allocation6], 0
    %14 = vsyncpa [#allocation9], 0
    %15 = vsyncpa [#allocation7], 0
    %16 = vsyncpa [#allocation13], 0
    // Predicated region
    $region2: #{tpu_custom_call.1} parent=1 // pred_check
      _
    $region3: #{tpu_custom_call.1} parent=1 // pred_check_branch
      %18 = sbr.rel (0) target = $region5
    $region4: #{tpu_custom_call.1} parent=1 // pred_region
      %s20 = ssub.s32 1024, 1024
      %21 = vsyncadd [#allocation6], %s20
      %s22 = sshll.u32 [#allocation5], 4
      %s23 = int_to_ptr.vmem [resolvable:$true] %s22
      %28 = dma.hbm_to_vmem [thread:$0]  %s1, 1024, %s23, [#allocation6], 128, 128, 8
    $region5: #{tpu_custom_call.1} parent=1 // pred_fallthru
      _
    // Predicated region
    $region6: #{tpu_custom_call.1} parent=1 // pred_check
      _
    $region7: #{tpu_custom_call.1} parent=1 // pred_check_branch
      %30 = sbr.rel (0) target = $region9
    $region8: #{tpu_custom_call.1} parent=1 // pred_region
      %s32 = ssub.s32 128, 128
      %33 = vsyncadd [#allocation9], %s32
      %s34 = sshll.u32 [#allocation8], 4
      %s35 = int_to_ptr.vmem [resolvable:$true] %s34
      %40 = dma.hbm_to_vmem [thread:$0]  %s2, 128, %s35, [#allocation9], 16, 16, 1
    $region9: #{tpu_custom_call.1} parent=1 // pred_fallthru
      _
    // Predicated region
    $region10: #{tpu_custom_call.1} parent=1 // pred_check
      _
    $region11: #{tpu_custom_call.1} parent=1 // pred_check_branch
      %42 = sbr.rel (0) target = $region13
    $region12: #{tpu_custom_call.1} parent=1 // pred_region
      %s44 = ssub.s32 128, 128
      %45 = vsyncadd [#allocation9], %s44
      %s47 = sshll.u32 [#allocation10], 4
      %s48 = int_to_ptr.vmem [resolvable:$true] %s47
      %50 = dma.hbm_to_vmem [thread:$0]  %s3, 128, %s48, [#allocation9]
    $region13: #{tpu_custom_call.1} parent=1 // pred_fallthru
      _
    // Predicated region
    $region14: #{tpu_custom_call.1} parent=1 // pred_check
      _
    $region15: #{tpu_custom_call.1} parent=1 // pred_check_branch
      %52 = sbr.rel (0) target = $region17
    $region16: #{tpu_custom_call.1} parent=1 // pred_region
      %53 = dma.done [#allocation6], 1024
    $region17: #{tpu_custom_call.1} parent=1 // pred_fallthru
      _
    // Predicated region
    $region18: #{tpu_custom_call.1} parent=1 // pred_check
      _
    $region19: #{tpu_custom_call.1} parent=1 // pred_check_branch
      %55 = sbr.rel (0) target = $region21
    $region20: #{tpu_custom_call.1} parent=1 // pred_region
      %56 = dma.done [#allocation9], 128
    $region21: #{tpu_custom_call.1} parent=1 // pred_fallthru
      _
    // Predicated region
    $region22: #{tpu_custom_call.1} parent=1 // pred_check
      _
    $region23: #{tpu_custom_call.1} parent=1 // pred_check_branch
      %58 = sbr.rel (0) target = $region25
    $region24: #{tpu_custom_call.1} parent=1 // pred_region
      %59 = dma.done [#allocation9], 128
    $region25: #{tpu_custom_call.1} parent=1 // pred_fallthru
      _
    %s60 = sld [smem:[#allocation4]]
    %v61 = vld [vmem:[#allocation10] sm:$0xff]
    %vm62 = vcmask 64512
    %v63 = vsel %vm62, %v61, -inf
    %64 = vmax.xlane.f32.xlu0 %v63
    %v65 = vpop.xlane.xlu0 %64
    %v66 = vsub.f32 %v61, %v65
    %v67 = vmul.f32 %v66, 1.442695
    %v68 = vpow.pop %v67
    %v69 = vlaneseq
    %v70 = vshrl.u32 %v69, 7
    %v71 = vlaneseq
    %v72 = vshrl.u32 %v71, 7
    %v73 = vsub.s32 0, %v72
    %v74 = vrot.slane %v61, %v73
    %76 = vbcast.lane.b32.xlu0 %v74, 256
    %v77 = vpop.permute.xlu0 %76
    %v78 = vlaneseq
    %v79 = vshrl.u32 %v78, 7
    %v80 = vsub.s32 1, %v79
    %v81 = vrot.slane %v61, %v80
    %83 = vbcast.lane.b32.xlu0 %v81, 256
    %v84 = vpop.permute.xlu0 %83
    %v85 = vlaneseq
    %v86 = vshrl.u32 %v85, 7
    %v87 = vsub.s32 2, %v86
    %v88 = vrot.slane %v61, %v87
    %90 = vbcast.lane.b32.xlu0 %v88, 256
    %v91 = vpop.permute.xlu0 %90
    %v92 = vlaneseq
    %v93 = vshrl.u32 %v92, 7
    %v94 = vsub.s32 3, %v93
    %v95 = vrot.slane %v61, %v94
    %97 = vbcast.lane.b32.xlu0 %v95, 256
    %v98 = vpop.permute.xlu0 %97
    %v99 = vlaneseq
    %v100 = vshrl.u32 %v99, 7
    %v101 = vsub.s32 4, %v100
    %v102 = vrot.slane %v61, %v101
    %104 = vbcast.lane.b32.xlu0 %v102, 256
    %v105 = vpop.permute.xlu0 %104
    %v106 = vlaneseq
    %v107 = vshrl.u32 %v106, 7
    %v108 = vsub.s32 5, %v107
    %v109 = vrot.slane %v61, %v108
    %111 = vbcast.lane.b32.xlu0 %v109, 256
    %v112 = vpop.permute.xlu0 %111
    %v113 = vlaneseq
    %v114 = vshrl.u32 %v113, 7
    %v115 = vsub.s32 6, %v114
    %v116 = vrot.slane %v61, %v115
    %118 = vbcast.lane.b32.xlu0 %v116, 256
    %v119 = vpop.permute.xlu0 %118
    %v120 = vlaneseq
    %v121 = vshrl.u32 %v120, 7
    %v122 = vsub.s32 7, %v121
    %v123 = vrot.slane %v61, %v122
    %125 = vbcast.lane.b32.xlu0 %v123, 256
    %v126 = vpop.permute.xlu0 %125
    %v127 = vstv %s60
    %vm128 = vcmp.eq.s32.totalorder %v70, %v127
    %v129 = vsel %vm128, 0.0, -10000.0
    %v130 = vld [vmem:[#allocation8] sm:$0x1]
    %v131 = vlaneseq
    %v132 = vshrl.u32 %v131, 7
    %v133 = vsub.s32 0, %v132
    %v134 = vrot.slane %v130, %v133
    %vm135 = vcmp.eq.s32.totalorder %v70, %v134
    %v136 = vsel %vm135, 1, 0
    %v137 = vcvt.s32.f32 %v136
    %s138 = scalar_lea.vmem [#allocation5], 8
    %v139 = vld [vmem:[%s138] sm:$0xff]
    %s140 = scalar_lea.vmem [#allocation8], 1
    %v141 = vld [vmem:[%s140] sm:$0x1]
    %v142 = vlaneseq
    %v143 = vshrl.u32 %v142, 7
    %v144 = vsub.s32 0, %v143
    %v145 = vrot.slane %v141, %v144
    %vm146 = vcmp.eq.s32.totalorder %v70, %v145
    %v147 = vsel %vm146, 1, 0
    %v148 = vcvt.s32.f32 %v147
    %v149 = vrot.slane %v129, 4
    %v150 = vmax.f32 %v129, %v149
    %v151 = vrot.slane %v150, 2
    %v152 = vmax.f32 %v150, %v151
    %v153 = vrot.slane %v152, 1
    %v154 = vmax.f32 %v152, %v153
    %v155 = vsub.f32 %v129, %v154
    %v156 = vmul.f32 %v155, 1.442695
    %v157 = vpow.pop %v156
    %v159 = vsel %vm62, %v68, 0
    %161 = vmatprep.subr.mxu0 0.0
    %162 = vmatpush1.msra.mxu0 0.0
    %163 = vmatprep.subr.mxu0 0.0
    %164 = vmatpush1.msra.mxu0 0.0
    %165 = vmatprep.subr.mxu0 0.0
    %166 = vmatpush1.msra.mxu0 0.0
    %167 = vmatprep.subr.mxu0 0.0
    %168 = vmatpush1.msra.mxu0 0.0
    %169 = vmatprep.subr.mxu0 0.0
    %170 = vmatpush1.msra.mxu0 0.0
    %171 = vmatprep.subr.mxu0 0.0
    %172 = vmatpush1.msra.mxu0 0.0
    %173 = vmatprep.subr.mxu0 0.0
    %174 = vmatpush1.msra.mxu0 0.0
    %175 = vmatprep.subr.mxu0 0.0
    %176 = vmatpush1.msra.mxu0 0.0
    %177 = vmatprep.subr.mxu0 0.0
    %178 = vmatpush1.msra.mxu0 0.0
    %179 = vmatprep.subr.mxu0 0.0
    %180 = vmatpush1.msra.mxu0 0.0
    %181 = vmatprep.subr.mxu0 0.0
    %182 = vmatpush1.msra.mxu0 0.0
    %183 = vmatprep.subr.mxu0 0.0
    %184 = vmatpush1.msra.mxu0 0.0
    %185 = vmatprep.subr.mxu0 0.0
    %186 = vmatpush1.msra.mxu0 0.0
    %187 = vmatprep.subr.mxu0 0.0
    %188 = vmatpush1.msra.mxu0 0.0
    %189 = vmatprep.subr.mxu0 0.0
    %190 = vmatpush1.msra.mxu0 0.0
    %191 = vmatprep.subr.mxu0 0.0
    %192 = vmatpush1.msra.mxu0 %v157
    %193 = vmatprep.subr.mxu0 0.0
    %194 = vmatpush2.msra.mxu0 0.0
    %195 = vmatprep.subr.mxu0 0.0
    %196 = vmatpush2.msra.mxu0 0.0
    %197 = vmatprep.subr.mxu0 0.0
    %198 = vmatpush2.msra.mxu0 0.0
    %199 = vmatprep.subr.mxu0 0.0
    %200 = vmatpush2.msra.mxu0 0.0
    %201 = vmatprep.subr.mxu0 0.0
    %202 = vmatpush2.msra.mxu0 0.0
    %203 = vmatprep.subr.mxu0 0.0
    %204 = vmatpush2.msra.mxu0 0.0
    %205 = vmatprep.subr.mxu0 0.0
    %206 = vmatpush2.msra.mxu0 0.0
    %207 = vmatprep.subr.mxu0 0.0
    %208 = vmatpush2.msra.mxu0 0.0
    %209 = vmatprep.subr.mxu0 0.0
    %210 = vmatpush2.msra.mxu0 0.0
    %211 = vmatprep.subr.mxu0 0.0
    %212 = vmatpush2.msra.mxu0 0.0
    %213 = vmatprep.subr.mxu0 0.0
    %214 = vmatpush2.msra.mxu0 0.0
    %215 = vmatprep.subr.mxu0 0.0
    %216 = vmatpush2.msra.mxu0 0.0
    %217 = vmatprep.subr.mxu0 0.0
    %218 = vmatpush2.msra.mxu0 0.0
    %219 = vmatprep.subr.mxu0 0.0
    %220 = vmatpush2.msra.mxu0 0.0
    %221 = vmatprep.subr.mxu0 0.0
    %222 = vmatpush2.msra.mxu0 0.0
    %223 = vmatprep.subr.mxu0 0.0
    %224 = vmatpush2.msra.mxu0 0.0
    %225 = vmatprep.mubr.f32.mxu0 0.0
    %226 = vmatmul.mubr.f32.gmra.mxu0 %v159
    %v227 = vpop.f32.mrf.mxu0
    %v228 = vadd.f32 0.0, %v227
    %v229 = vpop.f32.mrf.mxu0
    %230 = vdwg.mxu0
    %v231 = vlog2.pop %v228
    %v232 = vmul.f32 %v231, 0.6931472
    %v233 = vadd.f32 %v232, %v65
    %v234 = vadd.f32 %v233, %v154
    %v235 = vadd.f32 %v234, %v139
    %v236 = vadd.f32 %v77, %v129
    %v237 = vadd.f32 %v84, %v129
    %v238 = vadd.f32 %v91, %v129
    %v239 = vadd.f32 %v98, %v129
    %v240 = vadd.f32 %v105, %v129
    %v241 = vadd.f32 %v112, %v129
    %v242 = vadd.f32 %v119, %v129
    %v243 = vadd.f32 %v126, %v129
    %v244 = vrot.slane %v236, 4
    %v245 = vmax.f32 %v236, %v244
    %v246 = vrot.slane %v245, 2
    %v247 = vmax.f32 %v245, %v246
    %v248 = vrot.slane %v247, 1
    %v249 = vmax.f32 %v247, %v248
    %v250 = vrot.slane %v237, 4
    %v251 = vmax.f32 %v237, %v250
    %v252 = vrot.slane %v251, 2
    %v253 = vmax.f32 %v251, %v252
    %v254 = vrot.slane %v253, 1
    %v255 = vmax.f32 %v253, %v254
    %v256 = vrot.slane %v238, 4
    %v257 = vmax.f32 %v238, %v256
    %v258 = vrot.slane %v257, 2
    %v259 = vmax.f32 %v257, %v258
    %v260 = vrot.slane %v259, 1
    %v261 = vmax.f32 %v259, %v260
    %v262 = vrot.slane %v239, 4
    %v263 = vmax.f32 %v239, %v262
    %v264 = vrot.slane %v263, 2
    %v265 = vmax.f32 %v263, %v264
    %v266 = vrot.slane %v265, 1
    %v267 = vmax.f32 %v265, %v266
    %v268 = vrot.slane %v240, 4
    %v269 = vmax.f32 %v240, %v268
    %v270 = vrot.slane %v269, 2
    %v271 = vmax.f32 %v269, %v270
    %v272 = vrot.slane %v271, 1
    %v273 = vmax.f32 %v271, %v272
    %v274 = vrot.slane %v241, 4
    %v275 = vmax.f32 %v241, %v274
    %v276 = vrot.slane %v275, 2
    %v277 = vmax.f32 %v275, %v276
    %v278 = vrot.slane %v277, 1
    %v279 = vmax.f32 %v277, %v278
    %v280 = vrot.slane %v242, 4
    %v281 = vmax.f32 %v242, %v280
    %v282 = vrot.slane %v281, 2
    %v283 = vmax.f32 %v281, %v282
    %v284 = vrot.slane %v283, 1
    %v285 = vmax.f32 %v283, %v284
    %v286 = vrot.slane %v243, 4
    %v287 = vmax.f32 %v243, %v286
    %v288 = vrot.slane %v287, 2
    %v289 = vmax.f32 %v287, %v288
    %v290 = vrot.slane %v289, 1
    %v291 = vmax.f32 %v289, %v290
    %vm292 = vcmp.eq.f32.partialorder %v236, %v249
    %vm293 = vcmp.eq.f32.partialorder %v237, %v255
    %vm294 = vcmp.eq.f32.partialorder %v238, %v261
    %vm295 = vcmp.eq.f32.partialorder %v239, %v267
    %vm296 = vcmp.eq.f32.partialorder %v240, %v273
    %vm297 = vcmp.eq.f32.partialorder %v241, %v279
    %vm298 = vcmp.eq.f32.partialorder %v242, %v285
    %vm299 = vcmp.eq.f32.partialorder %v243, %v291
    %v300 = vsel %vm292, %v70, 8
    %v301 = vsel %vm293, %v70, 8
    %v302 = vsel %vm294, %v70, 8
    %v303 = vsel %vm295, %v70, 8
    %v304 = vsel %vm296, %v70, 8
    %v305 = vsel %vm297, %v70, 8
    %v306 = vsel %vm298, %v70, 8
    %v307 = vsel %vm299, %v70, 8
    %v308 = vrot.slane %v300, 4
    %vm309 = vcmp.lt.s32.totalorder %v300, %v308
    %v310 = vsel %vm309, %v300, %v308
    %v311 = vrot.slane %v310, 2
    %vm312 = vcmp.lt.s32.totalorder %v310, %v311
    %v313 = vsel %vm312, %v310, %v311
    %v314 = vrot.slane %v313, 1
    %vm315 = vcmp.lt.s32.totalorder %v313, %v314
    %v316 = vsel %vm315, %v313, %v314
    %v317 = vrot.slane %v301, 4
    %vm318 = vcmp.lt.s32.totalorder %v301, %v317
    %v319 = vsel %vm318, %v301, %v317
    %v320 = vrot.slane %v319, 2
    %vm321 = vcmp.lt.s32.totalorder %v319, %v320
    %v322 = vsel %vm321, %v319, %v320
    %v323 = vrot.slane %v322, 1
    %vm324 = vcmp.lt.s32.totalorder %v322, %v323
    %v325 = vsel %vm324, %v322, %v323
    %v326 = vrot.slane %v302, 4
    %vm327 = vcmp.lt.s32.totalorder %v302, %v326
    %v328 = vsel %vm327, %v302, %v326
    %v329 = vrot.slane %v328, 2
    %vm330 = vcmp.lt.s32.totalorder %v328, %v329
    %v331 = vsel %vm330, %v328, %v329
    %v332 = vrot.slane %v331, 1
    %vm333 = vcmp.lt.s32.totalorder %v331, %v332
    %v334 = vsel %vm333, %v331, %v332
    %v335 = vrot.slane %v303, 4
    %vm336 = vcmp.lt.s32.totalorder %v303, %v335
    %v337 = vsel %vm336, %v303, %v335
    %v338 = vrot.slane %v337, 2
    %vm339 = vcmp.lt.s32.totalorder %v337, %v338
    %v340 = vsel %vm339, %v337, %v338
    %v341 = vrot.slane %v340, 1
    %vm342 = vcmp.lt.s32.totalorder %v340, %v341
    %v343 = vsel %vm342, %v340, %v341
    %v344 = vrot.slane %v304, 4
    %vm345 = vcmp.lt.s32.totalorder %v304, %v344
    %v346 = vsel %vm345, %v304, %v344
    %v347 = vrot.slane %v346, 2
    %vm348 = vcmp.lt.s32.totalorder %v346, %v347
    %v349 = vsel %vm348, %v346, %v347
    %v350 = vrot.slane %v349, 1
    %vm351 = vcmp.lt.s32.totalorder %v349, %v350
    %v352 = vsel %vm351, %v349, %v350
    %v353 = vrot.slane %v305, 4
    %vm354 = vcmp.lt.s32.totalorder %v305, %v353
    %v355 = vsel %vm354, %v305, %v353
    %v356 = vrot.slane %v355, 2
    %vm357 = vcmp.lt.s32.totalorder %v355, %v356
    %v358 = vsel %vm357, %v355, %v356
    %v359 = vrot.slane %v358, 1
    %vm360 = vcmp.lt.s32.totalorder %v358, %v359
    %v361 = vsel %vm360, %v358, %v359
    %v362 = vrot.slane %v306, 4
    %vm363 = vcmp.lt.s32.totalorder %v306, %v362
    %v364 = vsel %vm363, %v306, %v362
    %v365 = vrot.slane %v364, 2
    %vm366 = vcmp.lt.s32.totalorder %v364, %v365
    %v367 = vsel %vm366, %v364, %v365
    %v368 = vrot.slane %v367, 1
    %vm369 = vcmp.lt.s32.totalorder %v367, %v368
    %v370 = vsel %vm369, %v367, %v368
    %v371 = vrot.slane %v307, 4
    %vm372 = vcmp.lt.s32.totalorder %v307, %v371
    %v373 = vsel %vm372, %v307, %v371
    %v374 = vrot.slane %v373, 2
    %vm375 = vcmp.lt.s32.totalorder %v373, %v374
    %v376 = vsel %vm375, %v373, %v374
    %v377 = vrot.slane %v376, 1
    %vm378 = vcmp.lt.s32.totalorder %v376, %v377
    %v379 = vsel %vm378, %v376, %v377
    %vm380 = vcmask 1041409
    %v381 = vsel %vm380, %v325, %v316
    %vm382 = vcmask 1042434
    %v383 = vsel %vm382, %v334, %v381
    %vm384 = vcmask 1043459
    %v385 = vsel %vm384, %v343, %v383
    %vm386 = vcmask 1044484
    %v387 = vsel %vm386, %v352, %v385
    %vm388 = vcmask 1045509
    %v389 = vsel %vm388, %v361, %v387
    %vm390 = vcmask 1046534
    %v391 = vsel %vm390, %v370, %v389
    %vm392 = vcmask 1047559
    %v393 = vsel %vm392, %v379, %v391
    %s394 = scalar_lea.vmem [#allocation2], 8
    %vm395 = vcmask 130048
    %396 = vst.msk [vmem:[%s394] sm:$0xff] %vm395, %v393
    %v398 = vrot.slane %v139, 1
    %v399 = vrot.slane %v139, 2
    %v400 = vrot.slane %v139, 3
    %v401 = vrot.slane %v139, 4
    %v402 = vrot.slane %v139, 5
    %v403 = vrot.slane %v139, 6
    %v404 = vrot.slane %v139, 7
    %v413 = vadd.f32 %v249, %v139
    %v414 = vadd.f32 %v255, %v398
    %v415 = vadd.f32 %v261, %v399
    %v416 = vadd.f32 %v267, %v400
    %v417 = vadd.f32 %v273, %v401
    %v418 = vadd.f32 %v279, %v402
    %v419 = vadd.f32 %v285, %v403
    %v420 = vadd.f32 %v291, %v404
    %v421 = vmul.f32 %v148, %v139
    %v422 = vsel %vm395, %v421, 0.0
    %v423 = vrot.slane %v422, 4
    %v424 = vadd.f32 %v422, %v423
    %v425 = vrot.slane %v424, 2
    %v426 = vadd.f32 %v424, %v425
    %v427 = vrot.slane %v426, 1
    %v428 = vadd.f32 %v426, %v427
    %v429 = vmul.f32 %v77, %v137
    %v430 = vmul.f32 %v84, %v137
    %v431 = vmul.f32 %v91, %v137
    %v432 = vmul.f32 %v98, %v137
    %v433 = vmul.f32 %v105, %v137
    %v434 = vmul.f32 %v112, %v137
    %v435 = vmul.f32 %v119, %v137
    %v436 = vmul.f32 %v126, %v137
    %v437 = vsel %vm395, %v429, 0.0
    %v438 = vrot.slane %v437, 4
    %v439 = vadd.f32 %v437, %v438
    %v440 = vrot.slane %v439, 2
    %v441 = vadd.f32 %v439, %v440
    %v442 = vrot.slane %v441, 1
    %v443 = vadd.f32 %v441, %v442
    %v444 = vsel %vm395, %v430, 0.0
    %v445 = vrot.slane %v444, 4
    %v446 = vadd.f32 %v444, %v445
    %v447 = vrot.slane %v446, 2
    %v448 = vadd.f32 %v446, %v447
    %v449 = vrot.slane %v448, 1
    %v450 = vadd.f32 %v448, %v449
    %v451 = vsel %vm395, %v431, 0.0
    %v452 = vrot.slane %v451, 4
    %v453 = vadd.f32 %v451, %v452
    %v454 = vrot.slane %v453, 2
    %v455 = vadd.f32 %v453, %v454
    %v456 = vrot.slane %v455, 1
    %v457 = vadd.f32 %v455, %v456
    %v458 = vsel %vm395, %v432, 0.0
    %v459 = vrot.slane %v458, 4
    %v460 = vadd.f32 %v458, %v459
    %v461 = vrot.slane %v460, 2
    %v462 = vadd.f32 %v460, %v461
    %v463 = vrot.slane %v462, 1
    %v464 = vadd.f32 %v462, %v463
    %v465 = vsel %vm395, %v433, 0.0
    %v466 = vrot.slane %v465, 4
    %v467 = vadd.f32 %v465, %v466
    %v468 = vrot.slane %v467, 2
    %v469 = vadd.f32 %v467, %v468
    %v470 = vrot.slane %v469, 1
    %v471 = vadd.f32 %v469, %v470
    %v472 = vsel %vm395, %v434, 0.0
    %v473 = vrot.slane %v472, 4
    %v474 = vadd.f32 %v472, %v473
    %v475 = vrot.slane %v474, 2
    %v476 = vadd.f32 %v474, %v475
    %v477 = vrot.slane %v476, 1
    %v478 = vadd.f32 %v476, %v477
    %v479 = vsel %vm395, %v435, 0.0
    %v480 = vrot.slane %v479, 4
    %v481 = vadd.f32 %v479, %v480
    %v482 = vrot.slane %v481, 2
    %v483 = vadd.f32 %v481, %v482
    %v484 = vrot.slane %v483, 1
    %v485 = vadd.f32 %v483, %v484
    %v486 = vsel %vm395, %v436, 0.0
    %v487 = vrot.slane %v486, 4
    %v488 = vadd.f32 %v486, %v487
    %v489 = vrot.slane %v488, 2
    %v490 = vadd.f32 %v488, %v489
    %v491 = vrot.slane %v490, 1
    %v492 = vadd.f32 %v490, %v491
    %v493 = vadd.f32 %v428, 0.0
    %v502 = vsel %vm380, %v450, %v443
    %v503 = vsel %vm382, %v457, %v502
    %v504 = vsel %vm384, %v464, %v503
    %v505 = vsel %vm386, %v471, %v504
    %v506 = vsel %vm388, %v478, %v505
    %v507 = vsel %vm390, %v485, %v506
    %v508 = vsel %vm392, %v492, %v507
    %v510 = vmul.f32 %v148, %v508
    %v511 = vsel %vm395, %v510, 0.0
    %v512 = vrot.slane %v511, 4
    %v513 = vadd.f32 %v511, %v512
    %v514 = vrot.slane %v513, 2
    %v515 = vadd.f32 %v513, %v514
    %v516 = vrot.slane %v515, 1
    %v517 = vadd.f32 %v515, %v516
    %v518 = vadd.f32 %v493, %v517
    %s519 = scalar_lea.vmem [#allocation5], 16
    %v520 = vld [vmem:[%s519] sm:$0xff]
    %s521 = scalar_lea.vmem [#allocation8], 2
    %v522 = vld [vmem:[%s521] sm:$0x1]
    %v523 = vlaneseq
    %v524 = vshrl.u32 %v523, 7
    %v525 = vsub.s32 0, %v524
    %v526 = vrot.slane %v522, %v525
    %vm527 = vcmp.eq.s32.totalorder %v70, %v526
    %v528 = vsel %vm527, 1, 0
    %v529 = vcvt.s32.f32 %v528
    %v530 = vsel %vm395, %v235, -inf
    %v531 = vrot.slane %v530, 4
    %v532 = vmax.f32 %v530, %v531
    %v533 = vrot.slane %v532, 2
    %v534 = vmax.f32 %v532, %v533
    %v535 = vrot.slane %v534, 1
    %v536 = vmax.f32 %v534, %v535
    %v537 = vsub.f32 %v235, %v536
    %v538 = vmul.f32 %v537, 1.442695
    %v539 = vpow.pop %v538
    %540 = vmatprep.subr.mxu0 0.0
    %541 = vmatpush1.msra.mxu0 0.0
    %542 = vmatprep.subr.mxu0 0.0
    %543 = vmatpush1.msra.mxu0 0.0
    %544 = vmatprep.subr.mxu0 0.0
    %545 = vmatpush1.msra.mxu0 0.0
    %546 = vmatprep.subr.mxu0 0.0
    %547 = vmatpush1.msra.mxu0 0.0
    %548 = vmatprep.subr.mxu0 0.0
    %549 = vmatpush1.msra.mxu0 0.0
    %550 = vmatprep.subr.mxu0 0.0
    %551 = vmatpush1.msra.mxu0 0.0
    %552 = vmatprep.subr.mxu0 0.0
    %553 = vmatpush1.msra.mxu0 0.0
    %554 = vmatprep.subr.mxu0 0.0
    %555 = vmatpush1.msra.mxu0 0.0
    %556 = vmatprep.subr.mxu0 0.0
    %557 = vmatpush1.msra.mxu0 0.0
    %558 = vmatprep.subr.mxu0 0.0
    %559 = vmatpush1.msra.mxu0 0.0
    %560 = vmatprep.subr.mxu0 0.0
    %561 = vmatpush1.msra.mxu0 0.0
    %562 = vmatprep.subr.mxu0 0.0
    %563 = vmatpush1.msra.mxu0 0.0
    %564 = vmatprep.subr.mxu0 0.0
    %565 = vmatpush1.msra.mxu0 0.0
    %566 = vmatprep.subr.mxu0 0.0
    %567 = vmatpush1.msra.mxu0 0.0
    %568 = vmatprep.subr.mxu0 0.0
    %569 = vmatpush1.msra.mxu0 0.0
    %570 = vmatprep.subr.mxu0 0.0
    %571 = vmatpush1.msra.mxu0 %v539
    %572 = vmatprep.subr.mxu0 0.0
    %573 = vmatpush2.msra.mxu0 0.0
    %574 = vmatprep.subr.mxu0 0.0
    %575 = vmatpush2.msra.mxu0 0.0
    %576 = vmatprep.subr.mxu0 0.0
    %577 = vmatpush2.msra.mxu0 0.0
    %578 = vmatprep.subr.mxu0 0.0
    %579 = vmatpush2.msra.mxu0 0.0
    %580 = vmatprep.subr.mxu0 0.0
    %581 = vmatpush2.msra.mxu0 0.0
    %582 = vmatprep.subr.mxu0 0.0
    %583 = vmatpush2.msra.mxu0 0.0
    %584 = vmatprep.subr.mxu0 0.0
    %585 = vmatpush2.msra.mxu0 0.0
    %586 = vmatprep.subr.mxu0 0.0
    %587 = vmatpush2.msra.mxu0 0.0
    %588 = vmatprep.subr.mxu0 0.0
    %589 = vmatpush2.msra.mxu0 0.0
    %590 = vmatprep.subr.mxu0 0.0
    %591 = vmatpush2.msra.mxu0 0.0
    %592 = vmatprep.subr.mxu0 0.0
    %593 = vmatpush2.msra.mxu0 0.0
    %594 = vmatprep.subr.mxu0 0.0
    %595 = vmatpush2.msra.mxu0 0.0
    %596 = vmatprep.subr.mxu0 0.0
    %597 = vmatpush2.msra.mxu0 0.0
    %598 = vmatprep.subr.mxu0 0.0
    %599 = vmatpush2.msra.mxu0 0.0
    %600 = vmatprep.subr.mxu0 0.0
    %601 = vmatpush2.msra.mxu0 0.0
    %602 = vmatprep.subr.mxu0 0.0
    %603 = vmatpush2.msra.mxu0 0.0
    %604 = vmatprep.mubr.f32.mxu0 0.0
    %605 = vmatmul.mubr.f32.gmra.mxu0 %v159
    %v606 = vpop.f32.mrf.mxu0
    %v607 = vadd.f32 0.0, %v606
    %v608 = vpop.f32.mrf.mxu0
    %609 = vdwg.mxu0
    %v610 = vlog2.pop %v607
    %v611 = vmul.f32 %v610, 0.6931472
    %v612 = vadd.f32 %v611, %v65
    %v613 = vadd.f32 %v612, %v536
    %v614 = vadd.f32 %v613, %v520
    %v623 = vrot.slane %v414, 7
    %v624 = vsel %vm380, %v623, %v413
    %v625 = vrot.slane %v415, 6
    %v626 = vsel %vm382, %v625, %v624
    %v627 = vrot.slane %v416, 5
    %v628 = vsel %vm384, %v627, %v626
    %v629 = vrot.slane %v417, 4
    %v630 = vsel %vm386, %v629, %v628
    %v631 = vrot.slane %v418, 3
    %v632 = vsel %vm388, %v631, %v630
    %v633 = vrot.slane %v419, 2
    %v634 = vsel %vm390, %v633, %v632
    %v635 = vrot.slane %v420, 1
    %v636 = vsel %vm392, %v635, %v634
    %v638 = vadd.f32 %v77, %v636
    %v639 = vadd.f32 %v84, %v636
    %v640 = vadd.f32 %v91, %v636
    %v641 = vadd.f32 %v98, %v636
    %v642 = vadd.f32 %v105, %v636
    %v643 = vadd.f32 %v112, %v636
    %v644 = vadd.f32 %v119, %v636
    %v645 = vadd.f32 %v126, %v636
    %v646 = vsel %vm395, %v638, -inf
    %v647 = vrot.slane %v646, 4
    %v648 = vmax.f32 %v646, %v647
    %v649 = vrot.slane %v648, 2
    %v650 = vmax.f32 %v648, %v649
    %v651 = vrot.slane %v650, 1
    %v652 = vmax.f32 %v650, %v651
    %v653 = vsel %vm395, %v639, -inf
    %v654 = vrot.slane %v653, 4
    %v655 = vmax.f32 %v653, %v654
    %v656 = vrot.slane %v655, 2
    %v657 = vmax.f32 %v655, %v656
    %v658 = vrot.slane %v657, 1
    %v659 = vmax.f32 %v657, %v658
    %v660 = vsel %vm395, %v640, -inf
    %v661 = vrot.slane %v660, 4
    %v662 = vmax.f32 %v660, %v661
    %v663 = vrot.slane %v662, 2
    %v664 = vmax.f32 %v662, %v663
    %v665 = vrot.slane %v664, 1
    %v666 = vmax.f32 %v664, %v665
    %v667 = vsel %vm395, %v641, -inf
    %v668 = vrot.slane %v667, 4
    %v669 = vmax.f32 %v667, %v668
    %v670 = vrot.slane %v669, 2
    %v671 = vmax.f32 %v669, %v670
    %v672 = vrot.slane %v671, 1
    %v673 = vmax.f32 %v671, %v672
    %v674 = vsel %vm395, %v642, -inf
    %v675 = vrot.slane %v674, 4
    %v676 = vmax.f32 %v674, %v675
    %v677 = vrot.slane %v676, 2
    %v678 = vmax.f32 %v676, %v677
    %v679 = vrot.slane %v678, 1
    %v680 = vmax.f32 %v678, %v679
    %v681 = vsel %vm395, %v643, -inf
    %v682 = vrot.slane %v681, 4
    %v683 = vmax.f32 %v681, %v682
    %v684 = vrot.slane %v683, 2
    %v685 = vmax.f32 %v683, %v684
    %v686 = vrot.slane %v685, 1
    %v687 = vmax.f32 %v685, %v686
    %v688 = vsel %vm395, %v644, -inf
    %v689 = vrot.slane %v688, 4
    %v690 = vmax.f32 %v688, %v689
    %v691 = vrot.slane %v690, 2
    %v692 = vmax.f32 %v690, %v691
    %v693 = vrot.slane %v692, 1
    %v694 = vmax.f32 %v692, %v693
    %v695 = vsel %vm395, %v645, -inf
    %v696 = vrot.slane %v695, 4
    %v697 = vmax.f32 %v695, %v696
    %v698 = vrot.slane %v697, 2
    %v699 = vmax.f32 %v697, %v698
    %v700 = vrot.slane %v699, 1
    %v701 = vmax.f32 %v699, %v700
    %vm702 = vcmp.eq.f32.partialorder %v638, %v652
    %vm703 = vcmp.eq.f32.partialorder %v639, %v659
    %vm704 = vcmp.eq.f32.partialorder %v640, %v666
    %vm705 = vcmp.eq.f32.partialorder %v641, %v673
    %vm706 = vcmp.eq.f32.partialorder %v642, %v680
    %vm707 = vcmp.eq.f32.partialorder %v643, %v687
    %vm708 = vcmp.eq.f32.partialorder %v644, %v694
    %vm709 = vcmp.eq.f32.partialorder %v645, %v701
    %v710 = vsel %vm702, %v70, 8
    %v711 = vsel %vm703, %v70, 8
    %v712 = vsel %vm704, %v70, 8
    %v713 = vsel %vm705, %v70, 8
    %v714 = vsel %vm706, %v70, 8
    %v715 = vsel %vm707, %v70, 8
    %v716 = vsel %vm708, %v70, 8
    %v717 = vsel %vm709, %v70, 8
    %v718 = vsel %vm395, %v710, 2147483647
    %v719 = vrot.slane %v718, 4
    %vm720 = vcmp.lt.s32.totalorder %v718, %v719
    %v721 = vsel %vm720, %v718, %v719
    %v722 = vrot.slane %v721, 2
    %vm723 = vcmp.lt.s32.totalorder %v721, %v722
    %v724 = vsel %vm723, %v721, %v722
    %v725 = vrot.slane %v724, 1
    %vm726 = vcmp.lt.s32.totalorder %v724, %v725
    %v727 = vsel %vm726, %v724, %v725
    %v728 = vsel %vm395, %v711, 2147483647
    %v729 = vrot.slane %v728, 4
    %vm730 = vcmp.lt.s32.totalorder %v728, %v729
    %v731 = vsel %vm730, %v728, %v729
    %v732 = vrot.slane %v731, 2
    %vm733 = vcmp.lt.s32.totalorder %v731, %v732
    %v734 = vsel %vm733, %v731, %v732
    %v735 = vrot.slane %v734, 1
    %vm736 = vcmp.lt.s32.totalorder %v734, %v735
    %v737 = vsel %vm736, %v734, %v735
    %v738 = vsel %vm395, %v712, 2147483647
    %v739 = vrot.slane %v738, 4
    %vm740 = vcmp.lt.s32.totalorder %v738, %v739
    %v741 = vsel %vm740, %v738, %v739
    %v742 = vrot.slane %v741, 2
    %vm743 = vcmp.lt.s32.totalorder %v741, %v742
    %v744 = vsel %vm743, %v741, %v742
    %v745 = vrot.slane %v744, 1
    %vm746 = vcmp.lt.s32.totalorder %v744, %v745
    %v747 = vsel %vm746, %v744, %v745
    %v748 = vsel %vm395, %v713, 2147483647
    %v749 = vrot.slane %v748, 4
    %vm750 = vcmp.lt.s32.totalorder %v748, %v749
    %v751 = vsel %vm750, %v748, %v749
    %v752 = vrot.slane %v751, 2
    %vm753 = vcmp.lt.s32.totalorder %v751, %v752
    %v754 = vsel %vm753, %v751, %v752
    %v755 = vrot.slane %v754, 1
    %vm756 = vcmp.lt.s32.totalorder %v754, %v755
    %v757 = vsel %vm756, %v754, %v755
    %v758 = vsel %vm395, %v714, 2147483647
    %v759 = vrot.slane %v758, 4
    %vm760 = vcmp.lt.s32.totalorder %v758, %v759
    %v761 = vsel %vm760, %v758, %v759
    %v762 = vrot.slane %v761, 2
    %vm763 = vcmp.lt.s32.totalorder %v761, %v762
    %v764 = vsel %vm763, %v761, %v762
    %v765 = vrot.slane %v764, 1
    %vm766 = vcmp.lt.s32.totalorder %v764, %v765
    %v767 = vsel %vm766, %v764, %v765
    %v768 = vsel %vm395, %v715, 2147483647
    %v769 = vrot.slane %v768, 4
    %vm770 = vcmp.lt.s32.totalorder %v768, %v769
    %v771 = vsel %vm770, %v768, %v769
    %v772 = vrot.slane %v771, 2
    %vm773 = vcmp.lt.s32.totalorder %v771, %v772
    %v774 = vsel %vm773, %v771, %v772
    %v775 = vrot.slane %v774, 1
    %vm776 = vcmp.lt.s32.totalorder %v774, %v775
    %v777 = vsel %vm776, %v774, %v775
    %v778 = vsel %vm395, %v716, 2147483647
    %v779 = vrot.slane %v778, 4
    %vm780 = vcmp.lt.s32.totalorder %v778, %v779
    %v781 = vsel %vm780, %v778, %v779
    %v782 = vrot.slane %v781, 2
    %vm783 = vcmp.lt.s32.totalorder %v781, %v782
    %v784 = vsel %vm783, %v781, %v782
    %v785 = vrot.slane %v784, 1
    %vm786 = vcmp.lt.s32.totalorder %v784, %v785
    %v787 = vsel %vm786, %v784, %v785
    %v788 = vsel %vm395, %v717, 2147483647
    %v789 = vrot.slane %v788, 4
    %vm790 = vcmp.lt.s32.totalorder %v788, %v789
    %v791 = vsel %vm790, %v788, %v789
    %v792 = vrot.slane %v791, 2
    %vm793 = vcmp.lt.s32.totalorder %v791, %v792
    %v794 = vsel %vm793, %v791, %v792
    %v795 = vrot.slane %v794, 1
    %vm796 = vcmp.lt.s32.totalorder %v794, %v795
    %v797 = vsel %vm796, %v794, %v795
    %v798 = vsel %vm380, %v737, %v727
    %v799 = vsel %vm382, %v747, %v798
    %v800 = vsel %vm384, %v757, %v799
    %v801 = vsel %vm386, %v767, %v800
    %v802 = vsel %vm388, %v777, %v801
    %v803 = vsel %vm390, %v787, %v802
    %v804 = vsel %vm392, %v797, %v803
    %s805 = scalar_lea.vmem [#allocation2], 16
    %806 = vst.msk [vmem:[%s805] sm:$0xff] %vm395, %v804
    %v808 = vrot.slane %v520, 1
    %v809 = vrot.slane %v520, 2
    %v810 = vrot.slane %v520, 3
    %v811 = vrot.slane %v520, 4
    %v812 = vrot.slane %v520, 5
    %v813 = vrot.slane %v520, 6
    %v814 = vrot.slane %v520, 7
    %v823 = vadd.f32 %v652, %v520
    %v824 = vadd.f32 %v659, %v808
    %v825 = vadd.f32 %v666, %v809
    %v826 = vadd.f32 %v673, %v810
    %v827 = vadd.f32 %v680, %v811
    %v828 = vadd.f32 %v687, %v812
    %v829 = vadd.f32 %v694, %v813
    %v830 = vadd.f32 %v701, %v814
    %v831 = vmul.f32 %v529, %v520
    %v832 = vsel %vm395, %v831, 0.0
    %v833 = vrot.slane %v832, 4
    %v834 = vadd.f32 %v832, %v833
    %v835 = vrot.slane %v834, 2
    %v836 = vadd.f32 %v834, %v835
    %v837 = vrot.slane %v836, 1
    %v838 = vadd.f32 %v836, %v837
    %v839 = vmul.f32 %v77, %v148
    %v840 = vmul.f32 %v84, %v148
    %v841 = vmul.f32 %v91, %v148
    %v842 = vmul.f32 %v98, %v148
    %v843 = vmul.f32 %v105, %v148
    %v844 = vmul.f32 %v112, %v148
    %v845 = vmul.f32 %v119, %v148
    %v846 = vmul.f32 %v126, %v148
    %v847 = vsel %vm395, %v839, 0.0
    %v848 = vrot.slane %v847, 4
    %v849 = vadd.f32 %v847, %v848
    %v850 = vrot.slane %v849, 2
    %v851 = vadd.f32 %v849, %v850
    %v852 = vrot.slane %v851, 1
    %v853 = vadd.f32 %v851, %v852
    %v854 = vsel %vm395, %v840, 0.0
    %v855 = vrot.slane %v854, 4
    %v856 = vadd.f32 %v854, %v855
    %v857 = vrot.slane %v856, 2
    %v858 = vadd.f32 %v856, %v857
    %v859 = vrot.slane %v858, 1
    %v860 = vadd.f32 %v858, %v859
    %v861 = vsel %vm395, %v841, 0.0
    %v862 = vrot.slane %v861, 4
    %v863 = vadd.f32 %v861, %v862
    %v864 = vrot.slane %v863, 2
    %v865 = vadd.f32 %v863, %v864
    %v866 = vrot.slane %v865, 1
    %v867 = vadd.f32 %v865, %v866
    %v868 = vsel %vm395, %v842, 0.0
    %v869 = vrot.slane %v868, 4
    %v870 = vadd.f32 %v868, %v869
    %v871 = vrot.slane %v870, 2
    %v872 = vadd.f32 %v870, %v871
    %v873 = vrot.slane %v872, 1
    %v874 = vadd.f32 %v872, %v873
    %v875 = vsel %vm395, %v843, 0.0
    %v876 = vrot.slane %v875, 4
    %v877 = vadd.f32 %v875, %v876
    %v878 = vrot.slane %v877, 2
    %v879 = vadd.f32 %v877, %v878
    %v880 = vrot.slane %v879, 1
    %v881 = vadd.f32 %v879, %v880
    %v882 = vsel %vm395, %v844, 0.0
    %v883 = vrot.slane %v882, 4
    %v884 = vadd.f32 %v882, %v883
    %v885 = vrot.slane %v884, 2
    %v886 = vadd.f32 %v884, %v885
    %v887 = vrot.slane %v886, 1
    %v888 = vadd.f32 %v886, %v887
    %v889 = vsel %vm395, %v845, 0.0
    %v890 = vrot.slane %v889, 4
    %v891 = vadd.f32 %v889, %v890
    %v892 = vrot.slane %v891, 2
    %v893 = vadd.f32 %v891, %v892
    %v894 = vrot.slane %v893, 1
    %v895 = vadd.f32 %v893, %v894
    %v896 = vsel %vm395, %v846, 0.0
    %v897 = vrot.slane %v896, 4
    %v898 = vadd.f32 %v896, %v897
    %v899 = vrot.slane %v898, 2
    %v900 = vadd.f32 %v898, %v899
    %v901 = vrot.slane %v900, 1
    %v902 = vadd.f32 %v900, %v901
    %v903 = vadd.f32 %v518, %v838
    %v912 = vsel %vm380, %v860, %v853
    %v913 = vsel %vm382, %v867, %v912
    %v914 = vsel %vm384, %v874, %v913
    %v915 = vsel %vm386, %v881, %v914
    %v916 = vsel %vm388, %v888, %v915
    %v917 = vsel %vm390, %v895, %v916
    %v918 = vsel %vm392, %v902, %v917
    %v920 = vmul.f32 %v529, %v918
    %v921 = vsel %vm395, %v920, 0.0
    %v922 = vrot.slane %v921, 4
    %v923 = vadd.f32 %v921, %v922
    %v924 = vrot.slane %v923, 2
    %v925 = vadd.f32 %v923, %v924
    %v926 = vrot.slane %v925, 1
    %v927 = vadd.f32 %v925, %v926
    %v928 = vadd.f32 %v903, %v927
    %s929 = scalar_lea.vmem [#allocation5], 24
    %v930 = vld [vmem:[%s929] sm:$0xff]
    %s931 = scalar_lea.vmem [#allocation8], 3
    %v932 = vld [vmem:[%s931] sm:$0x1]
    %v933 = vlaneseq
    %v934 = vshrl.u32 %v933, 7
    %v935 = vsub.s32 0, %v934
    %v936 = vrot.slane %v932, %v935
    %vm937 = vcmp.eq.s32.totalorder %v70, %v936
    %v938 = vsel %vm937, 1, 0
    %v939 = vcvt.s32.f32 %v938
    %v940 = vsel %vm395, %v614, -inf
    %v941 = vrot.slane %v940, 4
    %v942 = vmax.f32 %v940, %v941
    %v943 = vrot.slane %v942, 2
    %v944 = vmax.f32 %v942, %v943
    %v945 = vrot.slane %v944, 1
    %v946 = vmax.f32 %v944, %v945
    %v947 = vsub.f32 %v614, %v946
    %v948 = vmul.f32 %v947, 1.442695
    %v949 = vpow.pop %v948
    %950 = vmatprep.subr.mxu0 0.0
    %951 = vmatpush1.msra.mxu0 0.0
    %952 = vmatprep.subr.mxu0 0.0
    %953 = vmatpush1.msra.mxu0 0.0
    %954 = vmatprep.subr.mxu0 0.0
    %955 = vmatpush1.msra.mxu0 0.0
    %956 = vmatprep.subr.mxu0 0.0
    %957 = vmatpush1.msra.mxu0 0.0
    %958 = vmatprep.subr.mxu0 0.0
    %959 = vmatpush1.msra.mxu0 0.0
    %960 = vmatprep.subr.mxu0 0.0
    %961 = vmatpush1.msra.mxu0 0.0
    %962 = vmatprep.subr.mxu0 0.0
    %963 = vmatpush1.msra.mxu0 0.0
    %964 = vmatprep.subr.mxu0 0.0
    %965 = vmatpush1.msra.mxu0 0.0
    %966 = vmatprep.subr.mxu0 0.0
    %967 = vmatpush1.msra.mxu0 0.0
    %968 = vmatprep.subr.mxu0 0.0
    %969 = vmatpush1.msra.mxu0 0.0
    %970 = vmatprep.subr.mxu0 0.0
    %971 = vmatpush1.msra.mxu0 0.0
    %972 = vmatprep.subr.mxu0 0.0
    %973 = vmatpush1.msra.mxu0 0.0
    %974 = vmatprep.subr.mxu0 0.0
    %975 = vmatpush1.msra.mxu0 0.0
    %976 = vmatprep.subr.mxu0 0.0
    %977 = vmatpush1.msra.mxu0 0.0
    %978 = vmatprep.subr.mxu0 0.0
    %979 = vmatpush1.msra.mxu0 0.0
    %980 = vmatprep.subr.mxu0 0.0
    %981 = vmatpush1.msra.mxu0 %v949
    %982 = vmatprep.subr.mxu0 0.0
    %983 = vmatpush2.msra.mxu0 0.0
    %984 = vmatprep.subr.mxu0 0.0
    %985 = vmatpush2.msra.mxu0 0.0
    %986 = vmatprep.subr.mxu0 0.0
    %987 = vmatpush2.msra.mxu0 0.0
    %988 = vmatprep.subr.mxu0 0.0
    %989 = vmatpush2.msra.mxu0 0.0
    %990 = vmatprep.subr.mxu0 0.0
    %991 = vmatpush2.msra.mxu0 0.0
    %992 = vmatprep.subr.mxu0 0.0
    %993 = vmatpush2.msra.mxu0 0.0
    %994 = vmatprep.subr.mxu0 0.0
    %995 = vmatpush2.msra.mxu0 0.0
    %996 = vmatprep.subr.mxu0 0.0
    %997 = vmatpush2.msra.mxu0 0.0
    %998 = vmatprep.subr.mxu0 0.0
    %999 = vmatpush2.msra.mxu0 0.0
    %1000 = vmatprep.subr.mxu0 0.0
    %1001 = vmatpush2.msra.mxu0 0.0
    %1002 = vmatprep.subr.mxu0 0.0
    %1003 = vmatpush2.msra.mxu0 0.0
    %1004 = vmatprep.subr.mxu0 0.0
    %1005 = vmatpush2.msra.mxu0 0.0
    %1006 = vmatprep.subr.mxu0 0.0
    %1007 = vmatpush2.msra.mxu0 0.0
    %1008 = vmatprep.subr.mxu0 0.0
    %1009 = vmatpush2.msra.mxu0 0.0
    %1010 = vmatprep.subr.mxu0 0.0
    %1011 = vmatpush2.msra.mxu0 0.0
    %1012 = vmatprep.subr.mxu0 0.0
    %1013 = vmatpush2.msra.mxu0 0.0
    %1014 = vmatprep.mubr.f32.mxu0 0.0
    %1015 = vmatmul.mubr.f32.gmra.mxu0 %v159
    %v1016 = vpop.f32.mrf.mxu0
    %v1017 = vadd.f32 0.0, %v1016
    %v1018 = vpop.f32.mrf.mxu0
    %1019 = vdwg.mxu0
    %v1020 = vlog2.pop %v1017
    %v1021 = vmul.f32 %v1020, 0.6931472
    %v1022 = vadd.f32 %v1021, %v65
    %v1023 = vadd.f32 %v1022, %v946
    %v1024 = vadd.f32 %v1023, %v930
    %v1033 = vrot.slane %v824, 7
    %v1034 = vsel %vm380, %v1033, %v823
    %v1035 = vrot.slane %v825, 6
    %v1036 = vsel %vm382, %v1035, %v1034
    %v1037 = vrot.slane %v826, 5
    %v1038 = vsel %vm384, %v1037, %v1036
    %v1039 = vrot.slane %v827, 4
    %v1040 = vsel %vm386, %v1039, %v1038
    %v1041 = vrot.slane %v828, 3
    %v1042 = vsel %vm388, %v1041, %v1040
    %v1043 = vrot.slane %v829, 2
    %v1044 = vsel %vm390, %v1043, %v1042
    %v1045 = vrot.slane %v830, 1
    %v1046 = vsel %vm392, %v1045, %v1044
    %v1048 = vadd.f32 %v77, %v1046
    %v1049 = vadd.f32 %v84, %v1046
    %v1050 = vadd.f32 %v91, %v1046
    %v1051 = vadd.f32 %v98, %v1046
    %v1052 = vadd.f32 %v105, %v1046
    %v1053 = vadd.f32 %v112, %v1046
    %v1054 = vadd.f32 %v119, %v1046
    %v1055 = vadd.f32 %v126, %v1046
    %v1056 = vsel %vm395, %v1048, -inf
    %v1057 = vrot.slane %v1056, 4
    %v1058 = vmax.f32 %v1056, %v1057
    %v1059 = vrot.slane %v1058, 2
    %v1060 = vmax.f32 %v1058, %v1059
    %v1061 = vrot.slane %v1060, 1
    %v1062 = vmax.f32 %v1060, %v1061
    %v1063 = vsel %vm395, %v1049, -inf
    %v1064 = vrot.slane %v1063, 4
    %v1065 = vmax.f32 %v1063, %v1064
    %v1066 = vrot.slane %v1065, 2
    %v1067 = vmax.f32 %v1065, %v1066
    %v1068 = vrot.slane %v1067, 1
    %v1069 = vmax.f32 %v1067, %v1068
    %v1070 = vsel %vm395, %v1050, -inf
    %v1071 = vrot.slane %v1070, 4
    %v1072 = vmax.f32 %v1070, %v1071
    %v1073 = vrot.slane %v1072, 2
    %v1074 = vmax.f32 %v1072, %v1073
    %v1075 = vrot.slane %v1074, 1
    %v1076 = vmax.f32 %v1074, %v1075
    %v1077 = vsel %vm395, %v1051, -inf
    %v1078 = vrot.slane %v1077, 4
    %v1079 = vmax.f32 %v1077, %v1078
    %v1080 = vrot.slane %v1079, 2
    %v1081 = vmax.f32 %v1079, %v1080
    %v1082 = vrot.slane %v1081, 1
    %v1083 = vmax.f32 %v1081, %v1082
    %v1084 = vsel %vm395, %v1052, -inf
    %v1085 = vrot.slane %v1084, 4
    %v1086 = vmax.f32 %v1084, %v1085
    %v1087 = vrot.slane %v1086, 2
    %v1088 = vmax.f32 %v1086, %v1087
    %v1089 = vrot.slane %v1088, 1
    %v1090 = vmax.f32 %v1088, %v1089
    %v1091 = vsel %vm395, %v1053, -inf
    %v1092 = vrot.slane %v1091, 4
    %v1093 = vmax.f32 %v1091, %v1092
    %v1094 = vrot.slane %v1093, 2
    %v1095 = vmax.f32 %v1093, %v1094
    %v1096 = vrot.slane %v1095, 1
    %v1097 = vmax.f32 %v1095, %v1096
    %v1098 = vsel %vm395, %v1054, -inf
    %v1099 = vrot.slane %v1098, 4
    %v1100 = vmax.f32 %v1098, %v1099
    %v1101 = vrot.slane %v1100, 2
    %v1102 = vmax.f32 %v1100, %v1101
    %v1103 = vrot.slane %v1102, 1
    %v1104 = vmax.f32 %v1102, %v1103
    %v1105 = vsel %vm395, %v1055, -inf
    %v1106 = vrot.slane %v1105, 4
    %v1107 = vmax.f32 %v1105, %v1106
    %v1108 = vrot.slane %v1107, 2
    %v1109 = vmax.f32 %v1107, %v1108
    %v1110 = vrot.slane %v1109, 1
    %v1111 = vmax.f32 %v1109, %v1110
    %vm1112 = vcmp.eq.f32.partialorder %v1048, %v1062
    %vm1113 = vcmp.eq.f32.partialorder %v1049, %v1069
    %vm1114 = vcmp.eq.f32.partialorder %v1050, %v1076
    %vm1115 = vcmp.eq.f32.partialorder %v1051, %v1083
    %vm1116 = vcmp.eq.f32.partialorder %v1052, %v1090
    %vm1117 = vcmp.eq.f32.partialorder %v1053, %v1097
    %vm1118 = vcmp.eq.f32.partialorder %v1054, %v1104
    %vm1119 = vcmp.eq.f32.partialorder %v1055, %v1111
    %v1120 = vsel %vm1112, %v70, 8
    %v1121 = vsel %vm1113, %v70, 8
    %v1122 = vsel %vm1114, %v70, 8
    %v1123 = vsel %vm1115, %v70, 8
    %v1124 = vsel %vm1116, %v70, 8
    %v1125 = vsel %vm1117, %v70, 8
    %v1126 = vsel %vm1118, %v70, 8
    %v1127 = vsel %vm1119, %v70, 8
    %v1128 = vsel %vm395, %v1120, 2147483647
    %v1129 = vrot.slane %v1128, 4
    %vm1130 = vcmp.lt.s32.totalorder %v1128, %v1129
    %v1131 = vsel %vm1130, %v1128, %v1129
    %v1132 = vrot.slane %v1131, 2
    %vm1133 = vcmp.lt.s32.totalorder %v1131, %v1132
    %v1134 = vsel %vm1133, %v1131, %v1132
    %v1135 = vrot.slane %v1134, 1
    %vm1136 = vcmp.lt.s32.totalorder %v1134, %v1135
    %v1137 = vsel %vm1136, %v1134, %v1135
    %v1138 = vsel %vm395, %v1121, 2147483647
    %v1139 = vrot.slane %v1138, 4
    %vm1140 = vcmp.lt.s32.totalorder %v1138, %v1139
    %v1141 = vsel %vm1140, %v1138, %v1139
    %v1142 = vrot.slane %v1141, 2
    %vm1143 = vcmp.lt.s32.totalorder %v1141, %v1142
    %v1144 = vsel %vm1143, %v1141, %v1142
    %v1145 = vrot.slane %v1144, 1
    %vm1146 = vcmp.lt.s32.totalorder %v1144, %v1145
    %v1147 = vsel %vm1146, %v1144, %v1145
    %v1148 = vsel %vm395, %v1122, 2147483647
    %v1149 = vrot.slane %v1148, 4
    %vm1150 = vcmp.lt.s32.totalorder %v1148, %v1149
    %v1151 = vsel %vm1150, %v1148, %v1149
    %v1152 = vrot.slane %v1151, 2
    %vm1153 = vcmp.lt.s32.totalorder %v1151, %v1152
    %v1154 = vsel %vm1153, %v1151, %v1152
    %v1155 = vrot.slane %v1154, 1
    %vm1156 = vcmp.lt.s32.totalorder %v1154, %v1155
    %v1157 = vsel %vm1156, %v1154, %v1155
    %v1158 = vsel %vm395, %v1123, 2147483647
    %v1159 = vrot.slane %v1158, 4
    %vm1160 = vcmp.lt.s32.totalorder %v1158, %v1159
    %v1161 = vsel %vm1160, %v1158, %v1159
    %v1162 = vrot.slane %v1161, 2
    %vm1163 = vcmp.lt.s32.totalorder %v1161, %v1162
    %v1164 = vsel %vm1163, %v1161, %v1162
    %v1165 = vrot.slane %v1164, 1
    %vm1166 = vcmp.lt.s32.totalorder %v1164, %v1165
    %v1167 = vsel %vm1166, %v1164, %v1165
    %v1168 = vsel %vm395, %v1124, 2147483647
    %v1169 = vrot.slane %v1168, 4
    %vm1170 = vcmp.lt.s32.totalorder %v1168, %v1169
    %v1171 = vsel %vm1170, %v1168, %v1169
    %v1172 = vrot.slane %v1171, 2
    %vm1173 = vcmp.lt.s32.totalorder %v1171, %v1172
    %v1174 = vsel %vm1173, %v1171, %v1172
    %v1175 = vrot.slane %v1174, 1
    %vm1176 = vcmp.lt.s32.totalorder %v1174, %v1175
    %v1177 = vsel %vm1176, %v1174, %v1175
    %v1178 = vsel %vm395, %v1125, 2147483647
    %v1179 = vrot.slane %v1178, 4
    %vm1180 = vcmp.lt.s32.totalorder %v1178, %v1179
    %v1181 = vsel %vm1180, %v1178, %v1179
    %v1182 = vrot.slane %v1181, 2
    %vm1183 = vcmp.lt.s32.totalorder %v1181, %v1182
    %v1184 = vsel %vm1183, %v1181, %v1182
    %v1185 = vrot.slane %v1184, 1
    %vm1186 = vcmp.lt.s32.totalorder %v1184, %v1185
    %v1187 = vsel %vm1186, %v1184, %v1185
    %v1188 = vsel %vm395, %v1126, 2147483647
    %v1189 = vrot.slane %v1188, 4
    %vm1190 = vcmp.lt.s32.totalorder %v1188, %v1189
    %v1191 = vsel %vm1190, %v1188, %v1189
    %v1192 = vrot.slane %v1191, 2
    %vm1193 = vcmp.lt.s32.totalorder %v1191, %v1192
    %v1194 = vsel %vm1193, %v1191, %v1192
    %v1195 = vrot.slane %v1194, 1
    %vm1196 = vcmp.lt.s32.totalorder %v1194, %v1195
    %v1197 = vsel %vm1196, %v1194, %v1195
    %v1198 = vsel %vm395, %v1127, 2147483647
    %v1199 = vrot.slane %v1198, 4
    %vm1200 = vcmp.lt.s32.totalorder %v1198, %v1199
    %v1201 = vsel %vm1200, %v1198, %v1199
    %v1202 = vrot.slane %v1201, 2
    %vm1203 = vcmp.lt.s32.totalorder %v1201, %v1202
    %v1204 = vsel %vm1203, %v1201, %v1202
    %v1205 = vrot.slane %v1204, 1
    %vm1206 = vcmp.lt.s32.totalorder %v1204, %v1205
    %v1207 = vsel %vm1206, %v1204, %v1205
    %v1208 = vsel %vm380, %v1147, %v1137
    %v1209 = vsel %vm382, %v1157, %v1208
    %v1210 = vsel %vm384, %v1167, %v1209
    %v1211 = vsel %vm386, %v1177, %v1210
    %v1212 = vsel %vm388, %v1187, %v1211
    %v1213 = vsel %vm390, %v1197, %v1212
    %v1214 = vsel %vm392, %v1207, %v1213
    %s1215 = scalar_lea.vmem [#allocation2], 24
    %1216 = vst.msk [vmem:[%s1215] sm:$0xff] %vm395, %v1214
    %v1218 = vrot.slane %v930, 1
    %v1219 = vrot.slane %v930, 2
    %v1220 = vrot.slane %v930, 3
    %v1221 = vrot.slane %v930, 4
    %v1222 = vrot.slane %v930, 5
    %v1223 = vrot.slane %v930, 6
    %v1224 = vrot.slane %v930, 7
    %v1233 = vadd.f32 %v1062, %v930
    %v1234 = vadd.f32 %v1069, %v1218
    %v1235 = vadd.f32 %v1076, %v1219
    %v1236 = vadd.f32 %v1083, %v1220
    %v1237 = vadd.f32 %v1090, %v1221
    %v1238 = vadd.f32 %v1097, %v1222
    %v1239 = vadd.f32 %v1104, %v1223
    %v1240 = vadd.f32 %v1111, %v1224
    %v1241 = vmul.f32 %v939, %v930
    %v1242 = vsel %vm395, %v1241, 0.0
    %v1243 = vrot.slane %v1242, 4
    %v1244 = vadd.f32 %v1242, %v1243
    %v1245 = vrot.slane %v1244, 2
    %v1246 = vadd.f32 %v1244, %v1245
    %v1247 = vrot.slane %v1246, 1
    %v1248 = vadd.f32 %v1246, %v1247
    %v1249 = vmul.f32 %v77, %v529
    %v1250 = vmul.f32 %v84, %v529
    %v1251 = vmul.f32 %v91, %v529
    %v1252 = vmul.f32 %v98, %v529
    %v1253 = vmul.f32 %v105, %v529
    %v1254 = vmul.f32 %v112, %v529
    %v1255 = vmul.f32 %v119, %v529
    %v1256 = vmul.f32 %v126, %v529
    %v1257 = vsel %vm395, %v1249, 0.0
    %v1258 = vrot.slane %v1257, 4
    %v1259 = vadd.f32 %v1257, %v1258
    %v1260 = vrot.slane %v1259, 2
    %v1261 = vadd.f32 %v1259, %v1260
    %v1262 = vrot.slane %v1261, 1
    %v1263 = vadd.f32 %v1261, %v1262
    %v1264 = vsel %vm395, %v1250, 0.0
    %v1265 = vrot.slane %v1264, 4
    %v1266 = vadd.f32 %v1264, %v1265
    %v1267 = vrot.slane %v1266, 2
    %v1268 = vadd.f32 %v1266, %v1267
    %v1269 = vrot.slane %v1268, 1
    %v1270 = vadd.f32 %v1268, %v1269
    %v1271 = vsel %vm395, %v1251, 0.0
    %v1272 = vrot.slane %v1271, 4
    %v1273 = vadd.f32 %v1271, %v1272
    %v1274 = vrot.slane %v1273, 2
    %v1275 = vadd.f32 %v1273, %v1274
    %v1276 = vrot.slane %v1275, 1
    %v1277 = vadd.f32 %v1275, %v1276
    %v1278 = vsel %vm395, %v1252, 0.0
    %v1279 = vrot.slane %v1278, 4
    %v1280 = vadd.f32 %v1278, %v1279
    %v1281 = vrot.slane %v1280, 2
    %v1282 = vadd.f32 %v1280, %v1281
    %v1283 = vrot.slane %v1282, 1
    %v1284 = vadd.f32 %v1282, %v1283
    %v1285 = vsel %vm395, %v1253, 0.0
    %v1286 = vrot.slane %v1285, 4
    %v1287 = vadd.f32 %v1285, %v1286
    %v1288 = vrot.slane %v1287, 2
    %v1289 = vadd.f32 %v1287, %v1288
    %v1290 = vrot.slane %v1289, 1
    %v1291 = vadd.f32 %v1289, %v1290
    %v1292 = vsel %vm395, %v1254, 0.0
    %v1293 = vrot.slane %v1292, 4
    %v1294 = vadd.f32 %v1292, %v1293
    %v1295 = vrot.slane %v1294, 2
    %v1296 = vadd.f32 %v1294, %v1295
    %v1297 = vrot.slane %v1296, 1
    %v1298 = vadd.f32 %v1296, %v1297
    %v1299 = vsel %vm395, %v1255, 0.0
    %v1300 = vrot.slane %v1299, 4
    %v1301 = vadd.f32 %v1299, %v1300
    %v1302 = vrot.slane %v1301, 2
    %v1303 = vadd.f32 %v1301, %v1302
    %v1304 = vrot.slane %v1303, 1
    %v1305 = vadd.f32 %v1303, %v1304
    %v1306 = vsel %vm395, %v1256, 0.0
    %v1307 = vrot.slane %v1306, 4
    %v1308 = vadd.f32 %v1306, %v1307
    %v1309 = vrot.slane %v1308, 2
    %v1310 = vadd.f32 %v1308, %v1309
    %v1311 = vrot.slane %v1310, 1
    %v1312 = vadd.f32 %v1310, %v1311
    %v1313 = vadd.f32 %v928, %v1248
    %v1322 = vsel %vm380, %v1270, %v1263
    %v1323 = vsel %vm382, %v1277, %v1322
    %v1324 = vsel %vm384, %v1284, %v1323
    %v1325 = vsel %vm386, %v1291, %v1324
    %v1326 = vsel %vm388, %v1298, %v1325
    %v1327 = vsel %vm390, %v1305, %v1326
    %v1328 = vsel %vm392, %v1312, %v1327
    %v1330 = vmul.f32 %v939, %v1328
    %v1331 = vsel %vm395, %v1330, 0.0
    %v1332 = vrot.slane %v1331, 4
    %v1333 = vadd.f32 %v1331, %v1332
    %v1334 = vrot.slane %v1333, 2
    %v1335 = vadd.f32 %v1333, %v1334
    %v1336 = vrot.slane %v1335, 1
    %v1337 = vadd.f32 %v1335, %v1336
    %v1338 = vadd.f32 %v1313, %v1337
    %s1339 = scalar_lea.vmem [#allocation5], 32
    %v1340 = vld [vmem:[%s1339] sm:$0xff]
    %s1341 = scalar_lea.vmem [#allocation8], 4
    %v1342 = vld [vmem:[%s1341] sm:$0x1]
    %v1343 = vlaneseq
    %v1344 = vshrl.u32 %v1343, 7
    %v1345 = vsub.s32 0, %v1344
    %v1346 = vrot.slane %v1342, %v1345
    %vm1347 = vcmp.eq.s32.totalorder %v70, %v1346
    %v1348 = vsel %vm1347, 1, 0
    %v1349 = vcvt.s32.f32 %v1348
    %v1350 = vsel %vm395, %v1024, -inf
    %v1351 = vrot.slane %v1350, 4
    %v1352 = vmax.f32 %v1350, %v1351
    %v1353 = vrot.slane %v1352, 2
    %v1354 = vmax.f32 %v1352, %v1353
    %v1355 = vrot.slane %v1354, 1
    %v1356 = vmax.f32 %v1354, %v1355
    %v1357 = vsub.f32 %v1024, %v1356
    %v1358 = vmul.f32 %v1357, 1.442695
    %v1359 = vpow.pop %v1358
    %1360 = vmatprep.subr.mxu0 0.0
    %1361 = vmatpush1.msra.mxu0 0.0
    %1362 = vmatprep.subr.mxu0 0.0
    %1363 = vmatpush1.msra.mxu0 0.0
    %1364 = vmatprep.subr.mxu0 0.0
    %1365 = vmatpush1.msra.mxu0 0.0
    %1366 = vmatprep.subr.mxu0 0.0
    %1367 = vmatpush1.msra.mxu0 0.0
    %1368 = vmatprep.subr.mxu0 0.0
    %1369 = vmatpush1.msra.mxu0 0.0
    %1370 = vmatprep.subr.mxu0 0.0
    %1371 = vmatpush1.msra.mxu0 0.0
    %1372 = vmatprep.subr.mxu0 0.0
    %1373 = vmatpush1.msra.mxu0 0.0
    %1374 = vmatprep.subr.mxu0 0.0
    %1375 = vmatpush1.msra.mxu0 0.0
    %1376 = vmatprep.subr.mxu0 0.0
    %1377 = vmatpush1.msra.mxu0 0.0
    %1378 = vmatprep.subr.mxu0 0.0
    %1379 = vmatpush1.msra.mxu0 0.0
    %1380 = vmatprep.subr.mxu0 0.0
    %1381 = vmatpush1.msra.mxu0 0.0
    %1382 = vmatprep.subr.mxu0 0.0
    %1383 = vmatpush1.msra.mxu0 0.0
    %1384 = vmatprep.subr.mxu0 0.0
    %1385 = vmatpush1.msra.mxu0 0.0
    %1386 = vmatprep.subr.mxu0 0.0
    %1387 = vmatpush1.msra.mxu0 0.0
    %1388 = vmatprep.subr.mxu0 0.0
    %1389 = vmatpush1.msra.mxu0 0.0
    %1390 = vmatprep.subr.mxu0 0.0
    %1391 = vmatpush1.msra.mxu0 %v1359
    %1392 = vmatprep.subr.mxu0 0.0
    %1393 = vmatpush2.msra.mxu0 0.0
    %1394 = vmatprep.subr.mxu0 0.0
    %1395 = vmatpush2.msra.mxu0 0.0
    %1396 = vmatprep.subr.mxu0 0.0
    %1397 = vmatpush2.msra.mxu0 0.0
    %1398 = vmatprep.subr.mxu0 0.0
    %1399 = vmatpush2.msra.mxu0 0.0
    %1400 = vmatprep.subr.mxu0 0.0
    %1401 = vmatpush2.msra.mxu0 0.0
    %1402 = vmatprep.subr.mxu0 0.0
    %1403 = vmatpush2.msra.mxu0 0.0
    %1404 = vmatprep.subr.mxu0 0.0
    %1405 = vmatpush2.msra.mxu0 0.0
    %1406 = vmatprep.subr.mxu0 0.0
    %1407 = vmatpush2.msra.mxu0 0.0
    %1408 = vmatprep.subr.mxu0 0.0
    %1409 = vmatpush2.msra.mxu0 0.0
    %1410 = vmatprep.subr.mxu0 0.0
    %1411 = vmatpush2.msra.mxu0 0.0
    %1412 = vmatprep.subr.mxu0 0.0
    %1413 = vmatpush2.msra.mxu0 0.0
    %1414 = vmatprep.subr.mxu0 0.0
    %1415 = vmatpush2.msra.mxu0 0.0
    %1416 = vmatprep.subr.mxu0 0.0
    %1417 = vmatpush2.msra.mxu0 0.0
    %1418 = vmatprep.subr.mxu0 0.0
    %1419 = vmatpush2.msra.mxu0 0.0
    %1420 = vmatprep.subr.mxu0 0.0
    %1421 = vmatpush2.msra.mxu0 0.0
    %1422 = vmatprep.subr.mxu0 0.0
    %1423 = vmatpush2.msra.mxu0 0.0
    %1424 = vmatprep.mubr.f32.mxu0 0.0
    %1425 = vmatmul.mubr.f32.gmra.mxu0 %v159
    %v1426 = vpop.f32.mrf.mxu0
    %v1427 = vadd.f32 0.0, %v1426
    %v1428 = vpop.f32.mrf.mxu0
    %1429 = vdwg.mxu0
    %v1430 = vlog2.pop %v1427
    %v1431 = vmul.f32 %v1430, 0.6931472
    %v1432 = vadd.f32 %v1431, %v65
    %v1433 = vadd.f32 %v1432, %v1356
    %v1434 = vadd.f32 %v1433, %v1340
    %v1443 = vrot.slane %v1234, 7
    %v1444 = vsel %vm380, %v1443, %v1233
    %v1445 = vrot.slane %v1235, 6
    %v1446 = vsel %vm382, %v1445, %v1444
    %v1447 = vrot.slane %v1236, 5
    %v1448 = vsel %vm384, %v1447, %v1446
    %v1449 = vrot.slane %v1237, 4
    %v1450 = vsel %vm386, %v1449, %v1448
    %v1451 = vrot.slane %v1238, 3
    %v1452 = vsel %vm388, %v1451, %v1450
    %v1453 = vrot.slane %v1239, 2
    %v1454 = vsel %vm390, %v1453, %v1452
    %v1455 = vrot.slane %v1240, 1
    %v1456 = vsel %vm392, %v1455, %v1454
    %v1458 = vadd.f32 %v77, %v1456
    %v1459 = vadd.f32 %v84, %v1456
    %v1460 = vadd.f32 %v91, %v1456
    %v1461 = vadd.f32 %v98, %v1456
    %v1462 = vadd.f32 %v105, %v1456
    %v1463 = vadd.f32 %v112, %v1456
    %v1464 = vadd.f32 %v119, %v1456
    %v1465 = vadd.f32 %v126, %v1456
    %v1466 = vsel %vm395, %v1458, -inf
    %v1467 = vrot.slane %v1466, 4
    %v1468 = vmax.f32 %v1466, %v1467
    %v1469 = vrot.slane %v1468, 2
    %v1470 = vmax.f32 %v1468, %v1469
    %v1471 = vrot.slane %v1470, 1
    %v1472 = vmax.f32 %v1470, %v1471
    %v1473 = vsel %vm395, %v1459, -inf
    %v1474 = vrot.slane %v1473, 4
    %v1475 = vmax.f32 %v1473, %v1474
    %v1476 = vrot.slane %v1475, 2
    %v1477 = vmax.f32 %v1475, %v1476
    %v1478 = vrot.slane %v1477, 1
    %v1479 = vmax.f32 %v1477, %v1478
    %v1480 = vsel %vm395, %v1460, -inf
    %v1481 = vrot.slane %v1480, 4
    %v1482 = vmax.f32 %v1480, %v1481
    %v1483 = vrot.slane %v1482, 2
    %v1484 = vmax.f32 %v1482, %v1483
    %v1485 = vrot.slane %v1484, 1
    %v1486 = vmax.f32 %v1484, %v1485
    %v1487 = vsel %vm395, %v1461, -inf
    %v1488 = vrot.slane %v1487, 4
    %v1489 = vmax.f32 %v1487, %v1488
    %v1490 = vrot.slane %v1489, 2
    %v1491 = vmax.f32 %v1489, %v1490
    %v1492 = vrot.slane %v1491, 1
    %v1493 = vmax.f32 %v1491, %v1492
    %v1494 = vsel %vm395, %v1462, -inf
    %v1495 = vrot.slane %v1494, 4
    %v1496 = vmax.f32 %v1494, %v1495
    %v1497 = vrot.slane %v1496, 2
    %v1498 = vmax.f32 %v1496, %v1497
    %v1499 = vrot.slane %v1498, 1
    %v1500 = vmax.f32 %v1498, %v1499
    %v1501 = vsel %vm395, %v1463, -inf
    %v1502 = vrot.slane %v1501, 4
    %v1503 = vmax.f32 %v1501, %v1502
    %v1504 = vrot.slane %v1503, 2
    %v1505 = vmax.f32 %v1503, %v1504
    %v1506 = vrot.slane %v1505, 1
    %v1507 = vmax.f32 %v1505, %v1506
    %v1508 = vsel %vm395, %v1464, -inf
    %v1509 = vrot.slane %v1508, 4
    %v1510 = vmax.f32 %v1508, %v1509
    %v1511 = vrot.slane %v1510, 2
    %v1512 = vmax.f32 %v1510, %v1511
    %v1513 = vrot.slane %v1512, 1
    %v1514 = vmax.f32 %v1512, %v1513
    %v1515 = vsel %vm395, %v1465, -inf
    %v1516 = vrot.slane %v1515, 4
    %v1517 = vmax.f32 %v1515, %v1516
    %v1518 = vrot.slane %v1517, 2
    %v1519 = vmax.f32 %v1517, %v1518
    %v1520 = vrot.slane %v1519, 1
    %v1521 = vmax.f32 %v1519, %v1520
    %vm1522 = vcmp.eq.f32.partialorder %v1458, %v1472
    %vm1523 = vcmp.eq.f32.partialorder %v1459, %v1479
    %vm1524 = vcmp.eq.f32.partialorder %v1460, %v1486
    %vm1525 = vcmp.eq.f32.partialorder %v1461, %v1493
    %vm1526 = vcmp.eq.f32.partialorder %v1462, %v1500
    %vm1527 = vcmp.eq.f32.partialorder %v1463, %v1507
    %vm1528 = vcmp.eq.f32.partialorder %v1464, %v1514
    %vm1529 = vcmp.eq.f32.partialorder %v1465, %v1521
    %v1530 = vsel %vm1522, %v70, 8
    %v1531 = vsel %vm1523, %v70, 8
    %v1532 = vsel %vm1524, %v70, 8
    %v1533 = vsel %vm1525, %v70, 8
    %v1534 = vsel %vm1526, %v70, 8
    %v1535 = vsel %vm1527, %v70, 8
    %v1536 = vsel %vm1528, %v70, 8
    %v1537 = vsel %vm1529, %v70, 8
    %v1538 = vsel %vm395, %v1530, 2147483647
    %v1539 = vrot.slane %v1538, 4
    %vm1540 = vcmp.lt.s32.totalorder %v1538, %v1539
    %v1541 = vsel %vm1540, %v1538, %v1539
    %v1542 = vrot.slane %v1541, 2
    %vm1543 = vcmp.lt.s32.totalorder %v1541, %v1542
    %v1544 = vsel %vm1543, %v1541, %v1542
    %v1545 = vrot.slane %v1544, 1
    %vm1546 = vcmp.lt.s32.totalorder %v1544, %v1545
    %v1547 = vsel %vm1546, %v1544, %v1545
    %v1548 = vsel %vm395, %v1531, 2147483647
    %v1549 = vrot.slane %v1548, 4
    %vm1550 = vcmp.lt.s32.totalorder %v1548, %v1549
    %v1551 = vsel %vm1550, %v1548, %v1549
    %v1552 = vrot.slane %v1551, 2
    %vm1553 = vcmp.lt.s32.totalorder %v1551, %v1552
    %v1554 = vsel %vm1553, %v1551, %v1552
    %v1555 = vrot.slane %v1554, 1
    %vm1556 = vcmp.lt.s32.totalorder %v1554, %v1555
    %v1557 = vsel %vm1556, %v1554, %v1555
    %v1558 = vsel %vm395, %v1532, 2147483647
    %v1559 = vrot.slane %v1558, 4
    %vm1560 = vcmp.lt.s32.totalorder %v1558, %v1559
    %v1561 = vsel %vm1560, %v1558, %v1559
    %v1562 = vrot.slane %v1561, 2
    %vm1563 = vcmp.lt.s32.totalorder %v1561, %v1562
    %v1564 = vsel %vm1563, %v1561, %v1562
    %v1565 = vrot.slane %v1564, 1
    %vm1566 = vcmp.lt.s32.totalorder %v1564, %v1565
    %v1567 = vsel %vm1566, %v1564, %v1565
    %v1568 = vsel %vm395, %v1533, 2147483647
    %v1569 = vrot.slane %v1568, 4
    %vm1570 = vcmp.lt.s32.totalorder %v1568, %v1569
    %v1571 = vsel %vm1570, %v1568, %v1569
    %v1572 = vrot.slane %v1571, 2
    %vm1573 = vcmp.lt.s32.totalorder %v1571, %v1572
    %v1574 = vsel %vm1573, %v1571, %v1572
    %v1575 = vrot.slane %v1574, 1
    %vm1576 = vcmp.lt.s32.totalorder %v1574, %v1575
    %v1577 = vsel %vm1576, %v1574, %v1575
    %v1578 = vsel %vm395, %v1534, 2147483647
    %v1579 = vrot.slane %v1578, 4
    %vm1580 = vcmp.lt.s32.totalorder %v1578, %v1579
    %v1581 = vsel %vm1580, %v1578, %v1579
    %v1582 = vrot.slane %v1581, 2
    %vm1583 = vcmp.lt.s32.totalorder %v1581, %v1582
    %v1584 = vsel %vm1583, %v1581, %v1582
    %v1585 = vrot.slane %v1584, 1
    %vm1586 = vcmp.lt.s32.totalorder %v1584, %v1585
    %v1587 = vsel %vm1586, %v1584, %v1585
    %v1588 = vsel %vm395, %v1535, 2147483647
    %v1589 = vrot.slane %v1588, 4
    %vm1590 = vcmp.lt.s32.totalorder %v1588, %v1589
    %v1591 = vsel %vm1590, %v1588, %v1589
    %v1592 = vrot.slane %v1591, 2
    %vm1593 = vcmp.lt.s32.totalorder %v1591, %v1592
    %v1594 = vsel %vm1593, %v1591, %v1592
    %v1595 = vrot.slane %v1594, 1
    %vm1596 = vcmp.lt.s32.totalorder %v1594, %v1595
    %v1597 = vsel %vm1596, %v1594, %v1595
    %v1598 = vsel %vm395, %v1536, 2147483647
    %v1599 = vrot.slane %v1598, 4
    %vm1600 = vcmp.lt.s32.totalorder %v1598, %v1599
    %v1601 = vsel %vm1600, %v1598, %v1599
    %v1602 = vrot.slane %v1601, 2
    %vm1603 = vcmp.lt.s32.totalorder %v1601, %v1602
    %v1604 = vsel %vm1603, %v1601, %v1602
    %v1605 = vrot.slane %v1604, 1
    %vm1606 = vcmp.lt.s32.totalorder %v1604, %v1605
    %v1607 = vsel %vm1606, %v1604, %v1605
    %v1608 = vsel %vm395, %v1537, 2147483647
    %v1609 = vrot.slane %v1608, 4
    %vm1610 = vcmp.lt.s32.totalorder %v1608, %v1609
    %v1611 = vsel %vm1610, %v1608, %v1609
    %v1612 = vrot.slane %v1611, 2
    %vm1613 = vcmp.lt.s32.totalorder %v1611, %v1612
    %v1614 = vsel %vm1613, %v1611, %v1612
    %v1615 = vrot.slane %v1614, 1
    %vm1616 = vcmp.lt.s32.totalorder %v1614, %v1615
    %v1617 = vsel %vm1616, %v1614, %v1615
    %v1618 = vsel %vm380, %v1557, %v1547
    %v1619 = vsel %vm382, %v1567, %v1618
    %v1620 = vsel %vm384, %v1577, %v1619
    %v1621 = vsel %vm386, %v1587, %v1620
    %v1622 = vsel %vm388, %v1597, %v1621
    %v1623 = vsel %vm390, %v1607, %v1622
    %v1624 = vsel %vm392, %v1617, %v1623
    %s1625 = scalar_lea.vmem [#allocation2], 32
    %1626 = vst.msk [vmem:[%s1625] sm:$0xff] %vm395, %v1624
    %v1628 = vrot.slane %v1340, 1
    %v1629 = vrot.slane %v1340, 2
    %v1630 = vrot.slane %v1340, 3
    %v1631 = vrot.slane %v1340, 4
    %v1632 = vrot.slane %v1340, 5
    %v1633 = vrot.slane %v1340, 6
    %v1634 = vrot.slane %v1340, 7
    %v1643 = vadd.f32 %v1472, %v1340
    %v1644 = vadd.f32 %v1479, %v1628
    %v1645 = vadd.f32 %v1486, %v1629
    %v1646 = vadd.f32 %v1493, %v1630
    %v1647 = vadd.f32 %v1500, %v1631
    %v1648 = vadd.f32 %v1507, %v1632
    %v1649 = vadd.f32 %v1514, %v1633
    %v1650 = vadd.f32 %v1521, %v1634
    %v1651 = vmul.f32 %v1349, %v1340
    %v1652 = vsel %vm395, %v1651, 0.0
    %v1653 = vrot.slane %v1652, 4
    %v1654 = vadd.f32 %v1652, %v1653
    %v1655 = vrot.slane %v1654, 2
    %v1656 = vadd.f32 %v1654, %v1655
    %v1657 = vrot.slane %v1656, 1
    %v1658 = vadd.f32 %v1656, %v1657
    %v1659 = vmul.f32 %v77, %v939
    %v1660 = vmul.f32 %v84, %v939
    %v1661 = vmul.f32 %v91, %v939
    %v1662 = vmul.f32 %v98, %v939
    %v1663 = vmul.f32 %v105, %v939
    %v1664 = vmul.f32 %v112, %v939
    %v1665 = vmul.f32 %v119, %v939
    %v1666 = vmul.f32 %v126, %v939
    %v1667 = vsel %vm395, %v1659, 0.0
    %v1668 = vrot.slane %v1667, 4
    %v1669 = vadd.f32 %v1667, %v1668
    %v1670 = vrot.slane %v1669, 2
    %v1671 = vadd.f32 %v1669, %v1670
    %v1672 = vrot.slane %v1671, 1
    %v1673 = vadd.f32 %v1671, %v1672
    %v1674 = vsel %vm395, %v1660, 0.0
    %v1675 = vrot.slane %v1674, 4
    %v1676 = vadd.f32 %v1674, %v1675
    %v1677 = vrot.slane %v1676, 2
    %v1678 = vadd.f32 %v1676, %v1677
    %v1679 = vrot.slane %v1678, 1
    %v1680 = vadd.f32 %v1678, %v1679
    %v1681 = vsel %vm395, %v1661, 0.0
    %v1682 = vrot.slane %v1681, 4
    %v1683 = vadd.f32 %v1681, %v1682
    %v1684 = vrot.slane %v1683, 2
    %v1685 = vadd.f32 %v1683, %v1684
    %v1686 = vrot.slane %v1685, 1
    %v1687 = vadd.f32 %v1685, %v1686
    %v1688 = vsel %vm395, %v1662, 0.0
    %v1689 = vrot.slane %v1688, 4
    %v1690 = vadd.f32 %v1688, %v1689
    %v1691 = vrot.slane %v1690, 2
    %v1692 = vadd.f32 %v1690, %v1691
    %v1693 = vrot.slane %v1692, 1
    %v1694 = vadd.f32 %v1692, %v1693
    %v1695 = vsel %vm395, %v1663, 0.0
    %v1696 = vrot.slane %v1695, 4
    %v1697 = vadd.f32 %v1695, %v1696
    %v1698 = vrot.slane %v1697, 2
    %v1699 = vadd.f32 %v1697, %v1698
    %v1700 = vrot.slane %v1699, 1
    %v1701 = vadd.f32 %v1699, %v1700
    %v1702 = vsel %vm395, %v1664, 0.0
    %v1703 = vrot.slane %v1702, 4
    %v1704 = vadd.f32 %v1702, %v1703
    %v1705 = vrot.slane %v1704, 2
    %v1706 = vadd.f32 %v1704, %v1705
    %v1707 = vrot.slane %v1706, 1
    %v1708 = vadd.f32 %v1706, %v1707
    %v1709 = vsel %vm395, %v1665, 0.0
    %v1710 = vrot.slane %v1709, 4
    %v1711 = vadd.f32 %v1709, %v1710
    %v1712 = vrot.slane %v1711, 2
    %v1713 = vadd.f32 %v1711, %v1712
    %v1714 = vrot.slane %v1713, 1
    %v1715 = vadd.f32 %v1713, %v1714
    %v1716 = vsel %vm395, %v1666, 0.0
    %v1717 = vrot.slane %v1716, 4
    %v1718 = vadd.f32 %v1716, %v1717
    %v1719 = vrot.slane %v1718, 2
    %v1720 = vadd.f32 %v1718, %v1719
    %v1721 = vrot.slane %v1720, 1
    %v1722 = vadd.f32 %v1720, %v1721
    %v1723 = vadd.f32 %v1338, %v1658
    %v1732 = vsel %vm380, %v1680, %v1673
    %v1733 = vsel %vm382, %v1687, %v1732
    %v1734 = vsel %vm384, %v1694, %v1733
    %v1735 = vsel %vm386, %v1701, %v1734
    %v1736 = vsel %vm388, %v1708, %v1735
    %v1737 = vsel %vm390, %v1715, %v1736
    %v1738 = vsel %vm392, %v1722, %v1737
    %v1740 = vmul.f32 %v1349, %v1738
    %v1741 = vsel %vm395, %v1740, 0.0
    %v1742 = vrot.slane %v1741, 4
    %v1743 = vadd.f32 %v1741, %v1742
    %v1744 = vrot.slane %v1743, 2
    %v1745 = vadd.f32 %v1743, %v1744
    %v1746 = vrot.slane %v1745, 1
    %v1747 = vadd.f32 %v1745, %v1746
    %v1748 = vadd.f32 %v1723, %v1747
    %s1749 = scalar_lea.vmem [#allocation5], 40
    %v1750 = vld [vmem:[%s1749] sm:$0xff]
    %s1751 = scalar_lea.vmem [#allocation8], 5
    %v1752 = vld [vmem:[%s1751] sm:$0x1]
    %v1753 = vlaneseq
    %v1754 = vshrl.u32 %v1753, 7
    %v1755 = vsub.s32 0, %v1754
    %v1756 = vrot.slane %v1752, %v1755
    %vm1757 = vcmp.eq.s32.totalorder %v70, %v1756
    %v1758 = vsel %vm1757, 1, 0
    %v1759 = vcvt.s32.f32 %v1758
    %v1760 = vsel %vm395, %v1434, -inf
    %v1761 = vrot.slane %v1760, 4
    %v1762 = vmax.f32 %v1760, %v1761
    %v1763 = vrot.slane %v1762, 2
    %v1764 = vmax.f32 %v1762, %v1763
    %v1765 = vrot.slane %v1764, 1
    %v1766 = vmax.f32 %v1764, %v1765
    %v1767 = vsub.f32 %v1434, %v1766
    %v1768 = vmul.f32 %v1767, 1.442695
    %v1769 = vpow.pop %v1768
    %1770 = vmatprep.subr.mxu0 0.0
    %1771 = vmatpush1.msra.mxu0 0.0
    %1772 = vmatprep.subr.mxu0 0.0
    %1773 = vmatpush1.msra.mxu0 0.0
    %1774 = vmatprep.subr.mxu0 0.0
    %1775 = vmatpush1.msra.mxu0 0.0
    %1776 = vmatprep.subr.mxu0 0.0
    %1777 = vmatpush1.msra.mxu0 0.0
    %1778 = vmatprep.subr.mxu0 0.0
    %1779 = vmatpush1.msra.mxu0 0.0
    %1780 = vmatprep.subr.mxu0 0.0
    %1781 = vmatpush1.msra.mxu0 0.0
    %1782 = vmatprep.subr.mxu0 0.0
    %1783 = vmatpush1.msra.mxu0 0.0
    %1784 = vmatprep.subr.mxu0 0.0
    %1785 = vmatpush1.msra.mxu0 0.0
    %1786 = vmatprep.subr.mxu0 0.0
    %1787 = vmatpush1.msra.mxu0 0.0
    %1788 = vmatprep.subr.mxu0 0.0
    %1789 = vmatpush1.msra.mxu0 0.0
    %1790 = vmatprep.subr.mxu0 0.0
    %1791 = vmatpush1.msra.mxu0 0.0
    %1792 = vmatprep.subr.mxu0 0.0
    %1793 = vmatpush1.msra.mxu0 0.0
    %1794 = vmatprep.subr.mxu0 0.0
    %1795 = vmatpush1.msra.mxu0 0.0
    %1796 = vmatprep.subr.mxu0 0.0
    %1797 = vmatpush1.msra.mxu0 0.0
    %1798 = vmatprep.subr.mxu0 0.0
    %1799 = vmatpush1.msra.mxu0 0.0
    %1800 = vmatprep.subr.mxu0 0.0
    %1801 = vmatpush1.msra.mxu0 %v1769
    %1802 = vmatprep.subr.mxu0 0.0
    %1803 = vmatpush2.msra.mxu0 0.0
    %1804 = vmatprep.subr.mxu0 0.0
    %1805 = vmatpush2.msra.mxu0 0.0
    %1806 = vmatprep.subr.mxu0 0.0
    %1807 = vmatpush2.msra.mxu0 0.0
    %1808 = vmatprep.subr.mxu0 0.0
    %1809 = vmatpush2.msra.mxu0 0.0
    %1810 = vmatprep.subr.mxu0 0.0
    %1811 = vmatpush2.msra.mxu0 0.0
    %1812 = vmatprep.subr.mxu0 0.0
    %1813 = vmatpush2.msra.mxu0 0.0
    %1814 = vmatprep.subr.mxu0 0.0
    %1815 = vmatpush2.msra.mxu0 0.0
    %1816 = vmatprep.subr.mxu0 0.0
    %1817 = vmatpush2.msra.mxu0 0.0
    %1818 = vmatprep.subr.mxu0 0.0
    %1819 = vmatpush2.msra.mxu0 0.0
    %1820 = vmatprep.subr.mxu0 0.0
    %1821 = vmatpush2.msra.mxu0 0.0
    %1822 = vmatprep.subr.mxu0 0.0
    %1823 = vmatpush2.msra.mxu0 0.0
    %1824 = vmatprep.subr.mxu0 0.0
    %1825 = vmatpush2.msra.mxu0 0.0
    %1826 = vmatprep.subr.mxu0 0.0
    %1827 = vmatpush2.msra.mxu0 0.0
    %1828 = vmatprep.subr.mxu0 0.0
    %1829 = vmatpush2.msra.mxu0 0.0
    %1830 = vmatprep.subr.mxu0 0.0
    %1831 = vmatpush2.msra.mxu0 0.0
    %1832 = vmatprep.subr.mxu0 0.0
    %1833 = vmatpush2.msra.mxu0 0.0
    %1834 = vmatprep.mubr.f32.mxu0 0.0
    %1835 = vmatmul.mubr.f32.gmra.mxu0 %v159
    %v1836 = vpop.f32.mrf.mxu0
    %v1837 = vadd.f32 0.0, %v1836
    %v1838 = vpop.f32.mrf.mxu0
    %1839 = vdwg.mxu0
    %v1840 = vlog2.pop %v1837
    %v1841 = vmul.f32 %v1840, 0.6931472
    %v1842 = vadd.f32 %v1841, %v65
    %v1843 = vadd.f32 %v1842, %v1766
    %v1844 = vadd.f32 %v1843, %v1750
    %v1853 = vrot.slane %v1644, 7
    %v1854 = vsel %vm380, %v1853, %v1643
    %v1855 = vrot.slane %v1645, 6
    %v1856 = vsel %vm382, %v1855, %v1854
    %v1857 = vrot.slane %v1646, 5
    %v1858 = vsel %vm384, %v1857, %v1856
    %v1859 = vrot.slane %v1647, 4
    %v1860 = vsel %vm386, %v1859, %v1858
    %v1861 = vrot.slane %v1648, 3
    %v1862 = vsel %vm388, %v1861, %v1860
    %v1863 = vrot.slane %v1649, 2
    %v1864 = vsel %vm390, %v1863, %v1862
    %v1865 = vrot.slane %v1650, 1
    %v1866 = vsel %vm392, %v1865, %v1864
    %v1868 = vadd.f32 %v77, %v1866
    %v1869 = vadd.f32 %v84, %v1866
    %v1870 = vadd.f32 %v91, %v1866
    %v1871 = vadd.f32 %v98, %v1866
    %v1872 = vadd.f32 %v105, %v1866
    %v1873 = vadd.f32 %v112, %v1866
    %v1874 = vadd.f32 %v119, %v1866
    %v1875 = vadd.f32 %v126, %v1866
    %v1876 = vsel %vm395, %v1868, -inf
    %v1877 = vrot.slane %v1876, 4
    %v1878 = vmax.f32 %v1876, %v1877
    %v1879 = vrot.slane %v1878, 2
    %v1880 = vmax.f32 %v1878, %v1879
    %v1881 = vrot.slane %v1880, 1
    %v1882 = vmax.f32 %v1880, %v1881
    %v1883 = vsel %vm395, %v1869, -inf
    %v1884 = vrot.slane %v1883, 4
    %v1885 = vmax.f32 %v1883, %v1884
    %v1886 = vrot.slane %v1885, 2
    %v1887 = vmax.f32 %v1885, %v1886
    %v1888 = vrot.slane %v1887, 1
    %v1889 = vmax.f32 %v1887, %v1888
    %v1890 = vsel %vm395, %v1870, -inf
    %v1891 = vrot.slane %v1890, 4
    %v1892 = vmax.f32 %v1890, %v1891
    %v1893 = vrot.slane %v1892, 2
    %v1894 = vmax.f32 %v1892, %v1893
    %v1895 = vrot.slane %v1894, 1
    %v1896 = vmax.f32 %v1894, %v1895
    %v1897 = vsel %vm395, %v1871, -inf
    %v1898 = vrot.slane %v1897, 4
    %v1899 = vmax.f32 %v1897, %v1898
    %v1900 = vrot.slane %v1899, 2
    %v1901 = vmax.f32 %v1899, %v1900
    %v1902 = vrot.slane %v1901, 1
    %v1903 = vmax.f32 %v1901, %v1902
    %v1904 = vsel %vm395, %v1872, -inf
    %v1905 = vrot.slane %v1904, 4
    %v1906 = vmax.f32 %v1904, %v1905
    %v1907 = vrot.slane %v1906, 2
    %v1908 = vmax.f32 %v1906, %v1907
    %v1909 = vrot.slane %v1908, 1
    %v1910 = vmax.f32 %v1908, %v1909
    %v1911 = vsel %vm395, %v1873, -inf
    %v1912 = vrot.slane %v1911, 4
    %v1913 = vmax.f32 %v1911, %v1912
    %v1914 = vrot.slane %v1913, 2
    %v1915 = vmax.f32 %v1913, %v1914
    %v1916 = vrot.slane %v1915, 1
    %v1917 = vmax.f32 %v1915, %v1916
    %v1918 = vsel %vm395, %v1874, -inf
    %v1919 = vrot.slane %v1918, 4
    %v1920 = vmax.f32 %v1918, %v1919
    %v1921 = vrot.slane %v1920, 2
    %v1922 = vmax.f32 %v1920, %v1921
    %v1923 = vrot.slane %v1922, 1
    %v1924 = vmax.f32 %v1922, %v1923
    %v1925 = vsel %vm395, %v1875, -inf
    %v1926 = vrot.slane %v1925, 4
    %v1927 = vmax.f32 %v1925, %v1926
    %v1928 = vrot.slane %v1927, 2
    %v1929 = vmax.f32 %v1927, %v1928
    %v1930 = vrot.slane %v1929, 1
    %v1931 = vmax.f32 %v1929, %v1930
    %vm1932 = vcmp.eq.f32.partialorder %v1868, %v1882
    %vm1933 = vcmp.eq.f32.partialorder %v1869, %v1889
    %vm1934 = vcmp.eq.f32.partialorder %v1870, %v1896
    %vm1935 = vcmp.eq.f32.partialorder %v1871, %v1903
    %vm1936 = vcmp.eq.f32.partialorder %v1872, %v1910
    %vm1937 = vcmp.eq.f32.partialorder %v1873, %v1917
    %vm1938 = vcmp.eq.f32.partialorder %v1874, %v1924
    %vm1939 = vcmp.eq.f32.partialorder %v1875, %v1931
    %v1940 = vsel %vm1932, %v70, 8
    %v1941 = vsel %vm1933, %v70, 8
    %v1942 = vsel %vm1934, %v70, 8
    %v1943 = vsel %vm1935, %v70, 8
    %v1944 = vsel %vm1936, %v70, 8
    %v1945 = vsel %vm1937, %v70, 8
    %v1946 = vsel %vm1938, %v70, 8
    %v1947 = vsel %vm1939, %v70, 8
    %v1948 = vsel %vm395, %v1940, 2147483647
    %v1949 = vrot.slane %v1948, 4
    %vm1950 = vcmp.lt.s32.totalorder %v1948, %v1949
    %v1951 = vsel %vm1950, %v1948, %v1949
    %v1952 = vrot.slane %v1951, 2
    %vm1953 = vcmp.lt.s32.totalorder %v1951, %v1952
    %v1954 = vsel %vm1953, %v1951, %v1952
    %v1955 = vrot.slane %v1954, 1
    %vm1956 = vcmp.lt.s32.totalorder %v1954, %v1955
    %v1957 = vsel %vm1956, %v1954, %v1955
    %v1958 = vsel %vm395, %v1941, 2147483647
    %v1959 = vrot.slane %v1958, 4
    %vm1960 = vcmp.lt.s32.totalorder %v1958, %v1959
    %v1961 = vsel %vm1960, %v1958, %v1959
    %v1962 = vrot.slane %v1961, 2
    %vm1963 = vcmp.lt.s32.totalorder %v1961, %v1962
    %v1964 = vsel %vm1963, %v1961, %v1962
    %v1965 = vrot.slane %v1964, 1
    %vm1966 = vcmp.lt.s32.totalorder %v1964, %v1965
    %v1967 = vsel %vm1966, %v1964, %v1965
    %v1968 = vsel %vm395, %v1942, 2147483647
    %v1969 = vrot.slane %v1968, 4
    %vm1970 = vcmp.lt.s32.totalorder %v1968, %v1969
    %v1971 = vsel %vm1970, %v1968, %v1969
    %v1972 = vrot.slane %v1971, 2
    %vm1973 = vcmp.lt.s32.totalorder %v1971, %v1972
    %v1974 = vsel %vm1973, %v1971, %v1972
    %v1975 = vrot.slane %v1974, 1
    %vm1976 = vcmp.lt.s32.totalorder %v1974, %v1975
    %v1977 = vsel %vm1976, %v1974, %v1975
    %v1978 = vsel %vm395, %v1943, 2147483647
    %v1979 = vrot.slane %v1978, 4
    %vm1980 = vcmp.lt.s32.totalorder %v1978, %v1979
    %v1981 = vsel %vm1980, %v1978, %v1979
    %v1982 = vrot.slane %v1981, 2
    %vm1983 = vcmp.lt.s32.totalorder %v1981, %v1982
    %v1984 = vsel %vm1983, %v1981, %v1982
    %v1985 = vrot.slane %v1984, 1
    %vm1986 = vcmp.lt.s32.totalorder %v1984, %v1985
    %v1987 = vsel %vm1986, %v1984, %v1985
    %v1988 = vsel %vm395, %v1944, 2147483647
    %v1989 = vrot.slane %v1988, 4
    %vm1990 = vcmp.lt.s32.totalorder %v1988, %v1989
    %v1991 = vsel %vm1990, %v1988, %v1989
    %v1992 = vrot.slane %v1991, 2
    %vm1993 = vcmp.lt.s32.totalorder %v1991, %v1992
    %v1994 = vsel %vm1993, %v1991, %v1992
    %v1995 = vrot.slane %v1994, 1
    %vm1996 = vcmp.lt.s32.totalorder %v1994, %v1995
    %v1997 = vsel %vm1996, %v1994, %v1995
    %v1998 = vsel %vm395, %v1945, 2147483647
    %v1999 = vrot.slane %v1998, 4
    %vm2000 = vcmp.lt.s32.totalorder %v1998, %v1999
    %v2001 = vsel %vm2000, %v1998, %v1999
    %v2002 = vrot.slane %v2001, 2
    %vm2003 = vcmp.lt.s32.totalorder %v2001, %v2002
    %v2004 = vsel %vm2003, %v2001, %v2002
    %v2005 = vrot.slane %v2004, 1
    %vm2006 = vcmp.lt.s32.totalorder %v2004, %v2005
    %v2007 = vsel %vm2006, %v2004, %v2005
    %v2008 = vsel %vm395, %v1946, 2147483647
    %v2009 = vrot.slane %v2008, 4
    %vm2010 = vcmp.lt.s32.totalorder %v2008, %v2009
    %v2011 = vsel %vm2010, %v2008, %v2009
    %v2012 = vrot.slane %v2011, 2
    %vm2013 = vcmp.lt.s32.totalorder %v2011, %v2012
    %v2014 = vsel %vm2013, %v2011, %v2012
    %v2015 = vrot.slane %v2014, 1
    %vm2016 = vcmp.lt.s32.totalorder %v2014, %v2015
    %v2017 = vsel %vm2016, %v2014, %v2015
    %v2018 = vsel %vm395, %v1947, 2147483647
    %v2019 = vrot.slane %v2018, 4
    %vm2020 = vcmp.lt.s32.totalorder %v2018, %v2019
    %v2021 = vsel %vm2020, %v2018, %v2019
    %v2022 = vrot.slane %v2021, 2
    %vm2023 = vcmp.lt.s32.totalorder %v2021, %v2022
    %v2024 = vsel %vm2023, %v2021, %v2022
    %v2025 = vrot.slane %v2024, 1
    %vm2026 = vcmp.lt.s32.totalorder %v2024, %v2025
    %v2027 = vsel %vm2026, %v2024, %v2025
    %v2028 = vsel %vm380, %v1967, %v1957
    %v2029 = vsel %vm382, %v1977, %v2028
    %v2030 = vsel %vm384, %v1987, %v2029
    %v2031 = vsel %vm386, %v1997, %v2030
    %v2032 = vsel %vm388, %v2007, %v2031
    %v2033 = vsel %vm390, %v2017, %v2032
    %v2034 = vsel %vm392, %v2027, %v2033
    %s2035 = scalar_lea.vmem [#allocation2], 40
    %2036 = vst.msk [vmem:[%s2035] sm:$0xff] %vm395, %v2034
    %v2038 = vrot.slane %v1750, 1
    %v2039 = vrot.slane %v1750, 2
    %v2040 = vrot.slane %v1750, 3
    %v2041 = vrot.slane %v1750, 4
    %v2042 = vrot.slane %v1750, 5
    %v2043 = vrot.slane %v1750, 6
    %v2044 = vrot.slane %v1750, 7
    %v2053 = vadd.f32 %v1882, %v1750
    %v2054 = vadd.f32 %v1889, %v2038
    %v2055 = vadd.f32 %v1896, %v2039
    %v2056 = vadd.f32 %v1903, %v2040
    %v2057 = vadd.f32 %v1910, %v2041
    %v2058 = vadd.f32 %v1917, %v2042
    %v2059 = vadd.f32 %v1924, %v2043
    %v2060 = vadd.f32 %v1931, %v2044
    %v2061 = vmul.f32 %v1759, %v1750
    %v2062 = vsel %vm395, %v2061, 0.0
    %v2063 = vrot.slane %v2062, 4
    %v2064 = vadd.f32 %v2062, %v2063
    %v2065 = vrot.slane %v2064, 2
    %v2066 = vadd.f32 %v2064, %v2065
    %v2067 = vrot.slane %v2066, 1
    %v2068 = vadd.f32 %v2066, %v2067
    %v2069 = vmul.f32 %v77, %v1349
    %v2070 = vmul.f32 %v84, %v1349
    %v2071 = vmul.f32 %v91, %v1349
    %v2072 = vmul.f32 %v98, %v1349
    %v2073 = vmul.f32 %v105, %v1349
    %v2074 = vmul.f32 %v112, %v1349
    %v2075 = vmul.f32 %v119, %v1349
    %v2076 = vmul.f32 %v126, %v1349
    %v2077 = vsel %vm395, %v2069, 0.0
    %v2078 = vrot.slane %v2077, 4
    %v2079 = vadd.f32 %v2077, %v2078
    %v2080 = vrot.slane %v2079, 2
    %v2081 = vadd.f32 %v2079, %v2080
    %v2082 = vrot.slane %v2081, 1
    %v2083 = vadd.f32 %v2081, %v2082
    %v2084 = vsel %vm395, %v2070, 0.0
    %v2085 = vrot.slane %v2084, 4
    %v2086 = vadd.f32 %v2084, %v2085
    %v2087 = vrot.slane %v2086, 2
    %v2088 = vadd.f32 %v2086, %v2087
    %v2089 = vrot.slane %v2088, 1
    %v2090 = vadd.f32 %v2088, %v2089
    %v2091 = vsel %vm395, %v2071, 0.0
    %v2092 = vrot.slane %v2091, 4
    %v2093 = vadd.f32 %v2091, %v2092
    %v2094 = vrot.slane %v2093, 2
    %v2095 = vadd.f32 %v2093, %v2094
    %v2096 = vrot.slane %v2095, 1
    %v2097 = vadd.f32 %v2095, %v2096
    %v2098 = vsel %vm395, %v2072, 0.0
    %v2099 = vrot.slane %v2098, 4
    %v2100 = vadd.f32 %v2098, %v2099
    %v2101 = vrot.slane %v2100, 2
    %v2102 = vadd.f32 %v2100, %v2101
    %v2103 = vrot.slane %v2102, 1
    %v2104 = vadd.f32 %v2102, %v2103
    %v2105 = vsel %vm395, %v2073, 0.0
    %v2106 = vrot.slane %v2105, 4
    %v2107 = vadd.f32 %v2105, %v2106
    %v2108 = vrot.slane %v2107, 2
    %v2109 = vadd.f32 %v2107, %v2108
    %v2110 = vrot.slane %v2109, 1
    %v2111 = vadd.f32 %v2109, %v2110
    %v2112 = vsel %vm395, %v2074, 0.0
    %v2113 = vrot.slane %v2112, 4
    %v2114 = vadd.f32 %v2112, %v2113
    %v2115 = vrot.slane %v2114, 2
    %v2116 = vadd.f32 %v2114, %v2115
    %v2117 = vrot.slane %v2116, 1
    %v2118 = vadd.f32 %v2116, %v2117
    %v2119 = vsel %vm395, %v2075, 0.0
    %v2120 = vrot.slane %v2119, 4
    %v2121 = vadd.f32 %v2119, %v2120
    %v2122 = vrot.slane %v2121, 2
    %v2123 = vadd.f32 %v2121, %v2122
    %v2124 = vrot.slane %v2123, 1
    %v2125 = vadd.f32 %v2123, %v2124
    %v2126 = vsel %vm395, %v2076, 0.0
    %v2127 = vrot.slane %v2126, 4
    %v2128 = vadd.f32 %v2126, %v2127
    %v2129 = vrot.slane %v2128, 2
    %v2130 = vadd.f32 %v2128, %v2129
    %v2131 = vrot.slane %v2130, 1
    %v2132 = vadd.f32 %v2130, %v2131
    %v2133 = vadd.f32 %v1748, %v2068
    %v2142 = vsel %vm380, %v2090, %v2083
    %v2143 = vsel %vm382, %v2097, %v2142
    %v2144 = vsel %vm384, %v2104, %v2143
    %v2145 = vsel %vm386, %v2111, %v2144
    %v2146 = vsel %vm388, %v2118, %v2145
    %v2147 = vsel %vm390, %v2125, %v2146
    %v2148 = vsel %vm392, %v2132, %v2147
    %v2150 = vmul.f32 %v1759, %v2148
    %v2151 = vsel %vm395, %v2150, 0.0
    %v2152 = vrot.slane %v2151, 4
    %v2153 = vadd.f32 %v2151, %v2152
    %v2154 = vrot.slane %v2153, 2
    %v2155 = vadd.f32 %v2153, %v2154
    %v2156 = vrot.slane %v2155, 1
    %v2157 = vadd.f32 %v2155, %v2156
    %v2158 = vadd.f32 %v2133, %v2157
    %s2159 = scalar_lea.vmem [#allocation5], 48
    %v2160 = vld [vmem:[%s2159] sm:$0xff]
    %s2161 = scalar_lea.vmem [#allocation8], 6
    %v2162 = vld [vmem:[%s2161] sm:$0x1]
    %v2163 = vlaneseq
    %v2164 = vshrl.u32 %v2163, 7
    %v2165 = vsub.s32 0, %v2164
    %v2166 = vrot.slane %v2162, %v2165
    %vm2167 = vcmp.eq.s32.totalorder %v70, %v2166
    %v2168 = vsel %vm2167, 1, 0
    %v2169 = vcvt.s32.f32 %v2168
    %v2170 = vsel %vm395, %v1844, -inf
    %v2171 = vrot.slane %v2170, 4
    %v2172 = vmax.f32 %v2170, %v2171
    %v2173 = vrot.slane %v2172, 2
    %v2174 = vmax.f32 %v2172, %v2173
    %v2175 = vrot.slane %v2174, 1
    %v2176 = vmax.f32 %v2174, %v2175
    %v2177 = vsub.f32 %v1844, %v2176
    %v2178 = vmul.f32 %v2177, 1.442695
    %v2179 = vpow.pop %v2178
    %2180 = vmatprep.subr.mxu0 0.0
    %2181 = vmatpush1.msra.mxu0 0.0
    %2182 = vmatprep.subr.mxu0 0.0
    %2183 = vmatpush1.msra.mxu0 0.0
    %2184 = vmatprep.subr.mxu0 0.0
    %2185 = vmatpush1.msra.mxu0 0.0
    %2186 = vmatprep.subr.mxu0 0.0
    %2187 = vmatpush1.msra.mxu0 0.0
    %2188 = vmatprep.subr.mxu0 0.0
    %2189 = vmatpush1.msra.mxu0 0.0
    %2190 = vmatprep.subr.mxu0 0.0
    %2191 = vmatpush1.msra.mxu0 0.0
    %2192 = vmatprep.subr.mxu0 0.0
    %2193 = vmatpush1.msra.mxu0 0.0
    %2194 = vmatprep.subr.mxu0 0.0
    %2195 = vmatpush1.msra.mxu0 0.0
    %2196 = vmatprep.subr.mxu0 0.0
    %2197 = vmatpush1.msra.mxu0 0.0
    %2198 = vmatprep.subr.mxu0 0.0
    %2199 = vmatpush1.msra.mxu0 0.0
    %2200 = vmatprep.subr.mxu0 0.0
    %2201 = vmatpush1.msra.mxu0 0.0
    %2202 = vmatprep.subr.mxu0 0.0
    %2203 = vmatpush1.msra.mxu0 0.0
    %2204 = vmatprep.subr.mxu0 0.0
    %2205 = vmatpush1.msra.mxu0 0.0
    %2206 = vmatprep.subr.mxu0 0.0
    %2207 = vmatpush1.msra.mxu0 0.0
    %2208 = vmatprep.subr.mxu0 0.0
    %2209 = vmatpush1.msra.mxu0 0.0
    %2210 = vmatprep.subr.mxu0 0.0
    %2211 = vmatpush1.msra.mxu0 %v2179
    %2212 = vmatprep.subr.mxu0 0.0
    %2213 = vmatpush2.msra.mxu0 0.0
    %2214 = vmatprep.subr.mxu0 0.0
    %2215 = vmatpush2.msra.mxu0 0.0
    %2216 = vmatprep.subr.mxu0 0.0
    %2217 = vmatpush2.msra.mxu0 0.0
    %2218 = vmatprep.subr.mxu0 0.0
    %2219 = vmatpush2.msra.mxu0 0.0
    %2220 = vmatprep.subr.mxu0 0.0
    %2221 = vmatpush2.msra.mxu0 0.0
    %2222 = vmatprep.subr.mxu0 0.0
    %2223 = vmatpush2.msra.mxu0 0.0
    %2224 = vmatprep.subr.mxu0 0.0
    %2225 = vmatpush2.msra.mxu0 0.0
    %2226 = vmatprep.subr.mxu0 0.0
    %2227 = vmatpush2.msra.mxu0 0.0
    %2228 = vmatprep.subr.mxu0 0.0
    %2229 = vmatpush2.msra.mxu0 0.0
    %2230 = vmatprep.subr.mxu0 0.0
    %2231 = vmatpush2.msra.mxu0 0.0
    %2232 = vmatprep.subr.mxu0 0.0
    %2233 = vmatpush2.msra.mxu0 0.0
    %2234 = vmatprep.subr.mxu0 0.0
    %2235 = vmatpush2.msra.mxu0 0.0
    %2236 = vmatprep.subr.mxu0 0.0
    %2237 = vmatpush2.msra.mxu0 0.0
    %2238 = vmatprep.subr.mxu0 0.0
    %2239 = vmatpush2.msra.mxu0 0.0
    %2240 = vmatprep.subr.mxu0 0.0
    %2241 = vmatpush2.msra.mxu0 0.0
    %2242 = vmatprep.subr.mxu0 0.0
    %2243 = vmatpush2.msra.mxu0 0.0
    %2244 = vmatprep.mubr.f32.mxu0 0.0
    %2245 = vmatmul.mubr.f32.gmra.mxu0 %v159
    %v2246 = vpop.f32.mrf.mxu0
    %v2247 = vadd.f32 0.0, %v2246
    %v2248 = vpop.f32.mrf.mxu0
    %2249 = vdwg.mxu0
    %v2250 = vlog2.pop %v2247
    %v2251 = vmul.f32 %v2250, 0.6931472
    %v2252 = vadd.f32 %v2251, %v65
    %v2253 = vadd.f32 %v2252, %v2176
    %v2254 = vadd.f32 %v2253, %v2160
    %v2263 = vrot.slane %v2054, 7
    %v2264 = vsel %vm380, %v2263, %v2053
    %v2265 = vrot.slane %v2055, 6
    %v2266 = vsel %vm382, %v2265, %v2264
    %v2267 = vrot.slane %v2056, 5
    %v2268 = vsel %vm384, %v2267, %v2266
    %v2269 = vrot.slane %v2057, 4
    %v2270 = vsel %vm386, %v2269, %v2268
    %v2271 = vrot.slane %v2058, 3
    %v2272 = vsel %vm388, %v2271, %v2270
    %v2273 = vrot.slane %v2059, 2
    %v2274 = vsel %vm390, %v2273, %v2272
    %v2275 = vrot.slane %v2060, 1
    %v2276 = vsel %vm392, %v2275, %v2274
    %v2278 = vadd.f32 %v77, %v2276
    %v2279 = vadd.f32 %v84, %v2276
    %v2280 = vadd.f32 %v91, %v2276
    %v2281 = vadd.f32 %v98, %v2276
    %v2282 = vadd.f32 %v105, %v2276
    %v2283 = vadd.f32 %v112, %v2276
    %v2284 = vadd.f32 %v119, %v2276
    %v2285 = vadd.f32 %v126, %v2276
    %v2286 = vsel %vm395, %v2278, -inf
    %v2287 = vrot.slane %v2286, 4
    %v2288 = vmax.f32 %v2286, %v2287
    %v2289 = vrot.slane %v2288, 2
    %v2290 = vmax.f32 %v2288, %v2289
    %v2291 = vrot.slane %v2290, 1
    %v2292 = vmax.f32 %v2290, %v2291
    %v2293 = vsel %vm395, %v2279, -inf
    %v2294 = vrot.slane %v2293, 4
    %v2295 = vmax.f32 %v2293, %v2294
    %v2296 = vrot.slane %v2295, 2
    %v2297 = vmax.f32 %v2295, %v2296
    %v2298 = vrot.slane %v2297, 1
    %v2299 = vmax.f32 %v2297, %v2298
    %v2300 = vsel %vm395, %v2280, -inf
    %v2301 = vrot.slane %v2300, 4
    %v2302 = vmax.f32 %v2300, %v2301
    %v2303 = vrot.slane %v2302, 2
    %v2304 = vmax.f32 %v2302, %v2303
    %v2305 = vrot.slane %v2304, 1
    %v2306 = vmax.f32 %v2304, %v2305
    %v2307 = vsel %vm395, %v2281, -inf
    %v2308 = vrot.slane %v2307, 4
    %v2309 = vmax.f32 %v2307, %v2308
    %v2310 = vrot.slane %v2309, 2
    %v2311 = vmax.f32 %v2309, %v2310
    %v2312 = vrot.slane %v2311, 1
    %v2313 = vmax.f32 %v2311, %v2312
    %v2314 = vsel %vm395, %v2282, -inf
    %v2315 = vrot.slane %v2314, 4
    %v2316 = vmax.f32 %v2314, %v2315
    %v2317 = vrot.slane %v2316, 2
    %v2318 = vmax.f32 %v2316, %v2317
    %v2319 = vrot.slane %v2318, 1
    %v2320 = vmax.f32 %v2318, %v2319
    %v2321 = vsel %vm395, %v2283, -inf
    %v2322 = vrot.slane %v2321, 4
    %v2323 = vmax.f32 %v2321, %v2322
    %v2324 = vrot.slane %v2323, 2
    %v2325 = vmax.f32 %v2323, %v2324
    %v2326 = vrot.slane %v2325, 1
    %v2327 = vmax.f32 %v2325, %v2326
    %v2328 = vsel %vm395, %v2284, -inf
    %v2329 = vrot.slane %v2328, 4
    %v2330 = vmax.f32 %v2328, %v2329
    %v2331 = vrot.slane %v2330, 2
    %v2332 = vmax.f32 %v2330, %v2331
    %v2333 = vrot.slane %v2332, 1
    %v2334 = vmax.f32 %v2332, %v2333
    %v2335 = vsel %vm395, %v2285, -inf
    %v2336 = vrot.slane %v2335, 4
    %v2337 = vmax.f32 %v2335, %v2336
    %v2338 = vrot.slane %v2337, 2
    %v2339 = vmax.f32 %v2337, %v2338
    %v2340 = vrot.slane %v2339, 1
    %v2341 = vmax.f32 %v2339, %v2340
    %vm2342 = vcmp.eq.f32.partialorder %v2278, %v2292
    %vm2343 = vcmp.eq.f32.partialorder %v2279, %v2299
    %vm2344 = vcmp.eq.f32.partialorder %v2280, %v2306
    %vm2345 = vcmp.eq.f32.partialorder %v2281, %v2313
    %vm2346 = vcmp.eq.f32.partialorder %v2282, %v2320
    %vm2347 = vcmp.eq.f32.partialorder %v2283, %v2327
    %vm2348 = vcmp.eq.f32.partialorder %v2284, %v2334
    %vm2349 = vcmp.eq.f32.partialorder %v2285, %v2341
    %v2350 = vsel %vm2342, %v70, 8
    %v2351 = vsel %vm2343, %v70, 8
    %v2352 = vsel %vm2344, %v70, 8
    %v2353 = vsel %vm2345, %v70, 8
    %v2354 = vsel %vm2346, %v70, 8
    %v2355 = vsel %vm2347, %v70, 8
    %v2356 = vsel %vm2348, %v70, 8
    %v2357 = vsel %vm2349, %v70, 8
    %v2358 = vsel %vm395, %v2350, 2147483647
    %v2359 = vrot.slane %v2358, 4
    %vm2360 = vcmp.lt.s32.totalorder %v2358, %v2359
    %v2361 = vsel %vm2360, %v2358, %v2359
    %v2362 = vrot.slane %v2361, 2
    %vm2363 = vcmp.lt.s32.totalorder %v2361, %v2362
    %v2364 = vsel %vm2363, %v2361, %v2362
    %v2365 = vrot.slane %v2364, 1
    %vm2366 = vcmp.lt.s32.totalorder %v2364, %v2365
    %v2367 = vsel %vm2366, %v2364, %v2365
    %v2368 = vsel %vm395, %v2351, 2147483647
    %v2369 = vrot.slane %v2368, 4
    %vm2370 = vcmp.lt.s32.totalorder %v2368, %v2369
    %v2371 = vsel %vm2370, %v2368, %v2369
    %v2372 = vrot.slane %v2371, 2
    %vm2373 = vcmp.lt.s32.totalorder %v2371, %v2372
    %v2374 = vsel %vm2373, %v2371, %v2372
    %v2375 = vrot.slane %v2374, 1
    %vm2376 = vcmp.lt.s32.totalorder %v2374, %v2375
    %v2377 = vsel %vm2376, %v2374, %v2375
    %v2378 = vsel %vm395, %v2352, 2147483647
    %v2379 = vrot.slane %v2378, 4
    %vm2380 = vcmp.lt.s32.totalorder %v2378, %v2379
    %v2381 = vsel %vm2380, %v2378, %v2379
    %v2382 = vrot.slane %v2381, 2
    %vm2383 = vcmp.lt.s32.totalorder %v2381, %v2382
    %v2384 = vsel %vm2383, %v2381, %v2382
    %v2385 = vrot.slane %v2384, 1
    %vm2386 = vcmp.lt.s32.totalorder %v2384, %v2385
    %v2387 = vsel %vm2386, %v2384, %v2385
    %v2388 = vsel %vm395, %v2353, 2147483647
    %v2389 = vrot.slane %v2388, 4
    %vm2390 = vcmp.lt.s32.totalorder %v2388, %v2389
    %v2391 = vsel %vm2390, %v2388, %v2389
    %v2392 = vrot.slane %v2391, 2
    %vm2393 = vcmp.lt.s32.totalorder %v2391, %v2392
    %v2394 = vsel %vm2393, %v2391, %v2392
    %v2395 = vrot.slane %v2394, 1
    %vm2396 = vcmp.lt.s32.totalorder %v2394, %v2395
    %v2397 = vsel %vm2396, %v2394, %v2395
    %v2398 = vsel %vm395, %v2354, 2147483647
    %v2399 = vrot.slane %v2398, 4
    %vm2400 = vcmp.lt.s32.totalorder %v2398, %v2399
    %v2401 = vsel %vm2400, %v2398, %v2399
    %v2402 = vrot.slane %v2401, 2
    %vm2403 = vcmp.lt.s32.totalorder %v2401, %v2402
    %v2404 = vsel %vm2403, %v2401, %v2402
    %v2405 = vrot.slane %v2404, 1
    %vm2406 = vcmp.lt.s32.totalorder %v2404, %v2405
    %v2407 = vsel %vm2406, %v2404, %v2405
    %v2408 = vsel %vm395, %v2355, 2147483647
    %v2409 = vrot.slane %v2408, 4
    %vm2410 = vcmp.lt.s32.totalorder %v2408, %v2409
    %v2411 = vsel %vm2410, %v2408, %v2409
    %v2412 = vrot.slane %v2411, 2
    %vm2413 = vcmp.lt.s32.totalorder %v2411, %v2412
    %v2414 = vsel %vm2413, %v2411, %v2412
    %v2415 = vrot.slane %v2414, 1
    %vm2416 = vcmp.lt.s32.totalorder %v2414, %v2415
    %v2417 = vsel %vm2416, %v2414, %v2415
    %v2418 = vsel %vm395, %v2356, 2147483647
    %v2419 = vrot.slane %v2418, 4
    %vm2420 = vcmp.lt.s32.totalorder %v2418, %v2419
    %v2421 = vsel %vm2420, %v2418, %v2419
    %v2422 = vrot.slane %v2421, 2
    %vm2423 = vcmp.lt.s32.totalorder %v2421, %v2422
    %v2424 = vsel %vm2423, %v2421, %v2422
    %v2425 = vrot.slane %v2424, 1
    %vm2426 = vcmp.lt.s32.totalorder %v2424, %v2425
    %v2427 = vsel %vm2426, %v2424, %v2425
    %v2428 = vsel %vm395, %v2357, 2147483647
    %v2429 = vrot.slane %v2428, 4
    %vm2430 = vcmp.lt.s32.totalorder %v2428, %v2429
    %v2431 = vsel %vm2430, %v2428, %v2429
    %v2432 = vrot.slane %v2431, 2
    %vm2433 = vcmp.lt.s32.totalorder %v2431, %v2432
    %v2434 = vsel %vm2433, %v2431, %v2432
    %v2435 = vrot.slane %v2434, 1
    %vm2436 = vcmp.lt.s32.totalorder %v2434, %v2435
    %v2437 = vsel %vm2436, %v2434, %v2435
    %v2438 = vsel %vm380, %v2377, %v2367
    %v2439 = vsel %vm382, %v2387, %v2438
    %v2440 = vsel %vm384, %v2397, %v2439
    %v2441 = vsel %vm386, %v2407, %v2440
    %v2442 = vsel %vm388, %v2417, %v2441
    %v2443 = vsel %vm390, %v2427, %v2442
    %v2444 = vsel %vm392, %v2437, %v2443
    %s2445 = scalar_lea.vmem [#allocation2], 48
    %2446 = vst.msk [vmem:[%s2445] sm:$0xff] %vm395, %v2444
    %v2448 = vrot.slane %v2160, 1
    %v2449 = vrot.slane %v2160, 2
    %v2450 = vrot.slane %v2160, 3
    %v2451 = vrot.slane %v2160, 4
    %v2452 = vrot.slane %v2160, 5
    %v2453 = vrot.slane %v2160, 6
    %v2454 = vrot.slane %v2160, 7
    %v2463 = vadd.f32 %v2292, %v2160
    %v2464 = vadd.f32 %v2299, %v2448
    %v2465 = vadd.f32 %v2306, %v2449
    %v2466 = vadd.f32 %v2313, %v2450
    %v2467 = vadd.f32 %v2320, %v2451
    %v2468 = vadd.f32 %v2327, %v2452
    %v2469 = vadd.f32 %v2334, %v2453
    %v2470 = vadd.f32 %v2341, %v2454
    %v2471 = vmul.f32 %v2169, %v2160
    %v2472 = vsel %vm395, %v2471, 0.0
    %v2473 = vrot.slane %v2472, 4
    %v2474 = vadd.f32 %v2472, %v2473
    %v2475 = vrot.slane %v2474, 2
    %v2476 = vadd.f32 %v2474, %v2475
    %v2477 = vrot.slane %v2476, 1
    %v2478 = vadd.f32 %v2476, %v2477
    %v2479 = vmul.f32 %v77, %v1759
    %v2480 = vmul.f32 %v84, %v1759
    %v2481 = vmul.f32 %v91, %v1759
    %v2482 = vmul.f32 %v98, %v1759
    %v2483 = vmul.f32 %v105, %v1759
    %v2484 = vmul.f32 %v112, %v1759
    %v2485 = vmul.f32 %v119, %v1759
    %v2486 = vmul.f32 %v126, %v1759
    %v2487 = vsel %vm395, %v2479, 0.0
    %v2488 = vrot.slane %v2487, 4
    %v2489 = vadd.f32 %v2487, %v2488
    %v2490 = vrot.slane %v2489, 2
    %v2491 = vadd.f32 %v2489, %v2490
    %v2492 = vrot.slane %v2491, 1
    %v2493 = vadd.f32 %v2491, %v2492
    %v2494 = vsel %vm395, %v2480, 0.0
    %v2495 = vrot.slane %v2494, 4
    %v2496 = vadd.f32 %v2494, %v2495
    %v2497 = vrot.slane %v2496, 2
    %v2498 = vadd.f32 %v2496, %v2497
    %v2499 = vrot.slane %v2498, 1
    %v2500 = vadd.f32 %v2498, %v2499
    %v2501 = vsel %vm395, %v2481, 0.0
    %v2502 = vrot.slane %v2501, 4
    %v2503 = vadd.f32 %v2501, %v2502
    %v2504 = vrot.slane %v2503, 2
    %v2505 = vadd.f32 %v2503, %v2504
    %v2506 = vrot.slane %v2505, 1
    %v2507 = vadd.f32 %v2505, %v2506
    %v2508 = vsel %vm395, %v2482, 0.0
    %v2509 = vrot.slane %v2508, 4
    %v2510 = vadd.f32 %v2508, %v2509
    %v2511 = vrot.slane %v2510, 2
    %v2512 = vadd.f32 %v2510, %v2511
    %v2513 = vrot.slane %v2512, 1
    %v2514 = vadd.f32 %v2512, %v2513
    %v2515 = vsel %vm395, %v2483, 0.0
    %v2516 = vrot.slane %v2515, 4
    %v2517 = vadd.f32 %v2515, %v2516
    %v2518 = vrot.slane %v2517, 2
    %v2519 = vadd.f32 %v2517, %v2518
    %v2520 = vrot.slane %v2519, 1
    %v2521 = vadd.f32 %v2519, %v2520
    %v2522 = vsel %vm395, %v2484, 0.0
    %v2523 = vrot.slane %v2522, 4
    %v2524 = vadd.f32 %v2522, %v2523
    %v2525 = vrot.slane %v2524, 2
    %v2526 = vadd.f32 %v2524, %v2525
    %v2527 = vrot.slane %v2526, 1
    %v2528 = vadd.f32 %v2526, %v2527
    %v2529 = vsel %vm395, %v2485, 0.0
    %v2530 = vrot.slane %v2529, 4
    %v2531 = vadd.f32 %v2529, %v2530
    %v2532 = vrot.slane %v2531, 2
    %v2533 = vadd.f32 %v2531, %v2532
    %v2534 = vrot.slane %v2533, 1
    %v2535 = vadd.f32 %v2533, %v2534
    %v2536 = vsel %vm395, %v2486, 0.0
    %v2537 = vrot.slane %v2536, 4
    %v2538 = vadd.f32 %v2536, %v2537
    %v2539 = vrot.slane %v2538, 2
    %v2540 = vadd.f32 %v2538, %v2539
    %v2541 = vrot.slane %v2540, 1
    %v2542 = vadd.f32 %v2540, %v2541
    %v2543 = vadd.f32 %v2158, %v2478
    %v2552 = vsel %vm380, %v2500, %v2493
    %v2553 = vsel %vm382, %v2507, %v2552
    %v2554 = vsel %vm384, %v2514, %v2553
    %v2555 = vsel %vm386, %v2521, %v2554
    %v2556 = vsel %vm388, %v2528, %v2555
    %v2557 = vsel %vm390, %v2535, %v2556
    %v2558 = vsel %vm392, %v2542, %v2557
    %v2560 = vmul.f32 %v2169, %v2558
    %v2561 = vsel %vm395, %v2560, 0.0
    %v2562 = vrot.slane %v2561, 4
    %v2563 = vadd.f32 %v2561, %v2562
    %v2564 = vrot.slane %v2563, 2
    %v2565 = vadd.f32 %v2563, %v2564
    %v2566 = vrot.slane %v2565, 1
    %v2567 = vadd.f32 %v2565, %v2566
    %v2568 = vadd.f32 %v2543, %v2567
    %s2569 = scalar_lea.vmem [#allocation5], 56
    %v2570 = vld [vmem:[%s2569] sm:$0xff]
    %s2571 = scalar_lea.vmem [#allocation8], 7
    %v2572 = vld [vmem:[%s2571] sm:$0x1]
    %v2573 = vlaneseq
    %v2574 = vshrl.u32 %v2573, 7
    %v2575 = vsub.s32 0, %v2574
    %v2576 = vrot.slane %v2572, %v2575
    %vm2577 = vcmp.eq.s32.totalorder %v70, %v2576
    %v2578 = vsel %vm2577, 1, 0
    %v2579 = vcvt.s32.f32 %v2578
    %v2580 = vsel %vm395, %v2254, -inf
    %v2581 = vrot.slane %v2580, 4
    %v2582 = vmax.f32 %v2580, %v2581
    %v2583 = vrot.slane %v2582, 2
    %v2584 = vmax.f32 %v2582, %v2583
    %v2585 = vrot.slane %v2584, 1
    %v2586 = vmax.f32 %v2584, %v2585
    %v2587 = vsub.f32 %v2254, %v2586
    %v2588 = vmul.f32 %v2587, 1.442695
    %v2589 = vpow.pop %v2588
    %2590 = vmatprep.subr.mxu0 0.0
    %2591 = vmatpush1.msra.mxu0 0.0
    %2592 = vmatprep.subr.mxu0 0.0
    %2593 = vmatpush1.msra.mxu0 0.0
    %2594 = vmatprep.subr.mxu0 0.0
    %2595 = vmatpush1.msra.mxu0 0.0
    %2596 = vmatprep.subr.mxu0 0.0
    %2597 = vmatpush1.msra.mxu0 0.0
    %2598 = vmatprep.subr.mxu0 0.0
    %2599 = vmatpush1.msra.mxu0 0.0
    %2600 = vmatprep.subr.mxu0 0.0
    %2601 = vmatpush1.msra.mxu0 0.0
    %2602 = vmatprep.subr.mxu0 0.0
    %2603 = vmatpush1.msra.mxu0 0.0
    %2604 = vmatprep.subr.mxu0 0.0
    %2605 = vmatpush1.msra.mxu0 0.0
    %2606 = vmatprep.subr.mxu0 0.0
    %2607 = vmatpush1.msra.mxu0 0.0
    %2608 = vmatprep.subr.mxu0 0.0
    %2609 = vmatpush1.msra.mxu0 0.0
    %2610 = vmatprep.subr.mxu0 0.0
    %2611 = vmatpush1.msra.mxu0 0.0
    %2612 = vmatprep.subr.mxu0 0.0
    %2613 = vmatpush1.msra.mxu0 0.0
    %2614 = vmatprep.subr.mxu0 0.0
    %2615 = vmatpush1.msra.mxu0 0.0
    %2616 = vmatprep.subr.mxu0 0.0
    %2617 = vmatpush1.msra.mxu0 0.0
    %2618 = vmatprep.subr.mxu0 0.0
    %2619 = vmatpush1.msra.mxu0 0.0
    %2620 = vmatprep.subr.mxu0 0.0
    %2621 = vmatpush1.msra.mxu0 %v2589
    %2622 = vmatprep.subr.mxu0 0.0
    %2623 = vmatpush2.msra.mxu0 0.0
    %2624 = vmatprep.subr.mxu0 0.0
    %2625 = vmatpush2.msra.mxu0 0.0
    %2626 = vmatprep.subr.mxu0 0.0
    %2627 = vmatpush2.msra.mxu0 0.0
    %2628 = vmatprep.subr.mxu0 0.0
    %2629 = vmatpush2.msra.mxu0 0.0
    %2630 = vmatprep.subr.mxu0 0.0
    %2631 = vmatpush2.msra.mxu0 0.0
    %2632 = vmatprep.subr.mxu0 0.0
    %2633 = vmatpush2.msra.mxu0 0.0
    %2634 = vmatprep.subr.mxu0 0.0
    %2635 = vmatpush2.msra.mxu0 0.0
    %2636 = vmatprep.subr.mxu0 0.0
    %2637 = vmatpush2.msra.mxu0 0.0
    %2638 = vmatprep.subr.mxu0 0.0
    %2639 = vmatpush2.msra.mxu0 0.0
    %2640 = vmatprep.subr.mxu0 0.0
    %2641 = vmatpush2.msra.mxu0 0.0
    %2642 = vmatprep.subr.mxu0 0.0
    %2643 = vmatpush2.msra.mxu0 0.0
    %2644 = vmatprep.subr.mxu0 0.0
    %2645 = vmatpush2.msra.mxu0 0.0
    %2646 = vmatprep.subr.mxu0 0.0
    %2647 = vmatpush2.msra.mxu0 0.0
    %2648 = vmatprep.subr.mxu0 0.0
    %2649 = vmatpush2.msra.mxu0 0.0
    %2650 = vmatprep.subr.mxu0 0.0
    %2651 = vmatpush2.msra.mxu0 0.0
    %2652 = vmatprep.subr.mxu0 0.0
    %2653 = vmatpush2.msra.mxu0 0.0
    %2654 = vmatprep.mubr.f32.mxu0 0.0
    %2655 = vmatmul.mubr.f32.gmra.mxu0 %v159
    %v2656 = vpop.f32.mrf.mxu0
    %v2657 = vadd.f32 0.0, %v2656
    %v2658 = vpop.f32.mrf.mxu0
    %2659 = vdwg.mxu0
    %v2660 = vlog2.pop %v2657
    %v2661 = vmul.f32 %v2660, 0.6931472
    %v2662 = vadd.f32 %v2661, %v65
    %v2663 = vadd.f32 %v2662, %v2586
    %v2664 = vadd.f32 %v2663, %v2570
    %v2673 = vrot.slane %v2464, 7
    %v2674 = vsel %vm380, %v2673, %v2463
    %v2675 = vrot.slane %v2465, 6
    %v2676 = vsel %vm382, %v2675, %v2674
    %v2677 = vrot.slane %v2466, 5
    %v2678 = vsel %vm384, %v2677, %v2676
    %v2679 = vrot.slane %v2467, 4
    %v2680 = vsel %vm386, %v2679, %v2678
    %v2681 = vrot.slane %v2468, 3
    %v2682 = vsel %vm388, %v2681, %v2680
    %v2683 = vrot.slane %v2469, 2
    %v2684 = vsel %vm390, %v2683, %v2682
    %v2685 = vrot.slane %v2470, 1
    %v2686 = vsel %vm392, %v2685, %v2684
    %v2688 = vadd.f32 %v77, %v2686
    %v2689 = vadd.f32 %v84, %v2686
    %v2690 = vadd.f32 %v91, %v2686
    %v2691 = vadd.f32 %v98, %v2686
    %v2692 = vadd.f32 %v105, %v2686
    %v2693 = vadd.f32 %v112, %v2686
    %v2694 = vadd.f32 %v119, %v2686
    %v2695 = vadd.f32 %v126, %v2686
    %v2696 = vsel %vm395, %v2688, -inf
    %v2697 = vrot.slane %v2696, 4
    %v2698 = vmax.f32 %v2696, %v2697
    %v2699 = vrot.slane %v2698, 2
    %v2700 = vmax.f32 %v2698, %v2699
    %v2701 = vrot.slane %v2700, 1
    %v2702 = vmax.f32 %v2700, %v2701
    %v2703 = vsel %vm395, %v2689, -inf
    %v2704 = vrot.slane %v2703, 4
    %v2705 = vmax.f32 %v2703, %v2704
    %v2706 = vrot.slane %v2705, 2
    %v2707 = vmax.f32 %v2705, %v2706
    %v2708 = vrot.slane %v2707, 1
    %v2709 = vmax.f32 %v2707, %v2708
    %v2710 = vsel %vm395, %v2690, -inf
    %v2711 = vrot.slane %v2710, 4
    %v2712 = vmax.f32 %v2710, %v2711
    %v2713 = vrot.slane %v2712, 2
    %v2714 = vmax.f32 %v2712, %v2713
    %v2715 = vrot.slane %v2714, 1
    %v2716 = vmax.f32 %v2714, %v2715
    %v2717 = vsel %vm395, %v2691, -inf
    %v2718 = vrot.slane %v2717, 4
    %v2719 = vmax.f32 %v2717, %v2718
    %v2720 = vrot.slane %v2719, 2
    %v2721 = vmax.f32 %v2719, %v2720
    %v2722 = vrot.slane %v2721, 1
    %v2723 = vmax.f32 %v2721, %v2722
    %v2724 = vsel %vm395, %v2692, -inf
    %v2725 = vrot.slane %v2724, 4
    %v2726 = vmax.f32 %v2724, %v2725
    %v2727 = vrot.slane %v2726, 2
    %v2728 = vmax.f32 %v2726, %v2727
    %v2729 = vrot.slane %v2728, 1
    %v2730 = vmax.f32 %v2728, %v2729
    %v2731 = vsel %vm395, %v2693, -inf
    %v2732 = vrot.slane %v2731, 4
    %v2733 = vmax.f32 %v2731, %v2732
    %v2734 = vrot.slane %v2733, 2
    %v2735 = vmax.f32 %v2733, %v2734
    %v2736 = vrot.slane %v2735, 1
    %v2737 = vmax.f32 %v2735, %v2736
    %v2738 = vsel %vm395, %v2694, -inf
    %v2739 = vrot.slane %v2738, 4
    %v2740 = vmax.f32 %v2738, %v2739
    %v2741 = vrot.slane %v2740, 2
    %v2742 = vmax.f32 %v2740, %v2741
    %v2743 = vrot.slane %v2742, 1
    %v2744 = vmax.f32 %v2742, %v2743
    %v2745 = vsel %vm395, %v2695, -inf
    %v2746 = vrot.slane %v2745, 4
    %v2747 = vmax.f32 %v2745, %v2746
    %v2748 = vrot.slane %v2747, 2
    %v2749 = vmax.f32 %v2747, %v2748
    %v2750 = vrot.slane %v2749, 1
    %v2751 = vmax.f32 %v2749, %v2750
    %vm2752 = vcmp.eq.f32.partialorder %v2688, %v2702
    %vm2753 = vcmp.eq.f32.partialorder %v2689, %v2709
    %vm2754 = vcmp.eq.f32.partialorder %v2690, %v2716
    %vm2755 = vcmp.eq.f32.partialorder %v2691, %v2723
    %vm2756 = vcmp.eq.f32.partialorder %v2692, %v2730
    %vm2757 = vcmp.eq.f32.partialorder %v2693, %v2737
    %vm2758 = vcmp.eq.f32.partialorder %v2694, %v2744
    %vm2759 = vcmp.eq.f32.partialorder %v2695, %v2751
    %v2760 = vsel %vm2752, %v70, 8
    %v2761 = vsel %vm2753, %v70, 8
    %v2762 = vsel %vm2754, %v70, 8
    %v2763 = vsel %vm2755, %v70, 8
    %v2764 = vsel %vm2756, %v70, 8
    %v2765 = vsel %vm2757, %v70, 8
    %v2766 = vsel %vm2758, %v70, 8
    %v2767 = vsel %vm2759, %v70, 8
    %v2768 = vsel %vm395, %v2760, 2147483647
    %v2769 = vrot.slane %v2768, 4
    %vm2770 = vcmp.lt.s32.totalorder %v2768, %v2769
    %v2771 = vsel %vm2770, %v2768, %v2769
    %v2772 = vrot.slane %v2771, 2
    %vm2773 = vcmp.lt.s32.totalorder %v2771, %v2772
    %v2774 = vsel %vm2773, %v2771, %v2772
    %v2775 = vrot.slane %v2774, 1
    %vm2776 = vcmp.lt.s32.totalorder %v2774, %v2775
    %v2777 = vsel %vm2776, %v2774, %v2775
    %v2778 = vsel %vm395, %v2761, 2147483647
    %v2779 = vrot.slane %v2778, 4
    %vm2780 = vcmp.lt.s32.totalorder %v2778, %v2779
    %v2781 = vsel %vm2780, %v2778, %v2779
    %v2782 = vrot.slane %v2781, 2
    %vm2783 = vcmp.lt.s32.totalorder %v2781, %v2782
    %v2784 = vsel %vm2783, %v2781, %v2782
    %v2785 = vrot.slane %v2784, 1
    %vm2786 = vcmp.lt.s32.totalorder %v2784, %v2785
    %v2787 = vsel %vm2786, %v2784, %v2785
    %v2788 = vsel %vm395, %v2762, 2147483647
    %v2789 = vrot.slane %v2788, 4
    %vm2790 = vcmp.lt.s32.totalorder %v2788, %v2789
    %v2791 = vsel %vm2790, %v2788, %v2789
    %v2792 = vrot.slane %v2791, 2
    %vm2793 = vcmp.lt.s32.totalorder %v2791, %v2792
    %v2794 = vsel %vm2793, %v2791, %v2792
    %v2795 = vrot.slane %v2794, 1
    %vm2796 = vcmp.lt.s32.totalorder %v2794, %v2795
    %v2797 = vsel %vm2796, %v2794, %v2795
    %v2798 = vsel %vm395, %v2763, 2147483647
    %v2799 = vrot.slane %v2798, 4
    %vm2800 = vcmp.lt.s32.totalorder %v2798, %v2799
    %v2801 = vsel %vm2800, %v2798, %v2799
    %v2802 = vrot.slane %v2801, 2
    %vm2803 = vcmp.lt.s32.totalorder %v2801, %v2802
    %v2804 = vsel %vm2803, %v2801, %v2802
    %v2805 = vrot.slane %v2804, 1
    %vm2806 = vcmp.lt.s32.totalorder %v2804, %v2805
    %v2807 = vsel %vm2806, %v2804, %v2805
    %v2808 = vsel %vm395, %v2764, 2147483647
    %v2809 = vrot.slane %v2808, 4
    %vm2810 = vcmp.lt.s32.totalorder %v2808, %v2809
    %v2811 = vsel %vm2810, %v2808, %v2809
    %v2812 = vrot.slane %v2811, 2
    %vm2813 = vcmp.lt.s32.totalorder %v2811, %v2812
    %v2814 = vsel %vm2813, %v2811, %v2812
    %v2815 = vrot.slane %v2814, 1
    %vm2816 = vcmp.lt.s32.totalorder %v2814, %v2815
    %v2817 = vsel %vm2816, %v2814, %v2815
    %v2818 = vsel %vm395, %v2765, 2147483647
    %v2819 = vrot.slane %v2818, 4
    %vm2820 = vcmp.lt.s32.totalorder %v2818, %v2819
    %v2821 = vsel %vm2820, %v2818, %v2819
    %v2822 = vrot.slane %v2821, 2
    %vm2823 = vcmp.lt.s32.totalorder %v2821, %v2822
    %v2824 = vsel %vm2823, %v2821, %v2822
    %v2825 = vrot.slane %v2824, 1
    %vm2826 = vcmp.lt.s32.totalorder %v2824, %v2825
    %v2827 = vsel %vm2826, %v2824, %v2825
    %v2828 = vsel %vm395, %v2766, 2147483647
    %v2829 = vrot.slane %v2828, 4
    %vm2830 = vcmp.lt.s32.totalorder %v2828, %v2829
    %v2831 = vsel %vm2830, %v2828, %v2829
    %v2832 = vrot.slane %v2831, 2
    %vm2833 = vcmp.lt.s32.totalorder %v2831, %v2832
    %v2834 = vsel %vm2833, %v2831, %v2832
    %v2835 = vrot.slane %v2834, 1
    %vm2836 = vcmp.lt.s32.totalorder %v2834, %v2835
    %v2837 = vsel %vm2836, %v2834, %v2835
    %v2838 = vsel %vm395, %v2767, 2147483647
    %v2839 = vrot.slane %v2838, 4
    %vm2840 = vcmp.lt.s32.totalorder %v2838, %v2839
    %v2841 = vsel %vm2840, %v2838, %v2839
    %v2842 = vrot.slane %v2841, 2
    %vm2843 = vcmp.lt.s32.totalorder %v2841, %v2842
    %v2844 = vsel %vm2843, %v2841, %v2842
    %v2845 = vrot.slane %v2844, 1
    %vm2846 = vcmp.lt.s32.totalorder %v2844, %v2845
    %v2847 = vsel %vm2846, %v2844, %v2845
    %v2848 = vsel %vm380, %v2787, %v2777
    %v2849 = vsel %vm382, %v2797, %v2848
    %v2850 = vsel %vm384, %v2807, %v2849
    %v2851 = vsel %vm386, %v2817, %v2850
    %v2852 = vsel %vm388, %v2827, %v2851
    %v2853 = vsel %vm390, %v2837, %v2852
    %v2854 = vsel %vm392, %v2847, %v2853
    %s2855 = scalar_lea.vmem [#allocation2], 56
    %2856 = vst.msk [vmem:[%s2855] sm:$0xff] %vm395, %v2854
    %v2858 = vrot.slane %v2570, 1
    %v2859 = vrot.slane %v2570, 2
    %v2860 = vrot.slane %v2570, 3
    %v2861 = vrot.slane %v2570, 4
    %v2862 = vrot.slane %v2570, 5
    %v2863 = vrot.slane %v2570, 6
    %v2864 = vrot.slane %v2570, 7
    %v2873 = vadd.f32 %v2702, %v2570
    %v2874 = vadd.f32 %v2709, %v2858
    %v2875 = vadd.f32 %v2716, %v2859
    %v2876 = vadd.f32 %v2723, %v2860
    %v2877 = vadd.f32 %v2730, %v2861
    %v2878 = vadd.f32 %v2737, %v2862
    %v2879 = vadd.f32 %v2744, %v2863
    %v2880 = vadd.f32 %v2751, %v2864
    %v2881 = vmul.f32 %v2579, %v2570
    %v2882 = vsel %vm395, %v2881, 0.0
    %v2883 = vrot.slane %v2882, 4
    %v2884 = vadd.f32 %v2882, %v2883
    %v2885 = vrot.slane %v2884, 2
    %v2886 = vadd.f32 %v2884, %v2885
    %v2887 = vrot.slane %v2886, 1
    %v2888 = vadd.f32 %v2886, %v2887
    %v2889 = vmul.f32 %v77, %v2169
    %v2890 = vmul.f32 %v84, %v2169
    %v2891 = vmul.f32 %v91, %v2169
    %v2892 = vmul.f32 %v98, %v2169
    %v2893 = vmul.f32 %v105, %v2169
    %v2894 = vmul.f32 %v112, %v2169
    %v2895 = vmul.f32 %v119, %v2169
    %v2896 = vmul.f32 %v126, %v2169
    %v2897 = vsel %vm395, %v2889, 0.0
    %v2898 = vrot.slane %v2897, 4
    %v2899 = vadd.f32 %v2897, %v2898
    %v2900 = vrot.slane %v2899, 2
    %v2901 = vadd.f32 %v2899, %v2900
    %v2902 = vrot.slane %v2901, 1
    %v2903 = vadd.f32 %v2901, %v2902
    %v2904 = vsel %vm395, %v2890, 0.0
    %v2905 = vrot.slane %v2904, 4
    %v2906 = vadd.f32 %v2904, %v2905
    %v2907 = vrot.slane %v2906, 2
    %v2908 = vadd.f32 %v2906, %v2907
    %v2909 = vrot.slane %v2908, 1
    %v2910 = vadd.f32 %v2908, %v2909
    %v2911 = vsel %vm395, %v2891, 0.0
    %v2912 = vrot.slane %v2911, 4
    %v2913 = vadd.f32 %v2911, %v2912
    %v2914 = vrot.slane %v2913, 2
    %v2915 = vadd.f32 %v2913, %v2914
    %v2916 = vrot.slane %v2915, 1
    %v2917 = vadd.f32 %v2915, %v2916
    %v2918 = vsel %vm395, %v2892, 0.0
    %v2919 = vrot.slane %v2918, 4
    %v2920 = vadd.f32 %v2918, %v2919
    %v2921 = vrot.slane %v2920, 2
    %v2922 = vadd.f32 %v2920, %v2921
    %v2923 = vrot.slane %v2922, 1
    %v2924 = vadd.f32 %v2922, %v2923
    %v2925 = vsel %vm395, %v2893, 0.0
    %v2926 = vrot.slane %v2925, 4
    %v2927 = vadd.f32 %v2925, %v2926
    %v2928 = vrot.slane %v2927, 2
    %v2929 = vadd.f32 %v2927, %v2928
    %v2930 = vrot.slane %v2929, 1
    %v2931 = vadd.f32 %v2929, %v2930
    %v2932 = vsel %vm395, %v2894, 0.0
    %v2933 = vrot.slane %v2932, 4
    %v2934 = vadd.f32 %v2932, %v2933
    %v2935 = vrot.slane %v2934, 2
    %v2936 = vadd.f32 %v2934, %v2935
    %v2937 = vrot.slane %v2936, 1
    %v2938 = vadd.f32 %v2936, %v2937
    %v2939 = vsel %vm395, %v2895, 0.0
    %v2940 = vrot.slane %v2939, 4
    %v2941 = vadd.f32 %v2939, %v2940
    %v2942 = vrot.slane %v2941, 2
    %v2943 = vadd.f32 %v2941, %v2942
    %v2944 = vrot.slane %v2943, 1
    %v2945 = vadd.f32 %v2943, %v2944
    %v2946 = vsel %vm395, %v2896, 0.0
    %v2947 = vrot.slane %v2946, 4
    %v2948 = vadd.f32 %v2946, %v2947
    %v2949 = vrot.slane %v2948, 2
    %v2950 = vadd.f32 %v2948, %v2949
    %v2951 = vrot.slane %v2950, 1
    %v2952 = vadd.f32 %v2950, %v2951
    %v2953 = vadd.f32 %v2568, %v2888
    %v2962 = vsel %vm380, %v2910, %v2903
    %v2963 = vsel %vm382, %v2917, %v2962
    %v2964 = vsel %vm384, %v2924, %v2963
    %v2965 = vsel %vm386, %v2931, %v2964
    %v2966 = vsel %vm388, %v2938, %v2965
    %v2967 = vsel %vm390, %v2945, %v2966
    %v2968 = vsel %vm392, %v2952, %v2967
    %v2970 = vmul.f32 %v2579, %v2968
    %v2971 = vsel %vm395, %v2970, 0.0
    %v2972 = vrot.slane %v2971, 4
    %v2973 = vadd.f32 %v2971, %v2972
    %v2974 = vrot.slane %v2973, 2
    %v2975 = vadd.f32 %v2973, %v2974
    %v2976 = vrot.slane %v2975, 1
    %v2977 = vadd.f32 %v2975, %v2976
    %v2978 = vadd.f32 %v2953, %v2977
    %v2979 = vsel %vm395, %v2664, -inf
    %v2980 = vrot.slane %v2979, 4
    %v2981 = vmax.f32 %v2979, %v2980
    %v2982 = vrot.slane %v2981, 2
    %v2983 = vmax.f32 %v2981, %v2982
    %v2984 = vrot.slane %v2983, 1
    %v2985 = vmax.f32 %v2983, %v2984
    %v2986 = vsub.f32 %v2664, %v2985
    %v2987 = vmul.f32 %v2986, 1.442695
    %v2988 = vpow.pop %v2987
    %v2989 = vsel %vm395, %v2988, 0.0
    %v2990 = vrot.slane %v2989, 4
    %v2991 = vadd.f32 %v2989, %v2990
    %v2992 = vrot.slane %v2991, 2
    %v2993 = vadd.f32 %v2991, %v2992
    %v2994 = vrot.slane %v2993, 1
    %v2995 = vadd.f32 %v2993, %v2994
    %v2996 = vlog2.pop %v2995
    %v2997 = vmul.f32 %v2996, 0.6931472
    %v2998 = vadd.f32 %v2985, %v2997
    %v2999 = vsub.f32 %v2998, %v2978
    %vm3000 = vcmask 122880
    %3001 = vst.msk [vmem:[#allocation14] sm:$0x1] %vm3000, %v2999
    %v3002 = vsel %vm3000, %v2873, -inf
    %v3003 = vsel %vm3000, %v2874, -inf
    %v3004 = vsel %vm3000, %v2875, -inf
    %v3005 = vsel %vm3000, %v2876, -inf
    %v3006 = vsel %vm3000, %v2877, -inf
    %v3007 = vmax.f32 %v3002, %v3006
    %v3008 = vsel %vm3000, %v2878, -inf
    %v3009 = vmax.f32 %v3003, %v3008
    %v3010 = vsel %vm3000, %v2879, -inf
    %v3011 = vmax.f32 %v3004, %v3010
    %v3012 = vsel %vm3000, %v2880, -inf
    %v3013 = vmax.f32 %v3005, %v3012
    %v3014 = vmax.f32 %v3007, %v3009
    %v3015 = vmax.f32 %v3011, %v3013
    %v3016 = vmax.f32 %v3014, %v3015
    %3017 = vst.msk [vmem:[#allocation12] sm:$0x1] %vm3000, %v3016
    %v3018 = vlaneseq
    %v3019 = vshrl.u32 %v3018, 7
    %v3020 = vsub.s32 0, %v3019
    %v3021 = vrot.slane %v3016, %v3020
    %vm3022 = vcmp.eq.f32.partialorder %v2873, %v3021
    %vm3023 = vcmp.eq.f32.partialorder %v2874, %v3021
    %vm3024 = vcmp.eq.f32.partialorder %v2875, %v3021
    %vm3025 = vcmp.eq.f32.partialorder %v2876, %v3021
    %vm3026 = vcmp.eq.f32.partialorder %v2877, %v3021
    %vm3027 = vcmp.eq.f32.partialorder %v2878, %v3021
    %vm3028 = vcmp.eq.f32.partialorder %v2879, %v3021
    %vm3029 = vcmp.eq.f32.partialorder %v2880, %v3021
    %v3030 = vrot.slane %v70, 1
    %v3031 = vrot.slane %v70, 2
    %v3032 = vrot.slane %v70, 3
    %v3033 = vrot.slane %v70, 4
    %v3034 = vrot.slane %v70, 5
    %v3035 = vrot.slane %v70, 6
    %v3036 = vrot.slane %v70, 7
    %v3037 = vsel %vm3022, %v70, 8
    %v3038 = vsel %vm3023, %v3030, 8
    %v3039 = vsel %vm3024, %v3031, 8
    %v3040 = vsel %vm3025, %v3032, 8
    %v3041 = vsel %vm3026, %v3033, 8
    %v3042 = vsel %vm3027, %v3034, 8
    %v3043 = vsel %vm3028, %v3035, 8
    %v3044 = vsel %vm3029, %v3036, 8
    %v3045 = vsel %vm3000, %v3037, 2147483647
    %v3046 = vsel %vm3000, %v3038, 2147483647
    %v3047 = vsel %vm3000, %v3039, 2147483647
    %v3048 = vsel %vm3000, %v3040, 2147483647
    %v3049 = vsel %vm3000, %v3041, 2147483647
    %vm3050 = vcmp.lt.s32.totalorder %v3045, %v3049
    %v3051 = vsel %vm3050, %v3045, %v3049
    %v3052 = vsel %vm3000, %v3042, 2147483647
    %vm3053 = vcmp.lt.s32.totalorder %v3046, %v3052
    %v3054 = vsel %vm3053, %v3046, %v3052
    %v3055 = vsel %vm3000, %v3043, 2147483647
    %vm3056 = vcmp.lt.s32.totalorder %v3047, %v3055
    %v3057 = vsel %vm3056, %v3047, %v3055
    %v3058 = vsel %vm3000, %v3044, 2147483647
    %vm3059 = vcmp.lt.s32.totalorder %v3048, %v3058
    %v3060 = vsel %vm3059, %v3048, %v3058
    %vm3061 = vcmp.lt.s32.totalorder %v3051, %v3054
    %v3062 = vsel %vm3061, %v3051, %v3054
    %vm3063 = vcmp.lt.s32.totalorder %v3057, %v3060
    %v3064 = vsel %vm3063, %v3057, %v3060
    %vm3065 = vcmp.lt.s32.totalorder %v3062, %v3064
    %v3066 = vsel %vm3065, %v3062, %v3064
    %s3067 = scalar_lea.vmem [#allocation11], 7
    %3068 = vst.msk [vmem:[%s3067] sm:$0x1] %vm3000, %v3066
    %v3069 = vld [vmem:[%s2855] sm:$0xff]
    %v3070 = vlaneseq
    %v3071 = vshrl.u32 %v3070, 7
    %v3072 = vsub.s32 0, %v3071
    %v3073 = vrot.slane %v3066, %v3072
    %vm3074 = vcmp.eq.s32.totalorder %v70, %v3073
    %v3075 = vsel %vm3074, %v3069, 0
    %v3076 = vsel %vm395, %v3075, 0
    %v3077 = vrot.slane %v3076, 4
    %v3078 = vadd.s32 %v3076, %v3077
    %v3079 = vrot.slane %v3078, 2
    %v3080 = vadd.s32 %v3078, %v3079
    %v3081 = vrot.slane %v3080, 1
    %v3082 = vadd.s32 %v3080, %v3081
    %s3083 = scalar_lea.vmem [#allocation11], 6
    %3084 = vst.msk [vmem:[%s3083] sm:$0x1] %vm3000, %v3082
    %v3085 = vld [vmem:[%s2445] sm:$0xff]
    %vm3086 = vcmp.eq.s32.totalorder %v70, %v3082
    %v3087 = vsel %vm3086, %v3085, 0
    %v3088 = vsel %vm395, %v3087, 0
    %v3089 = vrot.slane %v3088, 4
    %v3090 = vadd.s32 %v3088, %v3089
    %v3091 = vrot.slane %v3090, 2
    %v3092 = vadd.s32 %v3090, %v3091
    %v3093 = vrot.slane %v3092, 1
    %v3094 = vadd.s32 %v3092, %v3093
    %s3095 = scalar_lea.vmem [#allocation11], 5
    %3096 = vst.msk [vmem:[%s3095] sm:$0x1] %vm3000, %v3094
    %v3097 = vld [vmem:[%s2035] sm:$0xff]
    %vm3098 = vcmp.eq.s32.totalorder %v70, %v3094
    %v3099 = vsel %vm3098, %v3097, 0
    %v3100 = vsel %vm395, %v3099, 0
    %v3101 = vrot.slane %v3100, 4
    %v3102 = vadd.s32 %v3100, %v3101
    %v3103 = vrot.slane %v3102, 2
    %v3104 = vadd.s32 %v3102, %v3103
    %v3105 = vrot.slane %v3104, 1
    %v3106 = vadd.s32 %v3104, %v3105
    %s3107 = scalar_lea.vmem [#allocation11], 4
    %3108 = vst.msk [vmem:[%s3107] sm:$0x1] %vm3000, %v3106
    %v3109 = vld [vmem:[%s1625] sm:$0xff]
    %vm3110 = vcmp.eq.s32.totalorder %v70, %v3106
    %v3111 = vsel %vm3110, %v3109, 0
    %v3112 = vsel %vm395, %v3111, 0
    %v3113 = vrot.slane %v3112, 4
    %v3114 = vadd.s32 %v3112, %v3113
    %v3115 = vrot.slane %v3114, 2
    %v3116 = vadd.s32 %v3114, %v3115
    %v3117 = vrot.slane %v3116, 1
    %v3118 = vadd.s32 %v3116, %v3117
    %s3119 = scalar_lea.vmem [#allocation11], 3
    %3120 = vst.msk [vmem:[%s3119] sm:$0x1] %vm3000, %v3118
    %v3121 = vld [vmem:[%s1215] sm:$0xff]
    %vm3122 = vcmp.eq.s32.totalorder %v70, %v3118
    %v3123 = vsel %vm3122, %v3121, 0
    %v3124 = vsel %vm395, %v3123, 0
    %v3125 = vrot.slane %v3124, 4
    %v3126 = vadd.s32 %v3124, %v3125
    %v3127 = vrot.slane %v3126, 2
    %v3128 = vadd.s32 %v3126, %v3127
    %v3129 = vrot.slane %v3128, 1
    %v3130 = vadd.s32 %v3128, %v3129
    %s3131 = scalar_lea.vmem [#allocation11], 2
    %3132 = vst.msk [vmem:[%s3131] sm:$0x1] %vm3000, %v3130
    %v3133 = vld [vmem:[%s805] sm:$0xff]
    %vm3134 = vcmp.eq.s32.totalorder %v70, %v3130
    %v3135 = vsel %vm3134, %v3133, 0
    %v3136 = vsel %vm395, %v3135, 0
    %v3137 = vrot.slane %v3136, 4
    %v3138 = vadd.s32 %v3136, %v3137
    %v3139 = vrot.slane %v3138, 2
    %v3140 = vadd.s32 %v3138, %v3139
    %v3141 = vrot.slane %v3140, 1
    %v3142 = vadd.s32 %v3140, %v3141
    %s3143 = scalar_lea.vmem [#allocation11], 1
    %3144 = vst.msk [vmem:[%s3143] sm:$0x1] %vm3000, %v3142
    %v3145 = vld [vmem:[%s394] sm:$0xff]
    %vm3146 = vcmp.eq.s32.totalorder %v70, %v3142
    %v3147 = vsel %vm3146, %v3145, 0
    %v3148 = vsel %vm395, %v3147, 0
    %v3149 = vrot.slane %v3148, 4
    %v3150 = vadd.s32 %v3148, %v3149
    %v3151 = vrot.slane %v3150, 2
    %v3152 = vadd.s32 %v3150, %v3151
    %v3153 = vrot.slane %v3152, 1
    %v3154 = vadd.s32 %v3152, %v3153
    %3155 = vst.msk [vmem:[#allocation11] sm:$0x1] %vm3000, %v3154
    // Predicated region
    $region26: #{tpu_custom_call.1} parent=1 // pred_check
      _
    $region27: #{tpu_custom_call.1} parent=1 // pred_check_branch
      %3157 = sbr.rel (0) target = $region29
    $region28: #{tpu_custom_call.1} parent=1 // pred_region
      %s3159 = ssub.s32 128, 128
      %3160 = vsyncadd [#allocation7], %s3159
      %s3161 = sshll.u32 [#allocation11], 4
      %s3162 = int_to_ptr.vmem [resolvable:$true] %s3161
      %3167 = dma.vmem_to_hbm [thread:$0]  %s3162, 128, %s4, [#allocation7], 16, 16, 1
    $region29: #{tpu_custom_call.1} parent=1 // pred_fallthru
      _
    // Predicated region
    $region30: #{tpu_custom_call.1} parent=1 // pred_check
      _
    $region31: #{tpu_custom_call.1} parent=1 // pred_check_branch
      %3169 = sbr.rel (0) target = $region33
    $region32: #{tpu_custom_call.1} parent=1 // pred_region
      %s3171 = ssub.s32 16, 16
      %3172 = vsyncadd [#allocation13], %s3171
      %s3174 = sshll.u32 [#allocation12], 4
      %s3175 = int_to_ptr.vmem [resolvable:$true] %s3174
      %3177 = dma.vmem_to_hbm [thread:$0]  %s3175, 16, %s5, [#allocation13]
    $region33: #{tpu_custom_call.1} parent=1 // pred_fallthru
      _
    // Predicated region
    $region34: #{tpu_custom_call.1} parent=1 // pred_check
      _
    $region35: #{tpu_custom_call.1} parent=1 // pred_check_branch
      %3179 = sbr.rel (0) target = $region37
    $region36: #{tpu_custom_call.1} parent=1 // pred_region
      %s3181 = ssub.s32 16, 16
      %3182 = vsyncadd [#allocation13], %s3181
      %s3184 = sshll.u32 [#allocation14], 4
      %s3185 = int_to_ptr.vmem [resolvable:$true] %s3184
      %3187 = dma.vmem_to_hbm [thread:$0]  %s3185, 16, %s6, [#allocation13]
    $region37: #{tpu_custom_call.1} parent=1 // pred_fallthru
      _
    // Predicated region
    $region38: #{tpu_custom_call.1} parent=1 // pred_check
      _
    $region39: #{tpu_custom_call.1} parent=1 // pred_check_branch
      %3189 = sbr.rel (0) target = $region41
    $region40: #{tpu_custom_call.1} parent=1 // pred_region
      %3190 = dma.done [#allocation7], 128
    $region41: #{tpu_custom_call.1} parent=1 // pred_fallthru
      _
    // Predicated region
    $region42: #{tpu_custom_call.1} parent=1 // pred_check
      _
    $region43: #{tpu_custom_call.1} parent=1 // pred_check_branch
      %3192 = sbr.rel (0) target = $region45
    $region44: #{tpu_custom_call.1} parent=1 // pred_region
      %3193 = dma.done [#allocation13], 16
    $region45: #{tpu_custom_call.1} parent=1 // pred_fallthru
      _
    // Predicated region
    $region46: #{tpu_custom_call.1} parent=1 // pred_check
      _
    $region47: #{tpu_custom_call.1} parent=1 // pred_check_branch
      %3195 = sbr.rel (0) target = $region49
    $region48: #{tpu_custom_call.1} parent=1 // pred_region
      %3196 = dma.done [#allocation13], 16
    $region49: #{tpu_custom_call.1} parent=1 // pred_fallthru
      _
    %3197 = vsyncpa [#allocation6], 1
    %3198 = vsyncpa [#allocation9], 1
    %3199 = vsyncpa [#allocation7], 1
    %3200 = vsyncpa [#allocation13], 1

</llo_original>
